<compile_context>
chip_gen: v7x
topology: tpu7x:2x2x1
jax: 0.10.0
libtpu: 0.0.40
codegen_flags: <defaults>
</compile_context>

<pallas_src>
import functools

import jax
import jax.numpy as jnp
from jax.experimental import pallas as pl
from jax.experimental.pallas import tpu as pltpu


def _round_up(x, m):
    return (x + m - 1) // m * m


# ----------------------------------------------------------------------------
# Pallas kernels
# ----------------------------------------------------------------------------
def _matmul_fused_kernel(a_ref, b_ref, bias_ref, o_ref, acc_ref, *,
                         activation, alpha):
    @pl.when(pl.program_id(2) == 0)
    def _():
        acc_ref[...] = jnp.zeros_like(acc_ref)

    acc_ref[...] += jnp.dot(a_ref[...], b_ref[...],
                            preferred_element_type=jnp.float32)

    @pl.when(pl.program_id(2) == pl.num_programs(2) - 1)
    def _():
        y = acc_ref[...] + bias_ref[...]          # f32 epilogue on the VPU
        if activation == "leaky_relu":
            y = jnp.where(y > 0, y, alpha * y)
        o_ref[...] = y.astype(o_ref.dtype)


def _maxpool_kernel(p_ref, o_ref):
    # p_ref: (4, R, L) stacked 2x2 window taps; reduce over the window axis.
    o_ref[...] = jnp.max(p_ref[...], axis=0)


# ----------------------------------------------------------------------------
# Pallas wrappers
# ----------------------------------------------------------------------------
def _pick_tm(M):
    m16 = _round_up(M, 16)          # bf16 sublane packing multiple
    if m16 <= 256:
        return m16                  # single right-sized M tile, no 128-padding
    # split rows into 2 parallel tiles so both v7x TensorCores get work
    return _round_up((M + 1) // 2, 16)


def pallas_matmul_fused(a, b, bias, *, activation="linear", alpha=0.2,
                        out_dtype=jnp.float32):
    """out = act(a @ b + bias).  MXU operands bf16, f32 accumulate/epilogue."""
    M, K = a.shape
    K2, N = b.shape
    assert K == K2
    tm = _pick_tm(M)
    tk = min(_round_up(K, 128), 2048)
    tn = min(_round_up(N, 128), 512)
    Mp, Kp, Np = _round_up(M, tm), _round_up(K, tk), _round_up(N, tn)
    a_p = jnp.pad(a.astype(jnp.bfloat16), ((0, Mp - M), (0, Kp - K)))
    b_p = jnp.pad(b.astype(jnp.bfloat16), ((0, Kp - K), (0, Np - N)))
    bias_p = jnp.pad(bias.astype(jnp.float32), (0, Np - N)).reshape(1, Np)
    kern = functools.partial(_matmul_fused_kernel,
                             activation=activation, alpha=alpha)
    out = pl.pallas_call(
        kern,
        out_shape=jax.ShapeDtypeStruct((Mp, Np), out_dtype),
        grid_spec=pltpu.PrefetchScalarGridSpec(
            num_scalar_prefetch=0,
            grid=(Mp // tm, Np // tn, Kp // tk),
            in_specs=[pl.BlockSpec((tm, tk), lambda i, j, k: (i, k)),
                      pl.BlockSpec((tk, tn), lambda i, j, k: (k, j)),
                      pl.BlockSpec((1, tn), lambda i, j, k: (0, j))],
            out_specs=pl.BlockSpec((tm, tn), lambda i, j, k: (i, j)),
            scratch_shapes=[pltpu.VMEM((tm, tn), jnp.float32)]),
        compiler_params=pltpu.CompilerParams(
            dimension_semantics=("parallel", "parallel", "arbitrary"),
            vmem_limit_bytes=32 * 1024 * 1024),
    )(a_p, b_p, bias_p)
    return out[:M, :N]


def pallas_maxpool2x2(x):
    """x: [B,H,W,C] NHWC -> [B,H//2,W//2,C], 2x2 window, stride 2."""
    B, H, W, C = x.shape
    OH, OW = H // 2, W // 2
    taps = [x[:, ki:ki + 2 * OH:2, kj:kj + 2 * OW:2, :]
            for ki in range(2) for kj in range(2)]
    # Fold OW into the lane dim so the output store is lane-dense (OW*C >= 128).
    p = jnp.stack(taps, axis=0).reshape(4, B * OH, OW * C)
    R, L = B * OH, OW * C
    Rp = _round_up(R, 8)
    p_p = jnp.pad(p, ((0, 0), (0, Rp - R), (0, 0)))
    out = pl.pallas_call(
        _maxpool_kernel,
        out_shape=jax.ShapeDtypeStruct((Rp, L), jnp.float32),
        grid=(1,),
        in_specs=[pl.BlockSpec((4, Rp, L), lambda i: (0, 0, 0))],
        out_specs=pl.BlockSpec((Rp, L), lambda i: (0, 0)),
    )(p_p)
    return out[:R].reshape(B, OH, OW, C)


# ----------------------------------------------------------------------------
# NN building blocks (glue = im2col slicing; compute = Pallas)
# ----------------------------------------------------------------------------
def conv_bn_lrelu(x, w_folded, bias_folded, *, padding=0, alpha=0.2):
    """x: [B,H,W,C] NHWC, w_folded: [KH,KW,C,OC] with BN scale pre-folded.
    Conv (stride 1) + BN bias + LeakyReLU, all inside one fused GEMM."""
    B, H, W, C = x.shape
    KH, KW, _, OC = w_folded.shape
    OH = H + 2 * padding - KH + 1
    OW = W + 2 * padding - KW + 1
    x_p = jnp.pad(x, ((0, 0), (padding, padding), (padding, padding), (0, 0)))
    taps = [x_p[:, ki:ki + OH, kj:kj + OW, :]
            for ki in range(KH) for kj in range(KW)]
    # [B,OH,OW,KH*KW,C] -> (M, KH*KW*C); column order matches w.reshape below.
    patches = jnp.stack(taps, axis=3).reshape(B * OH * OW, KH * KW * C)
    out = pallas_matmul_fused(patches, w_folded.reshape(KH * KW * C, OC),
                              bias_folded, activation="leaky_relu", alpha=alpha)
    return out.reshape(B, OH, OW, OC)


# ----------------------------------------------------------------------------
# Parameters (deterministic, synthetic — no checkpoint load)
# ----------------------------------------------------------------------------
def init_params(key, num_classes):
    cnt = [0]

    def nk():
        cnt[0] += 1
        return jax.random.fold_in(key, cnt[0])

    def conv(kh, kw, ic, oc):
        std = (2.0 / (kh * kw * ic)) ** 0.5
        w = std * jax.random.normal(nk(), (kh, kw, ic, oc), jnp.float32)
        b = 0.05 * jax.random.normal(nk(), (oc,), jnp.float32)
        return w, b

    def bn(c):
        gamma = 1.0 + 0.1 * jax.random.normal(nk(), (c,), jnp.float32)
        beta = 0.1 * jax.random.normal(nk(), (c,), jnp.float32)
        mean = 0.1 * jax.random.normal(nk(), (c,), jnp.float32)
        var = jnp.abs(1.0 + 0.1 * jax.random.normal(nk(), (c,), jnp.float32))
        return gamma, beta, mean, var

    raw = {
        'conv1': conv(7, 7, 1, 32), 'bn1': bn(32),
        'conv2': conv(5, 5, 32, 64), 'bn2': bn(64),
        'conv3': conv(5, 5, 64, 128), 'bn3': bn(128),
    }
    feat_dim = 128
    raw['fc_w'] = (1.0 / feat_dim ** 0.5) * jax.random.normal(
        nk(), (feat_dim, num_classes), jnp.float32)
    raw['fc_b'] = 0.1 * jax.random.normal(nk(), (num_classes,), jnp.float32)
    return raw


def fold_bn_params(raw, eps=1e-5):
    """Fold eval-mode BatchNorm into conv weights/biases once, cast to bf16."""
    p = {}
    for i in (1, 2, 3):
        w, b = raw[f'conv{i}']
        gamma, beta, mean, var = raw[f'bn{i}']
        scale = gamma / jnp.sqrt(var + eps)                    # [OC]
        p[f'c{i}_w'] = (w * scale).astype(jnp.bfloat16)        # fold into cols
        p[f'c{i}_b'] = (scale * b + beta - mean * scale).astype(jnp.float32)
    p['fc_w'] = raw['fc_w'].astype(jnp.bfloat16)
    p['fc_b'] = raw['fc_b'].astype(jnp.float32)
    return p


# ----------------------------------------------------------------------------
# Forward (equivalent of MCNN4.forward) -> (feature, out)
# ----------------------------------------------------------------------------
def forward(x_nchw, params):
    x = jnp.transpose(x_nchw.astype(jnp.float32), (0, 2, 3, 1))   # NCHW -> NHWC
    x = conv_bn_lrelu(x, params['c1_w'], params['c1_b'], padding=1)  # [B,28,28,32]
    x = pallas_maxpool2x2(x)                                         # [B,14,14,32]
    x = conv_bn_lrelu(x, params['c2_w'], params['c2_b'], padding=0)  # [B,10,10,64]
    x = pallas_maxpool2x2(x)                                         # [B,5,5,64]
    x = conv_bn_lrelu(x, params['c3_w'], params['c3_b'], padding=0)  # [B,1,1,128]
    # PyTorch flattens in NCHW order; spatial is 1x1 so the order is identical,
    # but transpose anyway to keep feature.view(B, -1) semantics explicit.
    feat = jnp.transpose(x, (0, 3, 1, 2)).reshape(x.shape[0], -1)    # [B,128]
    out = pallas_matmul_fused(feat, params['fc_w'], params['fc_b'],
                              activation="linear")      # fc bias fused in GEMM
    return feat, out


if __name__ == "__main__":
    key = jax.random.PRNGKey(0)
    num_classes = 10
    params = fold_bn_params(init_params(key, num_classes))

    # feat_dim = 128 = 128 channels * 1 * 1  =>  input spatial 32x32, 1 channel.
    x = jax.random.normal(jax.random.fold_in(key, 999), (2, 1, 32, 32),
                          jnp.float32)

    fwd = jax.jit(functools.partial(forward, params=params))
    feat, out = fwd(x)
    jax.block_until_ready((feat, out))

    assert feat.shape == (2, 128), feat.shape
    assert out.shape == (2, num_classes), out.shape
    assert bool(jnp.all(jnp.isfinite(feat))) and bool(jnp.all(jnp.isfinite(out)))
    print("KERNEL_OK")
</pallas_src>

<mosaic_0001>
module attributes {stable_mosaic.version = 11 : i64} {
  func.func @_matmul_fused_kernel(%arg0: i32, %arg1: i32, %arg2: i32, %arg3: memref<784x128xbf16, #tpu.memory_space<vmem>>, %arg4: memref<128x128xbf16, #tpu.memory_space<vmem>>, %arg5: memref<1x128xf32, #tpu.memory_space<vmem>>, %arg6: memref<784x128xf32, #tpu.memory_space<vmem>>, %arg7: memref<784x128xf32, #tpu.memory_space<vmem>>) attributes {dimension_semantics = [#tpu.dimension_semantics<parallel>, #tpu.dimension_semantics<parallel>, #tpu.dimension_semantics<arbitrary>], iteration_bounds = array<i64: 2, 1, 1>, scalar_prefetch = 0 : i64, scratch_operands = 1 : i64, tpu.core_type = #tpu.core_type<tc>, window_params = [{transform_indices = @transform_0, window_bounds = array<i64: 784, 128>}, {transform_indices = @transform_1, window_bounds = array<i64: 128, 128>}, {transform_indices = @transform_2, window_bounds = array<i64: 1, 128>}, {transform_indices = @transform_3, window_bounds = array<i64: 784, 128>}]} {
    %c0_i32 = arith.constant 0 : i32
    %0 = arith.cmpi eq, %arg2, %c0_i32 : i32
    %1 = arith.extui %0 : i1 to i32
    %c0_i32_0 = arith.constant 0 : i32
    %2 = arith.cmpi ne, %1, %c0_i32_0 : i32
    scf.if %2 {
      %cst_10 = arith.constant 0.000000e+00 : f32
      %12 = vector.broadcast %cst_10 : f32 to vector<784x128xf32>
      %c0_11 = arith.constant 0 : index
      %c0_12 = arith.constant 0 : index
      %13 = vector.load %arg7[%c0_11, %c0_12] : memref<784x128xf32, #tpu.memory_space<vmem>>, vector<784x128xf32>
      tpu.vector_store %arg7[%c0_11, %c0_12], %12 {strides = array<i32>} : memref<784x128xf32, #tpu.memory_space<vmem>>, vector<784x128xf32>,
    } else {
    }
    %c0 = arith.constant 0 : index
    %c0_1 = arith.constant 0 : index
    %3 = vector.load %arg7[%c0, %c0_1] : memref<784x128xf32, #tpu.memory_space<vmem>>, vector<784x128xf32>
    %c0_2 = arith.constant 0 : index
    %c0_3 = arith.constant 0 : index
    %4 = vector.load %arg3[%c0_2, %c0_3] : memref<784x128xbf16, #tpu.memory_space<vmem>>, vector<784x128xbf16>
    %c0_4 = arith.constant 0 : index
    %c0_5 = arith.constant 0 : index
    %5 = vector.load %arg4[%c0_4, %c0_5] : memref<128x128xbf16, #tpu.memory_space<vmem>>, vector<128x128xbf16>
    %cst = arith.constant dense<0.000000e+00> : vector<784x128xf32>
    %6 = tpu.matmul %4, %5, %cst {dimension_numbers = #tpu.dot_dimension_numbers<[1], [0], [0], [1], [0, 0, 1, 1], [], []>} : vector<784x128xbf16>, vector<128x128xbf16>, vector<784x128xf32> -> vector<784x128xf32>
    %7 = arith.addf %3, %6 : vector<784x128xf32>
    %c0_6 = arith.constant 0 : index
    %c0_7 = arith.constant 0 : index
    %8 = vector.load %arg7[%c0_6, %c0_7] : memref<784x128xf32, #tpu.memory_space<vmem>>, vector<784x128xf32>
    tpu.vector_store %arg7[%c0_6, %c0_7], %7 {strides = array<i32>} : memref<784x128xf32, #tpu.memory_space<vmem>>, vector<784x128xf32>,
    %c0_i32_8 = arith.constant 0 : i32
    %9 = arith.cmpi eq, %arg2, %c0_i32_8 : i32
    %10 = arith.extui %9 : i1 to i32
    %c0_i32_9 = arith.constant 0 : i32
    %11 = arith.cmpi ne, %10, %c0_i32_9 : i32
    scf.if %11 {
      %c0_10 = arith.constant 0 : index
      %c0_11 = arith.constant 0 : index
      %12 = vector.load %arg7[%c0_10, %c0_11] : memref<784x128xf32, #tpu.memory_space<vmem>>, vector<784x128xf32>
      %c0_12 = arith.constant 0 : index
      %c0_13 = arith.constant 0 : index
      %13 = vector.load %arg5[%c0_12, %c0_13] : memref<1x128xf32, #tpu.memory_space<vmem>>, vector<1x128xf32>
      %14 = vector.broadcast %13 : vector<1x128xf32> to vector<784x128xf32>
      %15 = arith.addf %12, %14 : vector<784x128xf32>
      %cst_14 = arith.constant 0.000000e+00 : f32
      %16 = vector.broadcast %cst_14 : f32 to vector<784x128xf32>
      %17 = arith.cmpf ogt, %15, %16 : vector<784x128xf32>
      %cst_15 = arith.constant 2.000000e-01 : f32
      %18 = vector.broadcast %cst_15 : f32 to vector<784x128xf32>
      %19 = arith.mulf %18, %15 : vector<784x128xf32>
      %20 = arith.select %17, %15, %19 : vector<784x128xi1>, vector<784x128xf32>
      %c0_16 = arith.constant 0 : index
      %c0_17 = arith.constant 0 : index
      %21 = vector.load %arg6[%c0_16, %c0_17] : memref<784x128xf32, #tpu.memory_space<vmem>>, vector<784x128xf32>
      tpu.vector_store %arg6[%c0_16, %c0_17], %20 {strides = array<i32>} : memref<784x128xf32, #tpu.memory_space<vmem>>, vector<784x128xf32>,
    } else {
    }
    return
  }
  func.func @transform_0(%arg0: i32, %arg1: i32, %arg2: i32) -> (i32, i32) {
    %c0_i32 = arith.constant 0 : i32
    return %arg0, %arg2 : i32, i32
  }
  func.func @transform_1(%arg0: i32, %arg1: i32, %arg2: i32) -> (i32, i32) {
    %c0_i32 = arith.constant 0 : i32
    return %arg2, %arg1 : i32, i32
  }
  func.func @transform_2(%arg0: i32, %arg1: i32, %arg2: i32) -> (i32, i32) {
    %c0_i32 = arith.constant 0 : i32
    %c0_i32_0 = arith.constant 0 : i32
    return %c0_i32, %arg1 : i32, i32
  }
  func.func @transform_3(%arg0: i32, %arg1: i32, %arg2: i32) -> (i32, i32) {
    %c0_i32 = arith.constant 0 : i32
    return %arg0, %arg1 : i32, i32
  }
}

module attributes {stable_mosaic.version = 11 : i64} {
  func.func @_maxpool_kernel(%arg0: i32, %arg1: memref<4x32x448xf32, #tpu.memory_space<vmem>>, %arg2: memref<32x448xf32, #tpu.memory_space<vmem>>) attributes {dimension_semantics = [#tpu.dimension_semantics<arbitrary>], iteration_bounds = array<i64: 1>, scalar_prefetch = 0 : i64, scratch_operands = 0 : i64, tpu.core_type = #tpu.core_type<tc>, window_params = [{pipeline_mode = #tpu.pipeline_mode<synchronous>, transform_indices = @transform_0, window_bounds = array<i64: 4, 32, 448>}, {pipeline_mode = #tpu.pipeline_mode<synchronous>, transform_indices = @transform_1, window_bounds = array<i64: 32, 448>}]} {
    %c0 = arith.constant 0 : index
    %c0_0 = arith.constant 0 : index
    %c0_1 = arith.constant 0 : index
    %0 = vector.load %arg1[%c0, %c0_0, %c0_1] : memref<4x32x448xf32, #tpu.memory_space<vmem>>, vector<4x32x448xf32>
    %cst = arith.constant dense<0xFF800000> : vector<32x448xf32>
    %1 = vector.multi_reduction <maximumf>, %0, %cst [0] : vector<4x32x448xf32> to vector<32x448xf32>
    %c0_2 = arith.constant 0 : index
    %c0_3 = arith.constant 0 : index
    %2 = vector.load %arg2[%c0_2, %c0_3] : memref<32x448xf32, #tpu.memory_space<vmem>>, vector<32x448xf32>
    tpu.vector_store %arg2[%c0_2, %c0_3], %1 {strides = array<i32>} : memref<32x448xf32, #tpu.memory_space<vmem>>, vector<32x448xf32>,
    return
  }
  func.func @transform_0(%arg0: i32) -> (i32, i32, i32) {
    %c0_i32 = arith.constant 0 : i32
    %c0_i32_0 = arith.constant 0 : i32
    %c0_i32_1 = arith.constant 0 : i32
    %c0_i32_2 = arith.constant 0 : i32
    return %c0_i32, %c0_i32_0, %c0_i32_1 : i32, i32, i32
  }
  func.func @transform_1(%arg0: i32) -> (i32, i32) {
    %c0_i32 = arith.constant 0 : i32
    %c0_i32_0 = arith.constant 0 : i32
    %c0_i32_1 = arith.constant 0 : i32
    return %c0_i32, %c0_i32_0 : i32, i32
  }
}

module attributes {stable_mosaic.version = 11 : i64} {
  func.func @_matmul_fused_kernel(%arg0: i32, %arg1: i32, %arg2: i32, %arg3: memref<208x896xbf16, #tpu.memory_space<vmem>>, %arg4: memref<896x128xbf16, #tpu.memory_space<vmem>>, %arg5: memref<1x128xf32, #tpu.memory_space<vmem>>, %arg6: memref<208x128xf32, #tpu.memory_space<vmem>>, %arg7: memref<208x128xf32, #tpu.memory_space<vmem>>) attributes {dimension_semantics = [#tpu.dimension_semantics<parallel>, #tpu.dimension_semantics<parallel>, #tpu.dimension_semantics<arbitrary>], iteration_bounds = array<i64: 1, 1, 1>, scalar_prefetch = 0 : i64, scratch_operands = 1 : i64, tpu.core_type = #tpu.core_type<tc>, window_params = [{transform_indices = @transform_0, window_bounds = array<i64: 208, 896>}, {transform_indices = @transform_1, window_bounds = array<i64: 896, 128>}, {transform_indices = @transform_2, window_bounds = array<i64: 1, 128>}, {transform_indices = @transform_3, window_bounds = array<i64: 208, 128>}]} {
    %c0_i32 = arith.constant 0 : i32
    %0 = arith.cmpi eq, %arg2, %c0_i32 : i32
    %1 = arith.extui %0 : i1 to i32
    %c0_i32_0 = arith.constant 0 : i32
    %2 = arith.cmpi ne, %1, %c0_i32_0 : i32
    scf.if %2 {
      %cst_10 = arith.constant 0.000000e+00 : f32
      %12 = vector.broadcast %cst_10 : f32 to vector<208x128xf32>
      %c0_11 = arith.constant 0 : index
      %c0_12 = arith.constant 0 : index
      %13 = vector.load %arg7[%c0_11, %c0_12] : memref<208x128xf32, #tpu.memory_space<vmem>>, vector<208x128xf32>
      tpu.vector_store %arg7[%c0_11, %c0_12], %12 {strides = array<i32>} : memref<208x128xf32, #tpu.memory_space<vmem>>, vector<208x128xf32>,
    } else {
    }
    %c0 = arith.constant 0 : index
    %c0_1 = arith.constant 0 : index
    %3 = vector.load %arg7[%c0, %c0_1] : memref<208x128xf32, #tpu.memory_space<vmem>>, vector<208x128xf32>
    %c0_2 = arith.constant 0 : index
    %c0_3 = arith.constant 0 : index
    %4 = vector.load %arg3[%c0_2, %c0_3] : memref<208x896xbf16, #tpu.memory_space<vmem>>, vector<208x896xbf16>
    %c0_4 = arith.constant 0 : index
    %c0_5 = arith.constant 0 : index
    %5 = vector.load %arg4[%c0_4, %c0_5] : memref<896x128xbf16, #tpu.memory_space<vmem>>, vector<896x128xbf16>
    %cst = arith.constant dense<0.000000e+00> : vector<208x128xf32>
    %6 = tpu.matmul %4, %5, %cst {dimension_numbers = #tpu.dot_dimension_numbers<[1], [0], [0], [1], [0, 0, 1, 1], [], []>} : vector<208x896xbf16>, vector<896x128xbf16>, vector<208x128xf32> -> vector<208x128xf32>
    %7 = arith.addf %3, %6 : vector<208x128xf32>
    %c0_6 = arith.constant 0 : index
    %c0_7 = arith.constant 0 : index
    %8 = vector.load %arg7[%c0_6, %c0_7] : memref<208x128xf32, #tpu.memory_space<vmem>>, vector<208x128xf32>
    tpu.vector_store %arg7[%c0_6, %c0_7], %7 {strides = array<i32>} : memref<208x128xf32, #tpu.memory_space<vmem>>, vector<208x128xf32>,
    %c0_i32_8 = arith.constant 0 : i32
    %9 = arith.cmpi eq, %arg2, %c0_i32_8 : i32
    %10 = arith.extui %9 : i1 to i32
    %c0_i32_9 = arith.constant 0 : i32
    %11 = arith.cmpi ne, %10, %c0_i32_9 : i32
    scf.if %11 {
      %c0_10 = arith.constant 0 : index
      %c0_11 = arith.constant 0 : index
      %12 = vector.load %arg7[%c0_10, %c0_11] : memref<208x128xf32, #tpu.memory_space<vmem>>, vector<208x128xf32>
      %c0_12 = arith.constant 0 : index
      %c0_13 = arith.constant 0 : index
      %13 = vector.load %arg5[%c0_12, %c0_13] : memref<1x128xf32, #tpu.memory_space<vmem>>, vector<1x128xf32>
      %14 = vector.broadcast %13 : vector<1x128xf32> to vector<208x128xf32>
      %15 = arith.addf %12, %14 : vector<208x128xf32>
      %cst_14 = arith.constant 0.000000e+00 : f32
      %16 = vector.broadcast %cst_14 : f32 to vector<208x128xf32>
      %17 = arith.cmpf ogt, %15, %16 : vector<208x128xf32>
      %cst_15 = arith.constant 2.000000e-01 : f32
      %18 = vector.broadcast %cst_15 : f32 to vector<208x128xf32>
      %19 = arith.mulf %18, %15 : vector<208x128xf32>
      %20 = arith.select %17, %15, %19 : vector<208x128xi1>, vector<208x128xf32>
      %c0_16 = arith.constant 0 : index
      %c0_17 = arith.constant 0 : index
      %21 = vector.load %arg6[%c0_16, %c0_17] : memref<208x128xf32, #tpu.memory_space<vmem>>, vector<208x128xf32>
      tpu.vector_store %arg6[%c0_16, %c0_17], %20 {strides = array<i32>} : memref<208x128xf32, #tpu.memory_space<vmem>>, vector<208x128xf32>,
    } else {
    }
    return
  }
  func.func @transform_0(%arg0: i32, %arg1: i32, %arg2: i32) -> (i32, i32) {
    %c0_i32 = arith.constant 0 : i32
    return %arg0, %arg2 : i32, i32
  }
  func.func @transform_1(%arg0: i32, %arg1: i32, %arg2: i32) -> (i32, i32) {
    %c0_i32 = arith.constant 0 : i32
    return %arg2, %arg1 : i32, i32
  }
  func.func @transform_2(%arg0: i32, %arg1: i32, %arg2: i32) -> (i32, i32) {
    %c0_i32 = arith.constant 0 : i32
    %c0_i32_0 = arith.constant 0 : i32
    return %c0_i32, %arg1 : i32, i32
  }
  func.func @transform_3(%arg0: i32, %arg1: i32, %arg2: i32) -> (i32, i32) {
    %c0_i32 = arith.constant 0 : i32
    return %arg0, %arg1 : i32, i32
  }
}

module attributes {stable_mosaic.version = 11 : i64} {
  func.func @_maxpool_kernel(%arg0: i32, %arg1: memref<4x16x320xf32, #tpu.memory_space<vmem>>, %arg2: memref<16x320xf32, #tpu.memory_space<vmem>>) attributes {dimension_semantics = [#tpu.dimension_semantics<arbitrary>], iteration_bounds = array<i64: 1>, scalar_prefetch = 0 : i64, scratch_operands = 0 : i64, tpu.core_type = #tpu.core_type<tc>, window_params = [{pipeline_mode = #tpu.pipeline_mode<synchronous>, transform_indices = @transform_0, window_bounds = array<i64: 4, 16, 320>}, {pipeline_mode = #tpu.pipeline_mode<synchronous>, transform_indices = @transform_1, window_bounds = array<i64: 16, 320>}]} {
    %c0 = arith.constant 0 : index
    %c0_0 = arith.constant 0 : index
    %c0_1 = arith.constant 0 : index
    %0 = vector.load %arg1[%c0, %c0_0, %c0_1] : memref<4x16x320xf32, #tpu.memory_space<vmem>>, vector<4x16x320xf32>
    %cst = arith.constant dense<0xFF800000> : vector<16x320xf32>
    %1 = vector.multi_reduction <maximumf>, %0, %cst [0] : vector<4x16x320xf32> to vector<16x320xf32>
    %c0_2 = arith.constant 0 : index
    %c0_3 = arith.constant 0 : index
    %2 = vector.load %arg2[%c0_2, %c0_3] : memref<16x320xf32, #tpu.memory_space<vmem>>, vector<16x320xf32>
    tpu.vector_store %arg2[%c0_2, %c0_3], %1 {strides = array<i32>} : memref<16x320xf32, #tpu.memory_space<vmem>>, vector<16x320xf32>,
    return
  }
  func.func @transform_0(%arg0: i32) -> (i32, i32, i32) {
    %c0_i32 = arith.constant 0 : i32
    %c0_i32_0 = arith.constant 0 : i32
    %c0_i32_1 = arith.constant 0 : i32
    %c0_i32_2 = arith.constant 0 : i32
    return %c0_i32, %c0_i32_0, %c0_i32_1 : i32, i32, i32
  }
  func.func @transform_1(%arg0: i32) -> (i32, i32) {
    %c0_i32 = arith.constant 0 : i32
    %c0_i32_0 = arith.constant 0 : i32
    %c0_i32_1 = arith.constant 0 : i32
    return %c0_i32, %c0_i32_0 : i32, i32
  }
}

module attributes {stable_mosaic.version = 11 : i64} {
  func.func @_matmul_fused_kernel(%arg0: i32, %arg1: i32, %arg2: i32, %arg3: memref<16x1664xbf16, #tpu.memory_space<vmem>>, %arg4: memref<1664x128xbf16, #tpu.memory_space<vmem>>, %arg5: memref<1x128xf32, #tpu.memory_space<vmem>>, %arg6: memref<16x128xf32, #tpu.memory_space<vmem>>, %arg7: memref<16x128xf32, #tpu.memory_space<vmem>>) attributes {dimension_semantics = [#tpu.dimension_semantics<parallel>, #tpu.dimension_semantics<parallel>, #tpu.dimension_semantics<arbitrary>], iteration_bounds = array<i64: 1, 1, 1>, scalar_prefetch = 0 : i64, scratch_operands = 1 : i64, tpu.core_type = #tpu.core_type<tc>, window_params = [{transform_indices = @transform_0, window_bounds = array<i64: 16, 1664>}, {transform_indices = @transform_1, window_bounds = array<i64: 1664, 128>}, {transform_indices = @transform_2, window_bounds = array<i64: 1, 128>}, {transform_indices = @transform_3, window_bounds = array<i64: 16, 128>}]} {
    %c0_i32 = arith.constant 0 : i32
    %0 = arith.cmpi eq, %arg2, %c0_i32 : i32
    %1 = arith.extui %0 : i1 to i32
    %c0_i32_0 = arith.constant 0 : i32
    %2 = arith.cmpi ne, %1, %c0_i32_0 : i32
    scf.if %2 {
      %cst_10 = arith.constant 0.000000e+00 : f32
      %12 = vector.broadcast %cst_10 : f32 to vector<16x128xf32>
      %c0_11 = arith.constant 0 : index
      %c0_12 = arith.constant 0 : index
      %13 = vector.load %arg7[%c0_11, %c0_12] : memref<16x128xf32, #tpu.memory_space<vmem>>, vector<16x128xf32>
      tpu.vector_store %arg7[%c0_11, %c0_12], %12 {strides = array<i32>} : memref<16x128xf32, #tpu.memory_space<vmem>>, vector<16x128xf32>,
    } else {
    }
    %c0 = arith.constant 0 : index
    %c0_1 = arith.constant 0 : index
    %3 = vector.load %arg7[%c0, %c0_1] : memref<16x128xf32, #tpu.memory_space<vmem>>, vector<16x128xf32>
    %c0_2 = arith.constant 0 : index
    %c0_3 = arith.constant 0 : index
    %4 = vector.load %arg3[%c0_2, %c0_3] : memref<16x1664xbf16, #tpu.memory_space<vmem>>, vector<16x1664xbf16>
    %c0_4 = arith.constant 0 : index
    %c0_5 = arith.constant 0 : index
    %5 = vector.load %arg4[%c0_4, %c0_5] : memref<1664x128xbf16, #tpu.memory_space<vmem>>, vector<1664x128xbf16>
    %cst = arith.constant dense<0.000000e+00> : vector<16x128xf32>
    %6 = tpu.matmul %4, %5, %cst {dimension_numbers = #tpu.dot_dimension_numbers<[1], [0], [0], [1], [0, 0, 1, 1], [], []>} : vector<16x1664xbf16>, vector<1664x128xbf16>, vector<16x128xf32> -> vector<16x128xf32>
    %7 = arith.addf %3, %6 : vector<16x128xf32>
    %c0_6 = arith.constant 0 : index
    %c0_7 = arith.constant 0 : index
    %8 = vector.load %arg7[%c0_6, %c0_7] : memref<16x128xf32, #tpu.memory_space<vmem>>, vector<16x128xf32>
    tpu.vector_store %arg7[%c0_6, %c0_7], %7 {strides = array<i32>} : memref<16x128xf32, #tpu.memory_space<vmem>>, vector<16x128xf32>,
    %c0_i32_8 = arith.constant 0 : i32
    %9 = arith.cmpi eq, %arg2, %c0_i32_8 : i32
    %10 = arith.extui %9 : i1 to i32
    %c0_i32_9 = arith.constant 0 : i32
    %11 = arith.cmpi ne, %10, %c0_i32_9 : i32
    scf.if %11 {
      %c0_10 = arith.constant 0 : index
      %c0_11 = arith.constant 0 : index
      %12 = vector.load %arg7[%c0_10, %c0_11] : memref<16x128xf32, #tpu.memory_space<vmem>>, vector<16x128xf32>
      %c0_12 = arith.constant 0 : index
      %c0_13 = arith.constant 0 : index
      %13 = vector.load %arg5[%c0_12, %c0_13] : memref<1x128xf32, #tpu.memory_space<vmem>>, vector<1x128xf32>
      %14 = vector.broadcast %13 : vector<1x128xf32> to vector<16x128xf32>
      %15 = arith.addf %12, %14 : vector<16x128xf32>
      %cst_14 = arith.constant 0.000000e+00 : f32
      %16 = vector.broadcast %cst_14 : f32 to vector<16x128xf32>
      %17 = arith.cmpf ogt, %15, %16 : vector<16x128xf32>
      %cst_15 = arith.constant 2.000000e-01 : f32
      %18 = vector.broadcast %cst_15 : f32 to vector<16x128xf32>
      %19 = arith.mulf %18, %15 : vector<16x128xf32>
      %20 = arith.select %17, %15, %19 : vector<16x128xi1>, vector<16x128xf32>
      %c0_16 = arith.constant 0 : index
      %c0_17 = arith.constant 0 : index
      %21 = vector.load %arg6[%c0_16, %c0_17] : memref<16x128xf32, #tpu.memory_space<vmem>>, vector<16x128xf32>
      tpu.vector_store %arg6[%c0_16, %c0_17], %20 {strides = array<i32>} : memref<16x128xf32, #tpu.memory_space<vmem>>, vector<16x128xf32>,
    } else {
    }
    return
  }
  func.func @transform_0(%arg0: i32, %arg1: i32, %arg2: i32) -> (i32, i32) {
    %c0_i32 = arith.constant 0 : i32
    return %arg0, %arg2 : i32, i32
  }
  func.func @transform_1(%arg0: i32, %arg1: i32, %arg2: i32) -> (i32, i32) {
    %c0_i32 = arith.constant 0 : i32
    return %arg2, %arg1 : i32, i32
  }
  func.func @transform_2(%arg0: i32, %arg1: i32, %arg2: i32) -> (i32, i32) {
    %c0_i32 = arith.constant 0 : i32
    %c0_i32_0 = arith.constant 0 : i32
    return %c0_i32, %arg1 : i32, i32
  }
  func.func @transform_3(%arg0: i32, %arg1: i32, %arg2: i32) -> (i32, i32) {
    %c0_i32 = arith.constant 0 : i32
    return %arg0, %arg1 : i32, i32
  }
}

module attributes {stable_mosaic.version = 11 : i64} {
  func.func @_matmul_fused_kernel(%arg0: i32, %arg1: i32, %arg2: i32, %arg3: memref<16x128xbf16, #tpu.memory_space<vmem>>, %arg4: memref<128x128xbf16, #tpu.memory_space<vmem>>, %arg5: memref<1x128xf32, #tpu.memory_space<vmem>>, %arg6: memref<16x128xf32, #tpu.memory_space<vmem>>, %arg7: memref<16x128xf32, #tpu.memory_space<vmem>>) attributes {dimension_semantics = [#tpu.dimension_semantics<parallel>, #tpu.dimension_semantics<parallel>, #tpu.dimension_semantics<arbitrary>], iteration_bounds = array<i64: 1, 1, 1>, scalar_prefetch = 0 : i64, scratch_operands = 1 : i64, tpu.core_type = #tpu.core_type<tc>, window_params = [{transform_indices = @transform_0, window_bounds = array<i64: 16, 128>}, {transform_indices = @transform_1, window_bounds = array<i64: 128, 128>}, {transform_indices = @transform_2, window_bounds = array<i64: 1, 128>}, {transform_indices = @transform_3, window_bounds = array<i64: 16, 128>}]} {
    %c0_i32 = arith.constant 0 : i32
    %0 = arith.cmpi eq, %arg2, %c0_i32 : i32
    %1 = arith.extui %0 : i1 to i32
    %c0_i32_0 = arith.constant 0 : i32
    %2 = arith.cmpi ne, %1, %c0_i32_0 : i32
    scf.if %2 {
      %cst_10 = arith.constant 0.000000e+00 : f32
      %12 = vector.broadcast %cst_10 : f32 to vector<16x128xf32>
      %c0_11 = arith.constant 0 : index
      %c0_12 = arith.constant 0 : index
      %13 = vector.load %arg7[%c0_11, %c0_12] : memref<16x128xf32, #tpu.memory_space<vmem>>, vector<16x128xf32>
      tpu.vector_store %arg7[%c0_11, %c0_12], %12 {strides = array<i32>} : memref<16x128xf32, #tpu.memory_space<vmem>>, vector<16x128xf32>,
    } else {
    }
    %c0 = arith.constant 0 : index
    %c0_1 = arith.constant 0 : index
    %3 = vector.load %arg7[%c0, %c0_1] : memref<16x128xf32, #tpu.memory_space<vmem>>, vector<16x128xf32>
    %c0_2 = arith.constant 0 : index
    %c0_3 = arith.constant 0 : index
    %4 = vector.load %arg3[%c0_2, %c0_3] : memref<16x128xbf16, #tpu.memory_space<vmem>>, vector<16x128xbf16>
    %c0_4 = arith.constant 0 : index
    %c0_5 = arith.constant 0 : index
    %5 = vector.load %arg4[%c0_4, %c0_5] : memref<128x128xbf16, #tpu.memory_space<vmem>>, vector<128x128xbf16>
    %cst = arith.constant dense<0.000000e+00> : vector<16x128xf32>
    %6 = tpu.matmul %4, %5, %cst {dimension_numbers = #tpu.dot_dimension_numbers<[1], [0], [0], [1], [0, 0, 1, 1], [], []>} : vector<16x128xbf16>, vector<128x128xbf16>, vector<16x128xf32> -> vector<16x128xf32>
    %7 = arith.addf %3, %6 : vector<16x128xf32>
    %c0_6 = arith.constant 0 : index
    %c0_7 = arith.constant 0 : index
    %8 = vector.load %arg7[%c0_6, %c0_7] : memref<16x128xf32, #tpu.memory_space<vmem>>, vector<16x128xf32>
    tpu.vector_store %arg7[%c0_6, %c0_7], %7 {strides = array<i32>} : memref<16x128xf32, #tpu.memory_space<vmem>>, vector<16x128xf32>,
    %c0_i32_8 = arith.constant 0 : i32
    %9 = arith.cmpi eq, %arg2, %c0_i32_8 : i32
    %10 = arith.extui %9 : i1 to i32
    %c0_i32_9 = arith.constant 0 : i32
    %11 = arith.cmpi ne, %10, %c0_i32_9 : i32
    scf.if %11 {
      %c0_10 = arith.constant 0 : index
      %c0_11 = arith.constant 0 : index
      %12 = vector.load %arg7[%c0_10, %c0_11] : memref<16x128xf32, #tpu.memory_space<vmem>>, vector<16x128xf32>
      %c0_12 = arith.constant 0 : index
      %c0_13 = arith.constant 0 : index
      %13 = vector.load %arg5[%c0_12, %c0_13] : memref<1x128xf32, #tpu.memory_space<vmem>>, vector<1x128xf32>
      %14 = vector.broadcast %13 : vector<1x128xf32> to vector<16x128xf32>
      %15 = arith.addf %12, %14 : vector<16x128xf32>
      %c0_14 = arith.constant 0 : index
      %c0_15 = arith.constant 0 : index
      %16 = vector.load %arg6[%c0_14, %c0_15] : memref<16x128xf32, #tpu.memory_space<vmem>>, vector<16x128xf32>
      tpu.vector_store %arg6[%c0_14, %c0_15], %15 {strides = array<i32>} : memref<16x128xf32, #tpu.memory_space<vmem>>, vector<16x128xf32>,
    } else {
    }
    return
  }
  func.func @transform_0(%arg0: i32, %arg1: i32, %arg2: i32) -> (i32, i32) {
    %c0_i32 = arith.constant 0 : i32
    return %arg0, %arg2 : i32, i32
  }
  func.func @transform_1(%arg0: i32, %arg1: i32, %arg2: i32) -> (i32, i32) {
    %c0_i32 = arith.constant 0 : i32
    return %arg2, %arg1 : i32, i32
  }
  func.func @transform_2(%arg0: i32, %arg1: i32, %arg2: i32) -> (i32, i32) {
    %c0_i32 = arith.constant 0 : i32
    %c0_i32_0 = arith.constant 0 : i32
    return %c0_i32, %arg1 : i32, i32
  }
  func.func @transform_3(%arg0: i32, %arg1: i32, %arg2: i32) -> (i32, i32) {
    %c0_i32 = arith.constant 0 : i32
    return %arg0, %arg1 : i32, i32
  }
}

</mosaic_0001>

<llo_original>
// kernel: forward.6
$region0: #{forward.6}
  #allocation0 [shape = 'u32[]', space=smem, size = 0x4, offset = 0x4, fixed_abs, tag = 'smem constant byte address 0x4 - core index']
  #allocation1 [shape = 'u32[144,128]{1,0:T(1,128)}', space=vmem, size = 0x12000, scoped, tag = 'internal scratch']
  #allocation2 [shape = 'f32[784,128]{1,0:T(8,128)}', space=vmem, size = 0x62000, scoped, tag = 'scratch operand']
  %s0 = inlined_call_operand.vmem [shape: bf16[1568,128], index: 0, kind: input, shape index: {}]
  %s1 = inlined_call_operand.vmem [shape: bf16[128,128], index: 1, kind: input, shape index: {}]
  %s2 = inlined_call_operand.vmem [shape: f32[1,128], index: 2, kind: input, shape index: {}]
  %s3 = inlined_call_operand.vmem [shape: f32[1568,128], index: 3, kind: output, shape index: {}]
  %s4 = sld [smem:[#allocation0]]
  $region53: #{forward.6} parent=0
    _
  %s6 = ssub.s32 1, %s4
  %s7 = scalar_select 0, %s6, %s4
  loop: start=0, step=1, limit=4
  $region2: #{forward.6} parent=0 // loop_pre_header
    _
  $region3: #{forward.6} parent=0 // loop_header
    %s9 = sphi 0, %s13
    %p10 = scmp.ge.s32.totalorder %s9, 4
    %s16 = sphi 0, %s35
    %s17 = sphi 0, %s31
    %s18 = sphi 0, %s27
    %s19 = sphi 0, %s16
    %s20 = sphi 0, %s17
    %s21 = sphi 0, %s18
    %s22 = sphi 0, %s19
    %s23 = sphi 0, %s20
    %s24 = sphi 0, %s21
    %s40 = sphi 0, %s42
    %s43 = sphi 0, %s40
    %s44 = sphi 0, %s43
    %s60 = sphi 0, %s44
    %s68 = sphi 0, %s70
    %s71 = sphi 0, %s68
    %s72 = sphi 0, %s71
    %s88 = sphi 0, %s72
    %s94 = sphi 0, %s96
    %s97 = sphi 0, %s94
    %s98 = sphi 0, %s97
    %s114 = sphi 0, %s98
    %s122 = sphi 0, %s124
    %s125 = sphi 0, %s122
    %s126 = sphi 0, %s125
    %s142 = sphi 0, %s126
  $region4: #{forward.6} parent=0 // loop_header_branch
    %12 = sbr.rel (%p10) target = $region8
  $region5: #{forward.6} parent=0 // loop_body
    %s14 = ssub.s32 %s9, 1
    %s15 = ssub.s32 %s9, 2
    %s25 = sadd.s32 1, %s18
    %p26 = scmp.ge.s32.totalorder %s25, 1
    %s27 = scalar_select %p26, 0, %s25
    %s28 = sadd.s32 1, %s17
    %s29 = scalar_select %p26, %s28, %s17
    %p30 = scmp.ge.s32.totalorder %s29, 1
    %s31 = scalar_select %p30, 0, %s29
    %s32 = sadd.s32 1, %s16
    %s33 = scalar_select %p30, %s32, %s16
    %p34 = scmp.ge.s32.totalorder %s33, 2
    %s35 = scalar_select %p34, 0, %s33
    %s36 = ssub.s32 %s16, %s35
    %s37 = ssub.s32 %s18, %s27
    %s38 = sor.u32 %s36, %s37
    %p39 = scmp.eq.s32.totalorder %s38, 0
    %s41 = sadd.s32 %s40, 1
    %s42 = scalar_select %p39, %s40, %s41
    %p45 = pneg %p39
    %p46 = scmp.eq.s32.totalorder %s9, 1
    %p47 = por %p45, %p46
    %p48 = scmp.ne.s32.totalorder %s40, %s43
    %p49 = scmp.eq.s32.totalorder %s9, 0
    %p50 = por %p48, %p49
    %p51 = scmp.ne.s32.totalorder %s40, %s43
    %p52 = scmp.eq.s32.totalorder %s14, 1
    %p53 = por %p51, %p52
    %p54 = scmp.ne.s32.totalorder %s43, %s44
    %p55 = scmp.eq.s32.totalorder %s14, 0
    %p56 = por %p54, %p55
    %p57 = scmp.ne.s32.totalorder %s43, %s44
    %p58 = scmp.eq.s32.totalorder %s15, 1
    %p59 = por %p57, %p58
    %p61 = scmp.ne.s32.totalorder %s44, %s60
    %p62 = scmp.eq.s32.totalorder %s15, 0
    %p63 = por %p61, %p62
    %s64 = ssub.s32 %s18, %s27
    %s65 = ssub.s32 %s17, %s31
    %s66 = sor.u32 %s64, %s65
    %p67 = scmp.eq.s32.totalorder %s66, 0
    %s69 = sadd.s32 %s68, 1
    %s70 = scalar_select %p67, %s68, %s69
    %p73 = pneg %p67
    %p74 = scmp.eq.s32.totalorder %s9, 1
    %p75 = por %p73, %p74
    %p76 = scmp.ne.s32.totalorder %s68, %s71
    %p77 = scmp.eq.s32.totalorder %s9, 0
    %p78 = por %p76, %p77
    %p79 = scmp.ne.s32.totalorder %s68, %s71
    %p80 = scmp.eq.s32.totalorder %s14, 1
    %p81 = por %p79, %p80
    %p82 = scmp.ne.s32.totalorder %s71, %s72
    %p83 = scmp.eq.s32.totalorder %s14, 0
    %p84 = por %p82, %p83
    %p85 = scmp.ne.s32.totalorder %s71, %s72
    %p86 = scmp.eq.s32.totalorder %s15, 1
    %p87 = por %p85, %p86
    %p89 = scmp.ne.s32.totalorder %s72, %s88
    %p90 = scmp.eq.s32.totalorder %s15, 0
    %p91 = por %p89, %p90
    %s92 = ssub.s32 %s17, %s31
    %p93 = scmp.eq.s32.totalorder %s92, 0
    %s95 = sadd.s32 %s94, 1
    %s96 = scalar_select %p93, %s94, %s95
    %p99 = pneg %p93
    %p100 = scmp.eq.s32.totalorder %s9, 1
    %p101 = por %p99, %p100
    %p102 = scmp.ne.s32.totalorder %s94, %s97
    %p103 = scmp.eq.s32.totalorder %s9, 0
    %p104 = por %p102, %p103
    %p105 = scmp.ne.s32.totalorder %s94, %s97
    %p106 = scmp.eq.s32.totalorder %s14, 1
    %p107 = por %p105, %p106
    %p108 = scmp.ne.s32.totalorder %s97, %s98
    %p109 = scmp.eq.s32.totalorder %s14, 0
    %p110 = por %p108, %p109
    %p111 = scmp.ne.s32.totalorder %s97, %s98
    %p112 = scmp.eq.s32.totalorder %s15, 1
    %p113 = por %p111, %p112
    %p115 = scmp.ne.s32.totalorder %s98, %s114
    %p116 = scmp.eq.s32.totalorder %s15, 0
    %p117 = por %p115, %p116
    %s118 = ssub.s32 %s16, %s35
    %s119 = ssub.s32 %s17, %s31
    %s120 = sor.u32 %s118, %s119
    %p121 = scmp.eq.s32.totalorder %s120, 0
    %s123 = sadd.s32 %s122, 1
    %s124 = scalar_select %p121, %s122, %s123
    %p127 = pneg %p121
    %p128 = scmp.eq.s32.totalorder %s9, 1
    %p129 = por %p127, %p128
    %p130 = scmp.ne.s32.totalorder %s122, %s125
    %p131 = scmp.eq.s32.totalorder %s9, 0
    %p132 = por %p130, %p131
    %p133 = scmp.ne.s32.totalorder %s122, %s125
    %p134 = scmp.eq.s32.totalorder %s14, 1
    %p135 = por %p133, %p134
    %p136 = scmp.ne.s32.totalorder %s125, %s126
    %p137 = scmp.eq.s32.totalorder %s14, 0
    %p138 = por %p136, %p137
    %p139 = scmp.ne.s32.totalorder %s125, %s126
    %p140 = scmp.eq.s32.totalorder %s15, 1
    %p141 = por %p139, %p140
    %p143 = scmp.ne.s32.totalorder %s126, %s142
    %p144 = scmp.eq.s32.totalorder %s15, 0
    %p145 = por %p143, %p144
    %p146 = scmp.le.s32.totalorder 1, %s9
    %p147 = scmp.lt.s32.totalorder %s9, 3
    %p148 = pnand %p146, %p147
    %p149 = pneg %p148
    // Predicated region
    $region9: #{forward.6} parent=5 // pred_check
      _
    $region10: #{forward.6} parent=5 // pred_check_branch
      %151 = sbr.rel (%p148) target = $region12
    $region11: #{forward.6} parent=5 // pred_region
      %s152 = ssub.s32 %s9, 1
      // Predicated region
      $region13: #{forward.6} parent=11 // pred_check
        %p153 = pneg %p84
      $region14: #{forward.6} parent=11 // pred_check_branch
        %155 = sbr.rel (%p153) target = $region16
      $region15: #{forward.6} parent=11 // pred_region
        %s156 = smul.u32 16, %s21
        %p157 = scmp.lt.s32.totalorder %s156, 15
        %s158 = scalar_select %p157, %s156, 15
        %p159 = scmp.lt.s32.totalorder %s20, 0
        %s160 = scalar_select %p159, %s20, 0
        %s161 = sadd.s32 %s160, %s158
        %s162 = smul.addr %s161, 4
        %s163 = scalar_lea.vmem %s1, %s162
        %s164 = smul.u32 16, %s21
      $region16: #{forward.6} parent=11 // pred_fallthru
        _
      // Predicated region
      $region17: #{forward.6} parent=11 // pred_check
        %p165 = pneg %p110
      $region18: #{forward.6} parent=11 // pred_check_branch
        %167 = sbr.rel (%p165) target = $region20
      $region19: #{forward.6} parent=11 // pred_region
        %p168 = scmp.lt.s32.totalorder %s20, 0
        %s169 = scalar_select %p168, %s20, 0
        %s170 = scalar_lea.vmem %s2, %s169
      $region20: #{forward.6} parent=11 // pred_fallthru
        _
    $region12: #{forward.6} parent=5 // pred_fallthru
      _
    %p171 = scmp.lt.s32.totalorder %s9, 2
    // Predicated region
    $region21: #{forward.6} parent=5 // pred_check
      %p172 = pneg %p171
    $region22: #{forward.6} parent=5 // pred_check_branch
      %174 = sbr.rel (%p172) target = $region24
    $region23: #{forward.6} parent=5 // pred_region
      // Predicated region
      $region25: #{forward.6} parent=23 // pred_check
        %p175 = pneg %p50
      $region26: #{forward.6} parent=23 // pred_check_branch
        %177 = sbr.rel (%p175) target = $region28
      $region27: #{forward.6} parent=23 // pred_region
        %s178 = smul.u32 98, %s16
        %p179 = scmp.lt.s32.totalorder %s178, 195
        %s180 = scalar_select %p179, %s178, 195
        %p181 = scmp.lt.s32.totalorder %s18, 0
        %s182 = scalar_select %p181, %s18, 0
        %s183 = sadd.s32 %s182, %s180
        %s184 = smul.addr %s183, 4
        %s185 = scalar_lea.vmem %s0, %s184
        %s186 = smul.u32 98, %s16
      $region28: #{forward.6} parent=23 // pred_fallthru
        _
    $region24: #{forward.6} parent=5 // pred_fallthru
      _
    %p187 = scmp.le.s32.totalorder 1, %s9
    %p188 = scmp.lt.s32.totalorder %s9, 3
    %p189 = pnand %p187, %p188
    %p190 = pneg %p189
    // Predicated region
    $region29: #{forward.6} parent=5 // pred_check
      _
    $region30: #{forward.6} parent=5 // pred_check_branch
      %192 = sbr.rel (%p189) target = $region32
    $region31: #{forward.6} parent=5 // pred_region
      %s193 = ssub.s32 %s9, 1
      %s194 = smul.u32 98, %s19
      %p195 = scmp.lt.s32.totalorder %s194, 195
      %s196 = scalar_select %p195, %s194, 195
      %p197 = scmp.lt.s32.totalorder %s21, 0
      %s198 = scalar_select %p197, %s21, 0
      %s199 = sadd.s32 %s198, %s196
      %s200 = smul.addr %s199, 4
      %s201 = scalar_lea.vmem %s0, %s200
      %p202 = pneg %p56
      %p203 = pneg %p53
      %s204 = smul.u32 16, %s21
      %p205 = scmp.lt.s32.totalorder %s204, 15
      %s206 = scalar_select %p205, %s204, 15
      %p207 = scmp.lt.s32.totalorder %s20, 0
      %s208 = scalar_select %p207, %s20, 0
      %s209 = sadd.s32 %s208, %s206
      %s210 = smul.addr %s209, 4
      %s211 = scalar_lea.vmem %s1, %s210
      %p212 = pneg %p84
      %p213 = pneg %p81
      %p214 = scmp.lt.s32.totalorder %s20, 0
      %s215 = scalar_select %p214, %s20, 0
      %s216 = scalar_lea.vmem %s2, %s215
      %p217 = pneg %p110
      %p218 = pneg %p107
      %p219 = pneg %p138
      %p220 = pneg %p135
      %s221 = smul.u32 98, %s19
      %p222 = scmp.lt.s32.totalorder %s221, 195
      %s223 = scalar_select %p222, %s221, 195
      %p224 = scmp.lt.s32.totalorder %s20, 0
      %s225 = scalar_select %p224, %s20, 0
      %s226 = sadd.s32 %s225, %s223
      %s227 = smul.addr %s226, 8
      %s228 = scalar_lea.vmem %s3, %s227
      %s229 = smul.u32 98, %s19
      %p230 = scmp.lt.s32.totalorder %s229, 195
      %s231 = scalar_select %p230, %s229, 195
      %p232 = scmp.lt.s32.totalorder %s21, 0
      %s233 = scalar_select %p232, %s21, 0
      %s234 = sadd.s32 %s233, %s231
      %s235 = smul.addr %s234, 4
      %s236 = scalar_lea.vmem %s0, %s235
      %s237 = smul.u32 98, %s19
      %s238 = smul.u32 16, %s21
      %p239 = scmp.lt.s32.totalorder %s238, 15
      %s240 = scalar_select %p239, %s238, 15
      %p241 = scmp.lt.s32.totalorder %s20, 0
      %s242 = scalar_select %p241, %s20, 0
      %s243 = sadd.s32 %s242, %s240
      %s244 = smul.addr %s243, 4
      %s245 = scalar_lea.vmem %s1, %s244
      %s246 = smul.u32 16, %s21
      %p247 = scmp.lt.s32.totalorder %s20, 0
      %s248 = scalar_select %p247, %s20, 0
      %s249 = scalar_lea.vmem %s2, %s248
      %s250 = smul.u32 98, %s19
      %p251 = scmp.lt.s32.totalorder %s250, 195
      %s252 = scalar_select %p251, %s250, 195
      %p253 = scmp.lt.s32.totalorder %s20, 0
      %s254 = scalar_select %p253, %s20, 0
      %s255 = sadd.s32 %s254, %s252
      %s256 = smul.addr %s255, 8
      %s257 = scalar_lea.vmem %s3, %s256
      %s258 = smul.u32 98, %s19
      %p260 = scmp.eq.s32.totalorder %s21, 0
      // Predicated region
      $region33: #{forward.6} parent=31 // pred_check
        %p261 = pneg %p260
      $region34: #{forward.6} parent=31 // pred_check_branch
        %263 = sbr.rel (%p261) target = $region36
      $region35: #{forward.6} parent=31 // pred_region
        %264 = vst [vmem:[#allocation2] sm:$0xff] 0.0
        %265 = vst [vmem:[#allocation2 + $0x8] sm:$0xff] 0.0
        %266 = vst [vmem:[#allocation2 + $0x10] sm:$0xff] 0.0
        %267 = vst [vmem:[#allocation2 + $0x18] sm:$0xff] 0.0
        %268 = vst [vmem:[#allocation2 + $0x20] sm:$0xff] 0.0
        %269 = vst [vmem:[#allocation2 + $0x28] sm:$0xff] 0.0
        %270 = vst [vmem:[#allocation2 + $0x30] sm:$0xff] 0.0
        %271 = vst [vmem:[#allocation2 + $0x38] sm:$0xff] 0.0
        %272 = vst [vmem:[#allocation2 + $0x40] sm:$0xff] 0.0
        %273 = vst [vmem:[#allocation2 + $0x48] sm:$0xff] 0.0
        %274 = vst [vmem:[#allocation2 + $0x50] sm:$0xff] 0.0
        %275 = vst [vmem:[#allocation2 + $0x58] sm:$0xff] 0.0
        %276 = vst [vmem:[#allocation2 + $0x60] sm:$0xff] 0.0
        %277 = vst [vmem:[#allocation2 + $0x68] sm:$0xff] 0.0
        %278 = vst [vmem:[#allocation2 + $0x70] sm:$0xff] 0.0
        %279 = vst [vmem:[#allocation2 + $0x78] sm:$0xff] 0.0
        %280 = vst [vmem:[#allocation2 + $0x80] sm:$0xff] 0.0
        %281 = vst [vmem:[#allocation2 + $0x88] sm:$0xff] 0.0
        %282 = vst [vmem:[#allocation2 + $0x90] sm:$0xff] 0.0
        %283 = vst [vmem:[#allocation2 + $0x98] sm:$0xff] 0.0
        %284 = vst [vmem:[#allocation2 + $0xa0] sm:$0xff] 0.0
        %285 = vst [vmem:[#allocation2 + $0xa8] sm:$0xff] 0.0
        %286 = vst [vmem:[#allocation2 + $0xb0] sm:$0xff] 0.0
        %287 = vst [vmem:[#allocation2 + $0xb8] sm:$0xff] 0.0
        %288 = vst [vmem:[#allocation2 + $0xc0] sm:$0xff] 0.0
        %289 = vst [vmem:[#allocation2 + $0xc8] sm:$0xff] 0.0
        %290 = vst [vmem:[#allocation2 + $0xd0] sm:$0xff] 0.0
        %291 = vst [vmem:[#allocation2 + $0xd8] sm:$0xff] 0.0
        %292 = vst [vmem:[#allocation2 + $0xe0] sm:$0xff] 0.0
        %293 = vst [vmem:[#allocation2 + $0xe8] sm:$0xff] 0.0
        %294 = vst [vmem:[#allocation2 + $0xf0] sm:$0xff] 0.0
        %295 = vst [vmem:[#allocation2 + $0xf8] sm:$0xff] 0.0
        %296 = vst [vmem:[#allocation2 + $0x100] sm:$0xff] 0.0
        %297 = vst [vmem:[#allocation2 + $0x108] sm:$0xff] 0.0
        %298 = vst [vmem:[#allocation2 + $0x110] sm:$0xff] 0.0
        %299 = vst [vmem:[#allocation2 + $0x118] sm:$0xff] 0.0
        %300 = vst [vmem:[#allocation2 + $0x120] sm:$0xff] 0.0
        %301 = vst [vmem:[#allocation2 + $0x128] sm:$0xff] 0.0
        %302 = vst [vmem:[#allocation2 + $0x130] sm:$0xff] 0.0
        %303 = vst [vmem:[#allocation2 + $0x138] sm:$0xff] 0.0
        %304 = vst [vmem:[#allocation2 + $0x140] sm:$0xff] 0.0
        %305 = vst [vmem:[#allocation2 + $0x148] sm:$0xff] 0.0
        %306 = vst [vmem:[#allocation2 + $0x150] sm:$0xff] 0.0
        %307 = vst [vmem:[#allocation2 + $0x158] sm:$0xff] 0.0
        %308 = vst [vmem:[#allocation2 + $0x160] sm:$0xff] 0.0
        %309 = vst [vmem:[#allocation2 + $0x168] sm:$0xff] 0.0
        %310 = vst [vmem:[#allocation2 + $0x170] sm:$0xff] 0.0
        %311 = vst [vmem:[#allocation2 + $0x178] sm:$0xff] 0.0
        %312 = vst [vmem:[#allocation2 + $0x180] sm:$0xff] 0.0
        %313 = vst [vmem:[#allocation2 + $0x188] sm:$0xff] 0.0
        %314 = vst [vmem:[#allocation2 + $0x190] sm:$0xff] 0.0
        %315 = vst [vmem:[#allocation2 + $0x198] sm:$0xff] 0.0
        %316 = vst [vmem:[#allocation2 + $0x1a0] sm:$0xff] 0.0
        %317 = vst [vmem:[#allocation2 + $0x1a8] sm:$0xff] 0.0
        %318 = vst [vmem:[#allocation2 + $0x1b0] sm:$0xff] 0.0
        %319 = vst [vmem:[#allocation2 + $0x1b8] sm:$0xff] 0.0
        %320 = vst [vmem:[#allocation2 + $0x1c0] sm:$0xff] 0.0
        %321 = vst [vmem:[#allocation2 + $0x1c8] sm:$0xff] 0.0
        %322 = vst [vmem:[#allocation2 + $0x1d0] sm:$0xff] 0.0
        %323 = vst [vmem:[#allocation2 + $0x1d8] sm:$0xff] 0.0
        %324 = vst [vmem:[#allocation2 + $0x1e0] sm:$0xff] 0.0
        %325 = vst [vmem:[#allocation2 + $0x1e8] sm:$0xff] 0.0
        %326 = vst [vmem:[#allocation2 + $0x1f0] sm:$0xff] 0.0
        %327 = vst [vmem:[#allocation2 + $0x1f8] sm:$0xff] 0.0
        %328 = vst [vmem:[#allocation2 + $0x200] sm:$0xff] 0.0
        %329 = vst [vmem:[#allocation2 + $0x208] sm:$0xff] 0.0
        %330 = vst [vmem:[#allocation2 + $0x210] sm:$0xff] 0.0
        %331 = vst [vmem:[#allocation2 + $0x218] sm:$0xff] 0.0
        %332 = vst [vmem:[#allocation2 + $0x220] sm:$0xff] 0.0
        %333 = vst [vmem:[#allocation2 + $0x228] sm:$0xff] 0.0
        %334 = vst [vmem:[#allocation2 + $0x230] sm:$0xff] 0.0
        %335 = vst [vmem:[#allocation2 + $0x238] sm:$0xff] 0.0
        %336 = vst [vmem:[#allocation2 + $0x240] sm:$0xff] 0.0
        %337 = vst [vmem:[#allocation2 + $0x248] sm:$0xff] 0.0
        %338 = vst [vmem:[#allocation2 + $0x250] sm:$0xff] 0.0
        %339 = vst [vmem:[#allocation2 + $0x258] sm:$0xff] 0.0
        %340 = vst [vmem:[#allocation2 + $0x260] sm:$0xff] 0.0
        %341 = vst [vmem:[#allocation2 + $0x268] sm:$0xff] 0.0
        %342 = vst [vmem:[#allocation2 + $0x270] sm:$0xff] 0.0
        %343 = vst [vmem:[#allocation2 + $0x278] sm:$0xff] 0.0
        %344 = vst [vmem:[#allocation2 + $0x280] sm:$0xff] 0.0
        %345 = vst [vmem:[#allocation2 + $0x288] sm:$0xff] 0.0
        %346 = vst [vmem:[#allocation2 + $0x290] sm:$0xff] 0.0
        %347 = vst [vmem:[#allocation2 + $0x298] sm:$0xff] 0.0
        %348 = vst [vmem:[#allocation2 + $0x2a0] sm:$0xff] 0.0
        %349 = vst [vmem:[#allocation2 + $0x2a8] sm:$0xff] 0.0
        %350 = vst [vmem:[#allocation2 + $0x2b0] sm:$0xff] 0.0
        %351 = vst [vmem:[#allocation2 + $0x2b8] sm:$0xff] 0.0
        %352 = vst [vmem:[#allocation2 + $0x2c0] sm:$0xff] 0.0
        %353 = vst [vmem:[#allocation2 + $0x2c8] sm:$0xff] 0.0
        %354 = vst [vmem:[#allocation2 + $0x2d0] sm:$0xff] 0.0
        %355 = vst [vmem:[#allocation2 + $0x2d8] sm:$0xff] 0.0
        %356 = vst [vmem:[#allocation2 + $0x2e0] sm:$0xff] 0.0
        %357 = vst [vmem:[#allocation2 + $0x2e8] sm:$0xff] 0.0
        %358 = vst [vmem:[#allocation2 + $0x2f0] sm:$0xff] 0.0
        %359 = vst [vmem:[#allocation2 + $0x2f8] sm:$0xff] 0.0
        %360 = vst [vmem:[#allocation2 + $0x300] sm:$0xff] 0.0
        %361 = vst [vmem:[#allocation2 + $0x308] sm:$0xff] 0.0
      $region36: #{forward.6} parent=31 // pred_fallthru
        _
      %v362 = vld [vmem:[#allocation2] sm:$0xff]
      %v363 = vld [vmem:[#allocation2 + $0x8] sm:$0xff]
      %v364 = vld [vmem:[#allocation2 + $0x10] sm:$0xff]
      %v365 = vld [vmem:[#allocation2 + $0x18] sm:$0xff]
      %v366 = vld [vmem:[#allocation2 + $0x20] sm:$0xff]
      %v367 = vld [vmem:[#allocation2 + $0x28] sm:$0xff]
      %v368 = vld [vmem:[#allocation2 + $0x30] sm:$0xff]
      %v369 = vld [vmem:[#allocation2 + $0x38] sm:$0xff]
      %v370 = vld [vmem:[#allocation2 + $0x40] sm:$0xff]
      %v371 = vld [vmem:[#allocation2 + $0x48] sm:$0xff]
      %v372 = vld [vmem:[#allocation2 + $0x50] sm:$0xff]
      %v373 = vld [vmem:[#allocation2 + $0x58] sm:$0xff]
      %v374 = vld [vmem:[#allocation2 + $0x60] sm:$0xff]
      %v375 = vld [vmem:[#allocation2 + $0x68] sm:$0xff]
      %v376 = vld [vmem:[#allocation2 + $0x70] sm:$0xff]
      %v377 = vld [vmem:[#allocation2 + $0x78] sm:$0xff]
      %v378 = vld [vmem:[#allocation2 + $0x80] sm:$0xff]
      %v379 = vld [vmem:[#allocation2 + $0x88] sm:$0xff]
      %v380 = vld [vmem:[#allocation2 + $0x90] sm:$0xff]
      %v381 = vld [vmem:[#allocation2 + $0x98] sm:$0xff]
      %v382 = vld [vmem:[#allocation2 + $0xa0] sm:$0xff]
      %v383 = vld [vmem:[#allocation2 + $0xa8] sm:$0xff]
      %v384 = vld [vmem:[#allocation2 + $0xb0] sm:$0xff]
      %v385 = vld [vmem:[#allocation2 + $0xb8] sm:$0xff]
      %v386 = vld [vmem:[#allocation2 + $0xc0] sm:$0xff]
      %v387 = vld [vmem:[#allocation2 + $0xc8] sm:$0xff]
      %v388 = vld [vmem:[#allocation2 + $0xd0] sm:$0xff]
      %v389 = vld [vmem:[#allocation2 + $0xd8] sm:$0xff]
      %v390 = vld [vmem:[#allocation2 + $0xe0] sm:$0xff]
      %v391 = vld [vmem:[#allocation2 + $0xe8] sm:$0xff]
      %v392 = vld [vmem:[#allocation2 + $0xf0] sm:$0xff]
      %v393 = vld [vmem:[#allocation2 + $0xf8] sm:$0xff]
      %v394 = vld [vmem:[#allocation2 + $0x100] sm:$0xff]
      %v395 = vld [vmem:[#allocation2 + $0x108] sm:$0xff]
      %v396 = vld [vmem:[#allocation2 + $0x110] sm:$0xff]
      %v397 = vld [vmem:[#allocation2 + $0x118] sm:$0xff]
      %v398 = vld [vmem:[#allocation2 + $0x120] sm:$0xff]
      %v399 = vld [vmem:[#allocation2 + $0x128] sm:$0xff]
      %v400 = vld [vmem:[#allocation2 + $0x130] sm:$0xff]
      %v401 = vld [vmem:[#allocation2 + $0x138] sm:$0xff]
      %v402 = vld [vmem:[#allocation2 + $0x140] sm:$0xff]
      %v403 = vld [vmem:[#allocation2 + $0x148] sm:$0xff]
      %v404 = vld [vmem:[#allocation2 + $0x150] sm:$0xff]
      %v405 = vld [vmem:[#allocation2 + $0x158] sm:$0xff]
      %v406 = vld [vmem:[#allocation2 + $0x160] sm:$0xff]
      %v407 = vld [vmem:[#allocation2 + $0x168] sm:$0xff]
      %v408 = vld [vmem:[#allocation2 + $0x170] sm:$0xff]
      %v409 = vld [vmem:[#allocation2 + $0x178] sm:$0xff]
      %v410 = vld [vmem:[#allocation2 + $0x180] sm:$0xff]
      %v411 = vld [vmem:[#allocation2 + $0x188] sm:$0xff]
      %v412 = vld [vmem:[#allocation2 + $0x190] sm:$0xff]
      %v413 = vld [vmem:[#allocation2 + $0x198] sm:$0xff]
      %v414 = vld [vmem:[#allocation2 + $0x1a0] sm:$0xff]
      %v415 = vld [vmem:[#allocation2 + $0x1a8] sm:$0xff]
      %v416 = vld [vmem:[#allocation2 + $0x1b0] sm:$0xff]
      %v417 = vld [vmem:[#allocation2 + $0x1b8] sm:$0xff]
      %v418 = vld [vmem:[#allocation2 + $0x1c0] sm:$0xff]
      %v419 = vld [vmem:[#allocation2 + $0x1c8] sm:$0xff]
      %v420 = vld [vmem:[#allocation2 + $0x1d0] sm:$0xff]
      %v421 = vld [vmem:[#allocation2 + $0x1d8] sm:$0xff]
      %v422 = vld [vmem:[#allocation2 + $0x1e0] sm:$0xff]
      %v423 = vld [vmem:[#allocation2 + $0x1e8] sm:$0xff]
      %v424 = vld [vmem:[#allocation2 + $0x1f0] sm:$0xff]
      %v425 = vld [vmem:[#allocation2 + $0x1f8] sm:$0xff]
      %v426 = vld [vmem:[#allocation2 + $0x200] sm:$0xff]
      %v427 = vld [vmem:[#allocation2 + $0x208] sm:$0xff]
      %v428 = vld [vmem:[#allocation2 + $0x210] sm:$0xff]
      %v429 = vld [vmem:[#allocation2 + $0x218] sm:$0xff]
      %v430 = vld [vmem:[#allocation2 + $0x220] sm:$0xff]
      %v431 = vld [vmem:[#allocation2 + $0x228] sm:$0xff]
      %v432 = vld [vmem:[#allocation2 + $0x230] sm:$0xff]
      %v433 = vld [vmem:[#allocation2 + $0x238] sm:$0xff]
      %v434 = vld [vmem:[#allocation2 + $0x240] sm:$0xff]
      %v435 = vld [vmem:[#allocation2 + $0x248] sm:$0xff]
      %v436 = vld [vmem:[#allocation2 + $0x250] sm:$0xff]
      %v437 = vld [vmem:[#allocation2 + $0x258] sm:$0xff]
      %v438 = vld [vmem:[#allocation2 + $0x260] sm:$0xff]
      %v439 = vld [vmem:[#allocation2 + $0x268] sm:$0xff]
      %v440 = vld [vmem:[#allocation2 + $0x270] sm:$0xff]
      %v441 = vld [vmem:[#allocation2 + $0x278] sm:$0xff]
      %v442 = vld [vmem:[#allocation2 + $0x280] sm:$0xff]
      %v443 = vld [vmem:[#allocation2 + $0x288] sm:$0xff]
      %v444 = vld [vmem:[#allocation2 + $0x290] sm:$0xff]
      %v445 = vld [vmem:[#allocation2 + $0x298] sm:$0xff]
      %v446 = vld [vmem:[#allocation2 + $0x2a0] sm:$0xff]
      %v447 = vld [vmem:[#allocation2 + $0x2a8] sm:$0xff]
      %v448 = vld [vmem:[#allocation2 + $0x2b0] sm:$0xff]
      %v449 = vld [vmem:[#allocation2 + $0x2b8] sm:$0xff]
      %v450 = vld [vmem:[#allocation2 + $0x2c0] sm:$0xff]
      %v451 = vld [vmem:[#allocation2 + $0x2c8] sm:$0xff]
      %v452 = vld [vmem:[#allocation2 + $0x2d0] sm:$0xff]
      %v453 = vld [vmem:[#allocation2 + $0x2d8] sm:$0xff]
      %v454 = vld [vmem:[#allocation2 + $0x2e0] sm:$0xff]
      %v455 = vld [vmem:[#allocation2 + $0x2e8] sm:$0xff]
      %v456 = vld [vmem:[#allocation2 + $0x2f0] sm:$0xff]
      %v457 = vld [vmem:[#allocation2 + $0x2f8] sm:$0xff]
      %v458 = vld [vmem:[#allocation2 + $0x300] sm:$0xff]
      %v459 = vld [vmem:[#allocation2 + $0x308] sm:$0xff]
      %v460 = vld [vmem:[%s236] sm:$0xf]
      %v461 = vld [vmem:[%s236 + $0x4] sm:$0xf]
      %v462 = vld [vmem:[%s236 + $0x8] sm:$0xf]
      %v463 = vld [vmem:[%s236 + $0xc] sm:$0xf]
      %v464 = vld [vmem:[%s236 + $0x10] sm:$0xf]
      %v465 = vld [vmem:[%s236 + $0x14] sm:$0xf]
      %v466 = vld [vmem:[%s236 + $0x18] sm:$0xf]
      %v467 = vld [vmem:[%s236 + $0x1c] sm:$0xf]
      %v468 = vld [vmem:[%s236 + $0x20] sm:$0xf]
      %v469 = vld [vmem:[%s236 + $0x24] sm:$0xf]
      %v470 = vld [vmem:[%s236 + $0x28] sm:$0xf]
      %v471 = vld [vmem:[%s236 + $0x2c] sm:$0xf]
      %v472 = vld [vmem:[%s236 + $0x30] sm:$0xf]
      %v473 = vld [vmem:[%s236 + $0x34] sm:$0xf]
      %v474 = vld [vmem:[%s236 + $0x38] sm:$0xf]
      %v475 = vld [vmem:[%s236 + $0x3c] sm:$0xf]
      %v476 = vld [vmem:[%s236 + $0x40] sm:$0xf]
      %v477 = vld [vmem:[%s236 + $0x44] sm:$0xf]
      %v478 = vld [vmem:[%s236 + $0x48] sm:$0xf]
      %v479 = vld [vmem:[%s236 + $0x4c] sm:$0xf]
      %v480 = vld [vmem:[%s236 + $0x50] sm:$0xf]
      %v481 = vld [vmem:[%s236 + $0x54] sm:$0xf]
      %v482 = vld [vmem:[%s236 + $0x58] sm:$0xf]
      %v483 = vld [vmem:[%s236 + $0x5c] sm:$0xf]
      %v484 = vld [vmem:[%s236 + $0x60] sm:$0xf]
      %v485 = vld [vmem:[%s236 + $0x64] sm:$0xf]
      %v486 = vld [vmem:[%s236 + $0x68] sm:$0xf]
      %v487 = vld [vmem:[%s236 + $0x6c] sm:$0xf]
      %v488 = vld [vmem:[%s236 + $0x70] sm:$0xf]
      %v489 = vld [vmem:[%s236 + $0x74] sm:$0xf]
      %v490 = vld [vmem:[%s236 + $0x78] sm:$0xf]
      %v491 = vld [vmem:[%s236 + $0x7c] sm:$0xf]
      %v492 = vld [vmem:[%s236 + $0x80] sm:$0xf]
      %v493 = vld [vmem:[%s236 + $0x84] sm:$0xf]
      %v494 = vld [vmem:[%s236 + $0x88] sm:$0xf]
      %v495 = vld [vmem:[%s236 + $0x8c] sm:$0xf]
      %v496 = vld [vmem:[%s236 + $0x90] sm:$0xf]
      %v497 = vld [vmem:[%s236 + $0x94] sm:$0xf]
      %v498 = vld [vmem:[%s236 + $0x98] sm:$0xf]
      %v499 = vld [vmem:[%s236 + $0x9c] sm:$0xf]
      %v500 = vld [vmem:[%s236 + $0xa0] sm:$0xf]
      %v501 = vld [vmem:[%s236 + $0xa4] sm:$0xf]
      %v502 = vld [vmem:[%s236 + $0xa8] sm:$0xf]
      %v503 = vld [vmem:[%s236 + $0xac] sm:$0xf]
      %v504 = vld [vmem:[%s236 + $0xb0] sm:$0xf]
      %v505 = vld [vmem:[%s236 + $0xb4] sm:$0xf]
      %v506 = vld [vmem:[%s236 + $0xb8] sm:$0xf]
      %v507 = vld [vmem:[%s236 + $0xbc] sm:$0xf]
      %v508 = vld [vmem:[%s236 + $0xc0] sm:$0xf]
      %v509 = vld [vmem:[%s236 + $0xc4] sm:$0xf]
      %v510 = vld [vmem:[%s236 + $0xc8] sm:$0xf]
      %v511 = vld [vmem:[%s236 + $0xcc] sm:$0xf]
      %v512 = vld [vmem:[%s236 + $0xd0] sm:$0xf]
      %v513 = vld [vmem:[%s236 + $0xd4] sm:$0xf]
      %v514 = vld [vmem:[%s236 + $0xd8] sm:$0xf]
      %v515 = vld [vmem:[%s236 + $0xdc] sm:$0xf]
      %v516 = vld [vmem:[%s236 + $0xe0] sm:$0xf]
      %v517 = vld [vmem:[%s236 + $0xe4] sm:$0xf]
      %v518 = vld [vmem:[%s236 + $0xe8] sm:$0xf]
      %v519 = vld [vmem:[%s236 + $0xec] sm:$0xf]
      %v520 = vld [vmem:[%s236 + $0xf0] sm:$0xf]
      %v521 = vld [vmem:[%s236 + $0xf4] sm:$0xf]
      %v522 = vld [vmem:[%s236 + $0xf8] sm:$0xf]
      %v523 = vld [vmem:[%s236 + $0xfc] sm:$0xf]
      %v524 = vld [vmem:[%s236 + $0x100] sm:$0xf]
      %v525 = vld [vmem:[%s236 + $0x104] sm:$0xf]
      %v526 = vld [vmem:[%s236 + $0x108] sm:$0xf]
      %v527 = vld [vmem:[%s236 + $0x10c] sm:$0xf]
      %v528 = vld [vmem:[%s236 + $0x110] sm:$0xf]
      %v529 = vld [vmem:[%s236 + $0x114] sm:$0xf]
      %v530 = vld [vmem:[%s236 + $0x118] sm:$0xf]
      %v531 = vld [vmem:[%s236 + $0x11c] sm:$0xf]
      %v532 = vld [vmem:[%s236 + $0x120] sm:$0xf]
      %v533 = vld [vmem:[%s236 + $0x124] sm:$0xf]
      %v534 = vld [vmem:[%s236 + $0x128] sm:$0xf]
      %v535 = vld [vmem:[%s236 + $0x12c] sm:$0xf]
      %v536 = vld [vmem:[%s236 + $0x130] sm:$0xf]
      %v537 = vld [vmem:[%s236 + $0x134] sm:$0xf]
      %v538 = vld [vmem:[%s236 + $0x138] sm:$0xf]
      %v539 = vld [vmem:[%s236 + $0x13c] sm:$0xf]
      %v540 = vld [vmem:[%s236 + $0x140] sm:$0xf]
      %v541 = vld [vmem:[%s236 + $0x144] sm:$0xf]
      %v542 = vld [vmem:[%s236 + $0x148] sm:$0xf]
      %v543 = vld [vmem:[%s236 + $0x14c] sm:$0xf]
      %v544 = vld [vmem:[%s236 + $0x150] sm:$0xf]
      %v545 = vld [vmem:[%s236 + $0x154] sm:$0xf]
      %v546 = vld [vmem:[%s236 + $0x158] sm:$0xf]
      %v547 = vld [vmem:[%s236 + $0x15c] sm:$0xf]
      %v548 = vld [vmem:[%s236 + $0x160] sm:$0xf]
      %v549 = vld [vmem:[%s236 + $0x164] sm:$0xf]
      %v550 = vld [vmem:[%s236 + $0x168] sm:$0xf]
      %v551 = vld [vmem:[%s236 + $0x16c] sm:$0xf]
      %v552 = vld [vmem:[%s236 + $0x170] sm:$0xf]
      %v553 = vld [vmem:[%s236 + $0x174] sm:$0xf]
      %v554 = vld [vmem:[%s236 + $0x178] sm:$0xf]
      %v555 = vld [vmem:[%s236 + $0x17c] sm:$0xf]
      %v556 = vld [vmem:[%s236 + $0x180] sm:$0xf]
      %v557 = vld [vmem:[%s236 + $0x184] sm:$0xf]
      %v558 = vld [vmem:[%s245] sm:$0xf]
      %v559 = vld [vmem:[%s245 + $0x4] sm:$0xf]
      %v560 = vld [vmem:[%s245 + $0x8] sm:$0xf]
      %v561 = vld [vmem:[%s245 + $0xc] sm:$0xf]
      %v562 = vld [vmem:[%s245 + $0x10] sm:$0xf]
      %v563 = vld [vmem:[%s245 + $0x14] sm:$0xf]
      %v564 = vld [vmem:[%s245 + $0x18] sm:$0xf]
      %v565 = vld [vmem:[%s245 + $0x1c] sm:$0xf]
      %v566 = vld [vmem:[%s245 + $0x20] sm:$0xf]
      %v567 = vld [vmem:[%s245 + $0x24] sm:$0xf]
      %v568 = vld [vmem:[%s245 + $0x28] sm:$0xf]
      %v569 = vld [vmem:[%s245 + $0x2c] sm:$0xf]
      %v570 = vld [vmem:[%s245 + $0x30] sm:$0xf]
      %v571 = vld [vmem:[%s245 + $0x34] sm:$0xf]
      %v572 = vld [vmem:[%s245 + $0x38] sm:$0xf]
      %v573 = vld [vmem:[%s245 + $0x3c] sm:$0xf]
      %v672 = vunpack.c.l.b16 %v460
      %v673 = vunpack.c.l.b16 %v461
      %v674 = vunpack.c.l.b16 %v462
      %v675 = vunpack.c.l.b16 %v463
      %v676 = vunpack.c.l.b16 %v464
      %v677 = vunpack.c.l.b16 %v465
      %v678 = vunpack.c.l.b16 %v466
      %v679 = vunpack.c.l.b16 %v467
      %v680 = vunpack.c.l.b16 %v468
      %v681 = vunpack.c.l.b16 %v469
      %v682 = vunpack.c.l.b16 %v470
      %v683 = vunpack.c.l.b16 %v471
      %v684 = vunpack.c.l.b16 %v472
      %v685 = vunpack.c.l.b16 %v473
      %v686 = vunpack.c.l.b16 %v474
      %v687 = vunpack.c.l.b16 %v475
      %v688 = vunpack.c.l.b16 %v476
      %v689 = vunpack.c.l.b16 %v477
      %v690 = vunpack.c.l.b16 %v478
      %v691 = vunpack.c.l.b16 %v479
      %v692 = vunpack.c.l.b16 %v480
      %v693 = vunpack.c.l.b16 %v481
      %v694 = vunpack.c.l.b16 %v482
      %v695 = vunpack.c.l.b16 %v483
      %v696 = vunpack.c.l.b16 %v484
      %v697 = vunpack.c.l.b16 %v485
      %v698 = vunpack.c.l.b16 %v486
      %v699 = vunpack.c.l.b16 %v487
      %v700 = vunpack.c.l.b16 %v488
      %v701 = vunpack.c.l.b16 %v489
      %v702 = vunpack.c.l.b16 %v490
      %v703 = vunpack.c.l.b16 %v491
      %v704 = vunpack.c.l.b16 %v492
      %v705 = vunpack.c.l.b16 %v493
      %v706 = vunpack.c.l.b16 %v494
      %v707 = vunpack.c.l.b16 %v495
      %v708 = vunpack.c.l.b16 %v496
      %v709 = vunpack.c.l.b16 %v497
      %v710 = vunpack.c.l.b16 %v498
      %v711 = vunpack.c.l.b16 %v499
      %v712 = vunpack.c.l.b16 %v500
      %v713 = vunpack.c.l.b16 %v501
      %v714 = vunpack.c.l.b16 %v502
      %v715 = vunpack.c.l.b16 %v503
      %v716 = vunpack.c.l.b16 %v504
      %v717 = vunpack.c.l.b16 %v505
      %v718 = vunpack.c.l.b16 %v506
      %v719 = vunpack.c.l.b16 %v507
      %v720 = vunpack.c.l.b16 %v508
      %v721 = vunpack.c.l.b16 %v509
      %v722 = vunpack.c.l.b16 %v510
      %v723 = vunpack.c.l.b16 %v511
      %v724 = vunpack.c.l.b16 %v512
      %v725 = vunpack.c.l.b16 %v513
      %v726 = vunpack.c.l.b16 %v514
      %v727 = vunpack.c.l.b16 %v515
      %v728 = vunpack.c.l.b16 %v516
      %v729 = vunpack.c.l.b16 %v517
      %v730 = vunpack.c.l.b16 %v518
      %v731 = vunpack.c.l.b16 %v519
      %v732 = vunpack.c.l.b16 %v520
      %v733 = vunpack.c.l.b16 %v521
      %v734 = vunpack.c.l.b16 %v522
      %v735 = vunpack.c.l.b16 %v523
      %v736 = vunpack.c.l.b16 %v524
      %v737 = vunpack.c.l.b16 %v525
      %v738 = vunpack.c.l.b16 %v526
      %v739 = vunpack.c.l.b16 %v527
      %v740 = vunpack.c.l.b16 %v528
      %v741 = vunpack.c.l.b16 %v529
      %v742 = vunpack.c.l.b16 %v530
      %v743 = vunpack.c.l.b16 %v531
      %v744 = vunpack.c.l.b16 %v532
      %v745 = vunpack.c.l.b16 %v533
      %v746 = vunpack.c.l.b16 %v534
      %v747 = vunpack.c.l.b16 %v535
      %v748 = vunpack.c.l.b16 %v536
      %v749 = vunpack.c.l.b16 %v537
      %v750 = vunpack.c.l.b16 %v538
      %v751 = vunpack.c.l.b16 %v539
      %v752 = vunpack.c.l.b16 %v540
      %v753 = vunpack.c.l.b16 %v541
      %v754 = vunpack.c.l.b16 %v542
      %v755 = vunpack.c.l.b16 %v543
      %v756 = vunpack.c.l.b16 %v544
      %v757 = vunpack.c.l.b16 %v545
      %v758 = vunpack.c.l.b16 %v546
      %v759 = vunpack.c.l.b16 %v547
      %v760 = vunpack.c.l.b16 %v548
      %v761 = vunpack.c.l.b16 %v549
      %v762 = vunpack.c.l.b16 %v550
      %v763 = vunpack.c.l.b16 %v551
      %v764 = vunpack.c.l.b16 %v552
      %v765 = vunpack.c.l.b16 %v553
      %v766 = vunpack.c.l.b16 %v554
      %v767 = vunpack.c.l.b16 %v555
      %v768 = vunpack.c.l.b16 %v556
      %v769 = vunpack.c.l.b16 %v557
      %v770 = vpack.c.b16 %v673, %v672
      %v771 = vpack.c.b16 %v675, %v674
      %v772 = vpack.c.b16 %v677, %v676
      %v773 = vpack.c.b16 %v679, %v678
      %v774 = vpack.c.b16 %v681, %v680
      %v775 = vpack.c.b16 %v683, %v682
      %v776 = vpack.c.b16 %v685, %v684
      %v777 = vpack.c.b16 %v687, %v686
      %v778 = vpack.c.b16 %v689, %v688
      %v779 = vpack.c.b16 %v691, %v690
      %v780 = vpack.c.b16 %v693, %v692
      %v781 = vpack.c.b16 %v695, %v694
      %v782 = vpack.c.b16 %v697, %v696
      %v783 = vpack.c.b16 %v699, %v698
      %v784 = vpack.c.b16 %v701, %v700
      %v785 = vpack.c.b16 %v703, %v702
      %v786 = vpack.c.b16 %v705, %v704
      %v787 = vpack.c.b16 %v707, %v706
      %v788 = vpack.c.b16 %v709, %v708
      %v789 = vpack.c.b16 %v711, %v710
      %v790 = vpack.c.b16 %v713, %v712
      %v791 = vpack.c.b16 %v715, %v714
      %v792 = vpack.c.b16 %v717, %v716
      %v793 = vpack.c.b16 %v719, %v718
      %v794 = vpack.c.b16 %v721, %v720
      %v795 = vpack.c.b16 %v723, %v722
      %v796 = vpack.c.b16 %v725, %v724
      %v797 = vpack.c.b16 %v727, %v726
      %v798 = vpack.c.b16 %v729, %v728
      %v799 = vpack.c.b16 %v731, %v730
      %v800 = vpack.c.b16 %v733, %v732
      %v801 = vpack.c.b16 %v735, %v734
      %v802 = vpack.c.b16 %v737, %v736
      %v803 = vpack.c.b16 %v739, %v738
      %v804 = vpack.c.b16 %v741, %v740
      %v805 = vpack.c.b16 %v743, %v742
      %v806 = vpack.c.b16 %v745, %v744
      %v807 = vpack.c.b16 %v747, %v746
      %v808 = vpack.c.b16 %v749, %v748
      %v809 = vpack.c.b16 %v751, %v750
      %v810 = vpack.c.b16 %v753, %v752
      %v811 = vpack.c.b16 %v755, %v754
      %v812 = vpack.c.b16 %v757, %v756
      %v813 = vpack.c.b16 %v759, %v758
      %v814 = vpack.c.b16 %v761, %v760
      %v815 = vpack.c.b16 %v763, %v762
      %v816 = vpack.c.b16 %v765, %v764
      %v817 = vpack.c.b16 %v767, %v766
      %v818 = vpack.c.b16 %v769, %v768
      %v884 = vunpack.c.l.b16 %v558
      %v885 = vunpack.c.l.b16 %v559
      %v886 = vunpack.c.l.b16 %v560
      %v887 = vunpack.c.l.b16 %v561
      %v888 = vunpack.c.l.b16 %v562
      %v889 = vunpack.c.l.b16 %v563
      %v890 = vunpack.c.l.b16 %v564
      %v891 = vunpack.c.l.b16 %v565
      %v892 = vunpack.c.l.b16 %v566
      %v893 = vunpack.c.l.b16 %v567
      %v894 = vunpack.c.l.b16 %v568
      %v895 = vunpack.c.l.b16 %v569
      %v896 = vunpack.c.l.b16 %v570
      %v897 = vunpack.c.l.b16 %v571
      %v898 = vunpack.c.l.b16 %v572
      %v899 = vunpack.c.l.b16 %v573
      %v900 = vpack.c.b16 %v885, %v884
      %v901 = vpack.c.b16 %v887, %v886
      %v902 = vpack.c.b16 %v889, %v888
      %v903 = vpack.c.b16 %v891, %v890
      %v904 = vpack.c.b16 %v893, %v892
      %v905 = vpack.c.b16 %v895, %v894
      %v906 = vpack.c.b16 %v897, %v896
      %v907 = vpack.c.b16 %v899, %v898
      %916 = vmatprep.subr.bf16.mxu0 0
      %917 = vmatpush1.bf16.msra.mxu0 %v900
      %918 = vmatprep.subr.bf16.mxu0 0
      %919 = vmatpush1.bf16.msra.mxu0 %v901
      %920 = vmatprep.subr.bf16.mxu0 0
      %921 = vmatpush1.bf16.msra.mxu0 %v902
      %922 = vmatprep.subr.bf16.mxu0 0
      %923 = vmatpush1.bf16.msra.mxu0 %v903
      %924 = vmatprep.subr.bf16.mxu0 0
      %925 = vmatpush1.bf16.msra.mxu0 %v904
      %926 = vmatprep.subr.bf16.mxu0 0
      %927 = vmatpush1.bf16.msra.mxu0 %v905
      %928 = vmatprep.subr.bf16.mxu0 0
      %929 = vmatpush1.bf16.msra.mxu0 %v906
      %930 = vmatprep.subr.bf16.mxu0 0
      %931 = vmatpush1.bf16.msra.mxu0 %v907
      %932 = vmatprep.subr.bf16.mxu0 0
      %933 = vmatpush1.bf16.msra.mxu0 0
      %934 = vmatprep.subr.bf16.mxu0 0
      %935 = vmatpush1.bf16.msra.mxu0 0
      %936 = vmatprep.subr.bf16.mxu0 0
      %937 = vmatpush1.bf16.msra.mxu0 0
      %938 = vmatprep.subr.bf16.mxu0 0
      %939 = vmatpush1.bf16.msra.mxu0 0
      %940 = vmatprep.subr.bf16.mxu0 0
      %941 = vmatpush1.bf16.msra.mxu0 0
      %942 = vmatprep.subr.bf16.mxu0 0
      %943 = vmatpush1.bf16.msra.mxu0 0
      %944 = vmatprep.subr.bf16.mxu0 0
      %945 = vmatpush1.bf16.msra.mxu0 0
      %946 = vmatprep.subr.bf16.mxu0 0
      %947 = vmatpush1.bf16.msra.mxu0 0
      %948 = vmatprep.mubr.bf16.mxu0 0
      %949 = vmatmul.mubr.bf16.gmra.mrb[0].mxu0 %v770
      %v950 = vpop.f32.mrb[0].mxu0
      %v951 = vadd.f32 0.0, %v950
      %v952 = vpop.f32.mrb[0].mxu0
      %v953 = vpop.f32.mrb[0].mxu0
      %v954 = vadd.f32 0.0, %v953
      %v955 = vpop.f32.mrb[0].mxu0
      %956 = vmatprep.mubr.bf16.mxu0 0
      %957 = vmatmul.mubr.bf16.gmra.mrb[0].mxu0 %v771
      %v958 = vpop.f32.mrb[0].mxu0
      %v959 = vadd.f32 0.0, %v958
      %v960 = vpop.f32.mrb[0].mxu0
      %v961 = vpop.f32.mrb[0].mxu0
      %v962 = vadd.f32 0.0, %v961
      %v963 = vpop.f32.mrb[0].mxu0
      %964 = vmatprep.mubr.bf16.mxu0 0
      %965 = vmatmul.mubr.bf16.gmra.mrb[0].mxu0 %v772
      %v966 = vpop.f32.mrb[0].mxu0
      %v967 = vadd.f32 0.0, %v966
      %v968 = vpop.f32.mrb[0].mxu0
      %v969 = vpop.f32.mrb[0].mxu0
      %v970 = vadd.f32 0.0, %v969
      %v971 = vpop.f32.mrb[0].mxu0
      %972 = vmatprep.mubr.bf16.mxu0 0
      %973 = vmatmul.mubr.bf16.gmra.mrb[0].mxu0 %v773
      %v974 = vpop.f32.mrb[0].mxu0
      %v975 = vadd.f32 0.0, %v974
      %v976 = vpop.f32.mrb[0].mxu0
      %v977 = vpop.f32.mrb[0].mxu0
      %v978 = vadd.f32 0.0, %v977
      %v979 = vpop.f32.mrb[0].mxu0
      %980 = vmatprep.mubr.bf16.mxu0 0
      %981 = vmatmul.mubr.bf16.gmra.mrb[0].mxu0 %v774
      %v982 = vpop.f32.mrb[0].mxu0
      %v983 = vadd.f32 0.0, %v982
      %v984 = vpop.f32.mrb[0].mxu0
      %v985 = vpop.f32.mrb[0].mxu0
      %v986 = vadd.f32 0.0, %v985
      %v987 = vpop.f32.mrb[0].mxu0
      %988 = vmatprep.mubr.bf16.mxu0 0
      %989 = vmatmul.mubr.bf16.gmra.mrb[0].mxu0 %v775
      %v990 = vpop.f32.mrb[0].mxu0
      %v991 = vadd.f32 0.0, %v990
      %v992 = vpop.f32.mrb[0].mxu0
      %v993 = vpop.f32.mrb[0].mxu0
      %v994 = vadd.f32 0.0, %v993
      %v995 = vpop.f32.mrb[0].mxu0
      %996 = vmatprep.mubr.bf16.mxu0 0
      %997 = vmatmul.mubr.bf16.gmra.mrb[0].mxu0 %v776
      %v998 = vpop.f32.mrb[0].mxu0
      %v999 = vadd.f32 0.0, %v998
      %v1000 = vpop.f32.mrb[0].mxu0
      %v1001 = vpop.f32.mrb[0].mxu0
      %v1002 = vadd.f32 0.0, %v1001
      %v1003 = vpop.f32.mrb[0].mxu0
      %1004 = vmatprep.mubr.bf16.mxu0 0
      %1005 = vmatmul.mubr.bf16.gmra.mrb[0].mxu0 %v777
      %v1006 = vpop.f32.mrb[0].mxu0
      %v1007 = vadd.f32 0.0, %v1006
      %v1008 = vpop.f32.mrb[0].mxu0
      %v1009 = vpop.f32.mrb[0].mxu0
      %v1010 = vadd.f32 0.0, %v1009
      %v1011 = vpop.f32.mrb[0].mxu0
      %1012 = vmatprep.mubr.bf16.mxu0 0
      %1013 = vmatmul.mubr.bf16.gmra.mrb[0].mxu0 %v778
      %v1014 = vpop.f32.mrb[0].mxu0
      %v1015 = vadd.f32 0.0, %v1014
      %v1016 = vpop.f32.mrb[0].mxu0
      %v1017 = vpop.f32.mrb[0].mxu0
      %v1018 = vadd.f32 0.0, %v1017
      %v1019 = vpop.f32.mrb[0].mxu0
      %1020 = vmatprep.mubr.bf16.mxu0 0
      %1021 = vmatmul.mubr.bf16.gmra.mrb[0].mxu0 %v779
      %v1022 = vpop.f32.mrb[0].mxu0
      %v1023 = vadd.f32 0.0, %v1022
      %v1024 = vpop.f32.mrb[0].mxu0
      %v1025 = vpop.f32.mrb[0].mxu0
      %v1026 = vadd.f32 0.0, %v1025
      %v1027 = vpop.f32.mrb[0].mxu0
      %1028 = vmatprep.mubr.bf16.mxu0 0
      %1029 = vmatmul.mubr.bf16.gmra.mrb[0].mxu0 %v780
      %v1030 = vpop.f32.mrb[0].mxu0
      %v1031 = vadd.f32 0.0, %v1030
      %v1032 = vpop.f32.mrb[0].mxu0
      %v1033 = vpop.f32.mrb[0].mxu0
      %v1034 = vadd.f32 0.0, %v1033
      %v1035 = vpop.f32.mrb[0].mxu0
      %1036 = vmatprep.mubr.bf16.mxu0 0
      %1037 = vmatmul.mubr.bf16.gmra.mrb[0].mxu0 %v781
      %v1038 = vpop.f32.mrb[0].mxu0
      %v1039 = vadd.f32 0.0, %v1038
      %v1040 = vpop.f32.mrb[0].mxu0
      %v1041 = vpop.f32.mrb[0].mxu0
      %v1042 = vadd.f32 0.0, %v1041
      %v1043 = vpop.f32.mrb[0].mxu0
      %1044 = vmatprep.mubr.bf16.mxu0 0
      %1045 = vmatmul.mubr.bf16.gmra.mrb[0].mxu0 %v782
      %v1046 = vpop.f32.mrb[0].mxu0
      %v1047 = vadd.f32 0.0, %v1046
      %v1048 = vpop.f32.mrb[0].mxu0
      %v1049 = vpop.f32.mrb[0].mxu0
      %v1050 = vadd.f32 0.0, %v1049
      %v1051 = vpop.f32.mrb[0].mxu0
      %1052 = vmatprep.mubr.bf16.mxu0 0
      %1053 = vmatmul.mubr.bf16.gmra.mrb[0].mxu0 %v783
      %v1054 = vpop.f32.mrb[0].mxu0
      %v1055 = vadd.f32 0.0, %v1054
      %v1056 = vpop.f32.mrb[0].mxu0
      %v1057 = vpop.f32.mrb[0].mxu0
      %v1058 = vadd.f32 0.0, %v1057
      %v1059 = vpop.f32.mrb[0].mxu0
      %1060 = vmatprep.mubr.bf16.mxu0 0
      %1061 = vmatmul.mubr.bf16.gmra.mrb[0].mxu0 %v784
      %v1062 = vpop.f32.mrb[0].mxu0
      %v1063 = vadd.f32 0.0, %v1062
      %v1064 = vpop.f32.mrb[0].mxu0
      %v1065 = vpop.f32.mrb[0].mxu0
      %v1066 = vadd.f32 0.0, %v1065
      %v1067 = vpop.f32.mrb[0].mxu0
      %1068 = vmatprep.mubr.bf16.mxu0 0
      %1069 = vmatmul.mubr.bf16.gmra.mrb[0].mxu0 %v785
      %v1070 = vpop.f32.mrb[0].mxu0
      %v1071 = vadd.f32 0.0, %v1070
      %v1072 = vpop.f32.mrb[0].mxu0
      %v1073 = vpop.f32.mrb[0].mxu0
      %v1074 = vadd.f32 0.0, %v1073
      %v1075 = vpop.f32.mrb[0].mxu0
      %1076 = vmatprep.mubr.bf16.mxu0 0
      %1077 = vmatmul.mubr.bf16.gmra.mrb[0].mxu0 %v786
      %v1078 = vpop.f32.mrb[0].mxu0
      %v1079 = vadd.f32 0.0, %v1078
      %v1080 = vpop.f32.mrb[0].mxu0
      %v1081 = vpop.f32.mrb[0].mxu0
      %v1082 = vadd.f32 0.0, %v1081
      %v1083 = vpop.f32.mrb[0].mxu0
      %1084 = vmatprep.mubr.bf16.mxu0 0
      %1085 = vmatmul.mubr.bf16.gmra.mrb[0].mxu0 %v787
      %v1086 = vpop.f32.mrb[0].mxu0
      %v1087 = vadd.f32 0.0, %v1086
      %v1088 = vpop.f32.mrb[0].mxu0
      %v1089 = vpop.f32.mrb[0].mxu0
      %v1090 = vadd.f32 0.0, %v1089
      %v1091 = vpop.f32.mrb[0].mxu0
      %1092 = vmatprep.mubr.bf16.mxu0 0
      %1093 = vmatmul.mubr.bf16.gmra.mrb[0].mxu0 %v788
      %v1094 = vpop.f32.mrb[0].mxu0
      %v1095 = vadd.f32 0.0, %v1094
      %v1096 = vpop.f32.mrb[0].mxu0
      %v1097 = vpop.f32.mrb[0].mxu0
      %v1098 = vadd.f32 0.0, %v1097
      %v1099 = vpop.f32.mrb[0].mxu0
      %1100 = vmatprep.mubr.bf16.mxu0 0
      %1101 = vmatmul.mubr.bf16.gmra.mrb[0].mxu0 %v789
      %v1102 = vpop.f32.mrb[0].mxu0
      %v1103 = vadd.f32 0.0, %v1102
      %v1104 = vpop.f32.mrb[0].mxu0
      %v1105 = vpop.f32.mrb[0].mxu0
      %v1106 = vadd.f32 0.0, %v1105
      %v1107 = vpop.f32.mrb[0].mxu0
      %1108 = vmatprep.mubr.bf16.mxu0 0
      %1109 = vmatmul.mubr.bf16.gmra.mrb[0].mxu0 %v790
      %v1110 = vpop.f32.mrb[0].mxu0
      %v1111 = vadd.f32 0.0, %v1110
      %v1112 = vpop.f32.mrb[0].mxu0
      %v1113 = vpop.f32.mrb[0].mxu0
      %v1114 = vadd.f32 0.0, %v1113
      %v1115 = vpop.f32.mrb[0].mxu0
      %1116 = vmatprep.mubr.bf16.mxu0 0
      %1117 = vmatmul.mubr.bf16.gmra.mrb[0].mxu0 %v791
      %v1118 = vpop.f32.mrb[0].mxu0
      %v1119 = vadd.f32 0.0, %v1118
      %v1120 = vpop.f32.mrb[0].mxu0
      %v1121 = vpop.f32.mrb[0].mxu0
      %v1122 = vadd.f32 0.0, %v1121
      %v1123 = vpop.f32.mrb[0].mxu0
      %1124 = vmatprep.mubr.bf16.mxu0 0
      %1125 = vmatmul.mubr.bf16.gmra.mrb[0].mxu0 %v792
      %v1126 = vpop.f32.mrb[0].mxu0
      %v1127 = vadd.f32 0.0, %v1126
      %v1128 = vpop.f32.mrb[0].mxu0
      %v1129 = vpop.f32.mrb[0].mxu0
      %v1130 = vadd.f32 0.0, %v1129
      %v1131 = vpop.f32.mrb[0].mxu0
      %1132 = vmatprep.mubr.bf16.mxu0 0
      %1133 = vmatmul.mubr.bf16.gmra.mrb[0].mxu0 %v793
      %v1134 = vpop.f32.mrb[0].mxu0
      %v1135 = vadd.f32 0.0, %v1134
      %v1136 = vpop.f32.mrb[0].mxu0
      %v1137 = vpop.f32.mrb[0].mxu0
      %v1138 = vadd.f32 0.0, %v1137
      %v1139 = vpop.f32.mrb[0].mxu0
      %1140 = vmatprep.mubr.bf16.mxu0 0
      %1141 = vmatmul.mubr.bf16.gmra.mrb[0].mxu0 %v794
      %v1142 = vpop.f32.mrb[0].mxu0
      %v1143 = vadd.f32 0.0, %v1142
      %v1144 = vpop.f32.mrb[0].mxu0
      %v1145 = vpop.f32.mrb[0].mxu0
      %v1146 = vadd.f32 0.0, %v1145
      %v1147 = vpop.f32.mrb[0].mxu0
      %1148 = vmatprep.mubr.bf16.mxu0 0
      %1149 = vmatmul.mubr.bf16.gmra.mrb[0].mxu0 %v795
      %v1150 = vpop.f32.mrb[0].mxu0
      %v1151 = vadd.f32 0.0, %v1150
      %v1152 = vpop.f32.mrb[0].mxu0
      %v1153 = vpop.f32.mrb[0].mxu0
      %v1154 = vadd.f32 0.0, %v1153
      %v1155 = vpop.f32.mrb[0].mxu0
      %1156 = vmatprep.mubr.bf16.mxu0 0
      %1157 = vmatmul.mubr.bf16.gmra.mrb[0].mxu0 %v796
      %v1158 = vpop.f32.mrb[0].mxu0
      %v1159 = vadd.f32 0.0, %v1158
      %v1160 = vpop.f32.mrb[0].mxu0
      %v1161 = vpop.f32.mrb[0].mxu0
      %v1162 = vadd.f32 0.0, %v1161
      %v1163 = vpop.f32.mrb[0].mxu0
      %1164 = vmatprep.mubr.bf16.mxu0 0
      %1165 = vmatmul.mubr.bf16.gmra.mrb[0].mxu0 %v797
      %v1166 = vpop.f32.mrb[0].mxu0
      %v1167 = vadd.f32 0.0, %v1166
      %v1168 = vpop.f32.mrb[0].mxu0
      %v1169 = vpop.f32.mrb[0].mxu0
      %v1170 = vadd.f32 0.0, %v1169
      %v1171 = vpop.f32.mrb[0].mxu0
      %1172 = vmatprep.mubr.bf16.mxu0 0
      %1173 = vmatmul.mubr.bf16.gmra.mrb[0].mxu0 %v798
      %v1174 = vpop.f32.mrb[0].mxu0
      %v1175 = vadd.f32 0.0, %v1174
      %v1176 = vpop.f32.mrb[0].mxu0
      %v1177 = vpop.f32.mrb[0].mxu0
      %v1178 = vadd.f32 0.0, %v1177
      %v1179 = vpop.f32.mrb[0].mxu0
      %1180 = vmatprep.mubr.bf16.mxu0 0
      %1181 = vmatmul.mubr.bf16.gmra.mrb[0].mxu0 %v799
      %v1182 = vpop.f32.mrb[0].mxu0
      %v1183 = vadd.f32 0.0, %v1182
      %v1184 = vpop.f32.mrb[0].mxu0
      %v1185 = vpop.f32.mrb[0].mxu0
      %v1186 = vadd.f32 0.0, %v1185
      %v1187 = vpop.f32.mrb[0].mxu0
      %1188 = vmatprep.mubr.bf16.mxu0 0
      %1189 = vmatmul.mubr.bf16.gmra.mrb[0].mxu0 %v800
      %v1190 = vpop.f32.mrb[0].mxu0
      %v1191 = vadd.f32 0.0, %v1190
      %v1192 = vpop.f32.mrb[0].mxu0
      %v1193 = vpop.f32.mrb[0].mxu0
      %v1194 = vadd.f32 0.0, %v1193
      %v1195 = vpop.f32.mrb[0].mxu0
      %1196 = vmatprep.mubr.bf16.mxu0 0
      %1197 = vmatmul.mubr.bf16.gmra.mrb[0].mxu0 %v801
      %v1198 = vpop.f32.mrb[0].mxu0
      %v1199 = vadd.f32 0.0, %v1198
      %v1200 = vpop.f32.mrb[0].mxu0
      %v1201 = vpop.f32.mrb[0].mxu0
      %v1202 = vadd.f32 0.0, %v1201
      %v1203 = vpop.f32.mrb[0].mxu0
      %1204 = vmatprep.mubr.bf16.mxu0 0
      %1205 = vmatmul.mubr.bf16.gmra.mrb[0].mxu0 %v802
      %v1206 = vpop.f32.mrb[0].mxu0
      %v1207 = vadd.f32 0.0, %v1206
      %v1208 = vpop.f32.mrb[0].mxu0
      %v1209 = vpop.f32.mrb[0].mxu0
      %v1210 = vadd.f32 0.0, %v1209
      %v1211 = vpop.f32.mrb[0].mxu0
      %1212 = vmatprep.mubr.bf16.mxu0 0
      %1213 = vmatmul.mubr.bf16.gmra.mrb[0].mxu0 %v803
      %v1214 = vpop.f32.mrb[0].mxu0
      %v1215 = vadd.f32 0.0, %v1214
      %v1216 = vpop.f32.mrb[0].mxu0
      %v1217 = vpop.f32.mrb[0].mxu0
      %v1218 = vadd.f32 0.0, %v1217
      %v1219 = vpop.f32.mrb[0].mxu0
      %1220 = vmatprep.mubr.bf16.mxu0 0
      %1221 = vmatmul.mubr.bf16.gmra.mrb[0].mxu0 %v804
      %v1222 = vpop.f32.mrb[0].mxu0
      %v1223 = vadd.f32 0.0, %v1222
      %v1224 = vpop.f32.mrb[0].mxu0
      %v1225 = vpop.f32.mrb[0].mxu0
      %v1226 = vadd.f32 0.0, %v1225
      %v1227 = vpop.f32.mrb[0].mxu0
      %1228 = vmatprep.mubr.bf16.mxu0 0
      %1229 = vmatmul.mubr.bf16.gmra.mrb[0].mxu0 %v805
      %v1230 = vpop.f32.mrb[0].mxu0
      %v1231 = vadd.f32 0.0, %v1230
      %v1232 = vpop.f32.mrb[0].mxu0
      %v1233 = vpop.f32.mrb[0].mxu0
      %v1234 = vadd.f32 0.0, %v1233
      %v1235 = vpop.f32.mrb[0].mxu0
      %1236 = vmatprep.mubr.bf16.mxu0 0
      %1237 = vmatmul.mubr.bf16.gmra.mrb[0].mxu0 %v806
      %v1238 = vpop.f32.mrb[0].mxu0
      %v1239 = vadd.f32 0.0, %v1238
      %v1240 = vpop.f32.mrb[0].mxu0
      %v1241 = vpop.f32.mrb[0].mxu0
      %v1242 = vadd.f32 0.0, %v1241
      %v1243 = vpop.f32.mrb[0].mxu0
      %1244 = vmatprep.mubr.bf16.mxu0 0
      %1245 = vmatmul.mubr.bf16.gmra.mrb[0].mxu0 %v807
      %v1246 = vpop.f32.mrb[0].mxu0
      %v1247 = vadd.f32 0.0, %v1246
      %v1248 = vpop.f32.mrb[0].mxu0
      %v1249 = vpop.f32.mrb[0].mxu0
      %v1250 = vadd.f32 0.0, %v1249
      %v1251 = vpop.f32.mrb[0].mxu0
      %1252 = vmatprep.mubr.bf16.mxu0 0
      %1253 = vmatmul.mubr.bf16.gmra.mrb[0].mxu0 %v808
      %v1254 = vpop.f32.mrb[0].mxu0
      %v1255 = vadd.f32 0.0, %v1254
      %v1256 = vpop.f32.mrb[0].mxu0
      %v1257 = vpop.f32.mrb[0].mxu0
      %v1258 = vadd.f32 0.0, %v1257
      %v1259 = vpop.f32.mrb[0].mxu0
      %1260 = vmatprep.mubr.bf16.mxu0 0
      %1261 = vmatmul.mubr.bf16.gmra.mrb[0].mxu0 %v809
      %v1262 = vpop.f32.mrb[0].mxu0
      %v1263 = vadd.f32 0.0, %v1262
      %v1264 = vpop.f32.mrb[0].mxu0
      %v1265 = vpop.f32.mrb[0].mxu0
      %v1266 = vadd.f32 0.0, %v1265
      %v1267 = vpop.f32.mrb[0].mxu0
      %1268 = vmatprep.mubr.bf16.mxu0 0
      %1269 = vmatmul.mubr.bf16.gmra.mrb[0].mxu0 %v810
      %v1270 = vpop.f32.mrb[0].mxu0
      %v1271 = vadd.f32 0.0, %v1270
      %v1272 = vpop.f32.mrb[0].mxu0
      %v1273 = vpop.f32.mrb[0].mxu0
      %v1274 = vadd.f32 0.0, %v1273
      %v1275 = vpop.f32.mrb[0].mxu0
      %1276 = vmatprep.mubr.bf16.mxu0 0
      %1277 = vmatmul.mubr.bf16.gmra.mrb[0].mxu0 %v811
      %v1278 = vpop.f32.mrb[0].mxu0
      %v1279 = vadd.f32 0.0, %v1278
      %v1280 = vpop.f32.mrb[0].mxu0
      %v1281 = vpop.f32.mrb[0].mxu0
      %v1282 = vadd.f32 0.0, %v1281
      %v1283 = vpop.f32.mrb[0].mxu0
      %1284 = vmatprep.mubr.bf16.mxu0 0
      %1285 = vmatmul.mubr.bf16.gmra.mrb[0].mxu0 %v812
      %v1286 = vpop.f32.mrb[0].mxu0
      %v1287 = vadd.f32 0.0, %v1286
      %v1288 = vpop.f32.mrb[0].mxu0
      %v1289 = vpop.f32.mrb[0].mxu0
      %v1290 = vadd.f32 0.0, %v1289
      %v1291 = vpop.f32.mrb[0].mxu0
      %1292 = vmatprep.mubr.bf16.mxu0 0
      %1293 = vmatmul.mubr.bf16.gmra.mrb[0].mxu0 %v813
      %v1294 = vpop.f32.mrb[0].mxu0
      %v1295 = vadd.f32 0.0, %v1294
      %v1296 = vpop.f32.mrb[0].mxu0
      %v1297 = vpop.f32.mrb[0].mxu0
      %v1298 = vadd.f32 0.0, %v1297
      %v1299 = vpop.f32.mrb[0].mxu0
      %1300 = vmatprep.mubr.bf16.mxu0 0
      %1301 = vmatmul.mubr.bf16.gmra.mrb[0].mxu0 %v814
      %v1302 = vpop.f32.mrb[0].mxu0
      %v1303 = vadd.f32 0.0, %v1302
      %v1304 = vpop.f32.mrb[0].mxu0
      %v1305 = vpop.f32.mrb[0].mxu0
      %v1306 = vadd.f32 0.0, %v1305
      %v1307 = vpop.f32.mrb[0].mxu0
      %1308 = vmatprep.mubr.bf16.mxu0 0
      %1309 = vmatmul.mubr.bf16.gmra.mrb[0].mxu0 %v815
      %v1310 = vpop.f32.mrb[0].mxu0
      %v1311 = vadd.f32 0.0, %v1310
      %v1312 = vpop.f32.mrb[0].mxu0
      %v1313 = vpop.f32.mrb[0].mxu0
      %v1314 = vadd.f32 0.0, %v1313
      %v1315 = vpop.f32.mrb[0].mxu0
      %1316 = vmatprep.mubr.bf16.mxu0 0
      %1317 = vmatmul.mubr.bf16.gmra.mrb[0].mxu0 %v816
      %v1318 = vpop.f32.mrb[0].mxu0
      %v1319 = vadd.f32 0.0, %v1318
      %v1320 = vpop.f32.mrb[0].mxu0
      %v1321 = vpop.f32.mrb[0].mxu0
      %v1322 = vadd.f32 0.0, %v1321
      %v1323 = vpop.f32.mrb[0].mxu0
      %1324 = vmatprep.mubr.bf16.mxu0 0
      %1325 = vmatmul.mubr.bf16.gmra.mrb[0].mxu0 %v817
      %v1326 = vpop.f32.mrb[0].mxu0
      %v1327 = vadd.f32 0.0, %v1326
      %v1328 = vpop.f32.mrb[0].mxu0
      %v1329 = vpop.f32.mrb[0].mxu0
      %v1330 = vadd.f32 0.0, %v1329
      %v1331 = vpop.f32.mrb[0].mxu0
      %1332 = vmatprep.mubr.bf16.mxu0 0
      %1333 = vmatmul.mubr.bf16.gmra.mrb[0].mxu0 %v818
      %v1334 = vpop.f32.mrb[0].mxu0
      %v1335 = vadd.f32 0.0, %v1334
      %v1336 = vpop.f32.mrb[0].mxu0
      %v1337 = vpop.f32.mrb[0].mxu0
      %v1338 = vadd.f32 0.0, %v1337
      %v1339 = vpop.f32.mrb[0].mxu0
      %1340 = vdwg.mxu0
      %v1341 = vadd.f32 %v362, %v951
      %v1342 = vadd.f32 %v363, %v954
      %v1343 = vadd.f32 %v364, %v959
      %v1344 = vadd.f32 %v365, %v962
      %v1345 = vadd.f32 %v366, %v967
      %v1346 = vadd.f32 %v367, %v970
      %v1347 = vadd.f32 %v368, %v975
      %v1348 = vadd.f32 %v369, %v978
      %v1349 = vadd.f32 %v370, %v983
      %v1350 = vadd.f32 %v371, %v986
      %v1351 = vadd.f32 %v372, %v991
      %v1352 = vadd.f32 %v373, %v994
      %v1353 = vadd.f32 %v374, %v999
      %v1354 = vadd.f32 %v375, %v1002
      %v1355 = vadd.f32 %v376, %v1007
      %v1356 = vadd.f32 %v377, %v1010
      %v1357 = vadd.f32 %v378, %v1015
      %v1358 = vadd.f32 %v379, %v1018
      %v1359 = vadd.f32 %v380, %v1023
      %v1360 = vadd.f32 %v381, %v1026
      %v1361 = vadd.f32 %v382, %v1031
      %v1362 = vadd.f32 %v383, %v1034
      %v1363 = vadd.f32 %v384, %v1039
      %v1364 = vadd.f32 %v385, %v1042
      %v1365 = vadd.f32 %v386, %v1047
      %v1366 = vadd.f32 %v387, %v1050
      %v1367 = vadd.f32 %v388, %v1055
      %v1368 = vadd.f32 %v389, %v1058
      %v1369 = vadd.f32 %v390, %v1063
      %v1370 = vadd.f32 %v391, %v1066
      %v1371 = vadd.f32 %v392, %v1071
      %v1372 = vadd.f32 %v393, %v1074
      %v1373 = vadd.f32 %v394, %v1079
      %v1374 = vadd.f32 %v395, %v1082
      %v1375 = vadd.f32 %v396, %v1087
      %v1376 = vadd.f32 %v397, %v1090
      %v1377 = vadd.f32 %v398, %v1095
      %v1378 = vadd.f32 %v399, %v1098
      %v1379 = vadd.f32 %v400, %v1103
      %v1380 = vadd.f32 %v401, %v1106
      %v1381 = vadd.f32 %v402, %v1111
      %v1382 = vadd.f32 %v403, %v1114
      %v1383 = vadd.f32 %v404, %v1119
      %v1384 = vadd.f32 %v405, %v1122
      %v1385 = vadd.f32 %v406, %v1127
      %v1386 = vadd.f32 %v407, %v1130
      %v1387 = vadd.f32 %v408, %v1135
      %v1388 = vadd.f32 %v409, %v1138
      %v1389 = vadd.f32 %v410, %v1143
      %v1390 = vadd.f32 %v411, %v1146
      %v1391 = vadd.f32 %v412, %v1151
      %v1392 = vadd.f32 %v413, %v1154
      %v1393 = vadd.f32 %v414, %v1159
      %v1394 = vadd.f32 %v415, %v1162
      %v1395 = vadd.f32 %v416, %v1167
      %v1396 = vadd.f32 %v417, %v1170
      %v1397 = vadd.f32 %v418, %v1175
      %v1398 = vadd.f32 %v419, %v1178
      %v1399 = vadd.f32 %v420, %v1183
      %v1400 = vadd.f32 %v421, %v1186
      %v1401 = vadd.f32 %v422, %v1191
      %v1402 = vadd.f32 %v423, %v1194
      %v1403 = vadd.f32 %v424, %v1199
      %v1404 = vadd.f32 %v425, %v1202
      %v1405 = vadd.f32 %v426, %v1207
      %v1406 = vadd.f32 %v427, %v1210
      %v1407 = vadd.f32 %v428, %v1215
      %v1408 = vadd.f32 %v429, %v1218
      %v1409 = vadd.f32 %v430, %v1223
      %v1410 = vadd.f32 %v431, %v1226
      %v1411 = vadd.f32 %v432, %v1231
      %v1412 = vadd.f32 %v433, %v1234
      %v1413 = vadd.f32 %v434, %v1239
      %v1414 = vadd.f32 %v435, %v1242
      %v1415 = vadd.f32 %v436, %v1247
      %v1416 = vadd.f32 %v437, %v1250
      %v1417 = vadd.f32 %v438, %v1255
      %v1418 = vadd.f32 %v439, %v1258
      %v1419 = vadd.f32 %v440, %v1263
      %v1420 = vadd.f32 %v441, %v1266
      %v1421 = vadd.f32 %v442, %v1271
      %v1422 = vadd.f32 %v443, %v1274
      %v1423 = vadd.f32 %v444, %v1279
      %v1424 = vadd.f32 %v445, %v1282
      %v1425 = vadd.f32 %v446, %v1287
      %v1426 = vadd.f32 %v447, %v1290
      %v1427 = vadd.f32 %v448, %v1295
      %v1428 = vadd.f32 %v449, %v1298
      %v1429 = vadd.f32 %v450, %v1303
      %v1430 = vadd.f32 %v451, %v1306
      %v1431 = vadd.f32 %v452, %v1311
      %v1432 = vadd.f32 %v453, %v1314
      %v1433 = vadd.f32 %v454, %v1319
      %v1434 = vadd.f32 %v455, %v1322
      %v1435 = vadd.f32 %v456, %v1327
      %v1436 = vadd.f32 %v457, %v1330
      %v1437 = vadd.f32 %v458, %v1335
      %v1438 = vadd.f32 %v459, %v1338
      %1439 = vst [vmem:[#allocation2] sm:$0xff] %v1341
      %1440 = vst [vmem:[#allocation2 + $0x8] sm:$0xff] %v1342
      %1441 = vst [vmem:[#allocation2 + $0x10] sm:$0xff] %v1343
      %1442 = vst [vmem:[#allocation2 + $0x18] sm:$0xff] %v1344
      %1443 = vst [vmem:[#allocation2 + $0x20] sm:$0xff] %v1345
      %1444 = vst [vmem:[#allocation2 + $0x28] sm:$0xff] %v1346
      %1445 = vst [vmem:[#allocation2 + $0x30] sm:$0xff] %v1347
      %1446 = vst [vmem:[#allocation2 + $0x38] sm:$0xff] %v1348
      %1447 = vst [vmem:[#allocation2 + $0x40] sm:$0xff] %v1349
      %1448 = vst [vmem:[#allocation2 + $0x48] sm:$0xff] %v1350
      %1449 = vst [vmem:[#allocation2 + $0x50] sm:$0xff] %v1351
      %1450 = vst [vmem:[#allocation2 + $0x58] sm:$0xff] %v1352
      %1451 = vst [vmem:[#allocation2 + $0x60] sm:$0xff] %v1353
      %1452 = vst [vmem:[#allocation2 + $0x68] sm:$0xff] %v1354
      %1453 = vst [vmem:[#allocation2 + $0x70] sm:$0xff] %v1355
      %1454 = vst [vmem:[#allocation2 + $0x78] sm:$0xff] %v1356
      %1455 = vst [vmem:[#allocation2 + $0x80] sm:$0xff] %v1357
      %1456 = vst [vmem:[#allocation2 + $0x88] sm:$0xff] %v1358
      %1457 = vst [vmem:[#allocation2 + $0x90] sm:$0xff] %v1359
      %1458 = vst [vmem:[#allocation2 + $0x98] sm:$0xff] %v1360
      %1459 = vst [vmem:[#allocation2 + $0xa0] sm:$0xff] %v1361
      %1460 = vst [vmem:[#allocation2 + $0xa8] sm:$0xff] %v1362
      %1461 = vst [vmem:[#allocation2 + $0xb0] sm:$0xff] %v1363
      %1462 = vst [vmem:[#allocation2 + $0xb8] sm:$0xff] %v1364
      %1463 = vst [vmem:[#allocation2 + $0xc0] sm:$0xff] %v1365
      %1464 = vst [vmem:[#allocation2 + $0xc8] sm:$0xff] %v1366
      %1465 = vst [vmem:[#allocation2 + $0xd0] sm:$0xff] %v1367
      %1466 = vst [vmem:[#allocation2 + $0xd8] sm:$0xff] %v1368
      %1467 = vst [vmem:[#allocation2 + $0xe0] sm:$0xff] %v1369
      %1468 = vst [vmem:[#allocation2 + $0xe8] sm:$0xff] %v1370
      %1469 = vst [vmem:[#allocation2 + $0xf0] sm:$0xff] %v1371
      %1470 = vst [vmem:[#allocation2 + $0xf8] sm:$0xff] %v1372
      %1471 = vst [vmem:[#allocation2 + $0x100] sm:$0xff] %v1373
      %1472 = vst [vmem:[#allocation2 + $0x108] sm:$0xff] %v1374
      %1473 = vst [vmem:[#allocation2 + $0x110] sm:$0xff] %v1375
      %1474 = vst [vmem:[#allocation2 + $0x118] sm:$0xff] %v1376
      %1475 = vst [vmem:[#allocation2 + $0x120] sm:$0xff] %v1377
      %1476 = vst [vmem:[#allocation2 + $0x128] sm:$0xff] %v1378
      %1477 = vst [vmem:[#allocation2 + $0x130] sm:$0xff] %v1379
      %1478 = vst [vmem:[#allocation2 + $0x138] sm:$0xff] %v1380
      %1479 = vst [vmem:[#allocation2 + $0x140] sm:$0xff] %v1381
      %1480 = vst [vmem:[#allocation2 + $0x148] sm:$0xff] %v1382
      %1481 = vst [vmem:[#allocation2 + $0x150] sm:$0xff] %v1383
      %1482 = vst [vmem:[#allocation2 + $0x158] sm:$0xff] %v1384
      %1483 = vst [vmem:[#allocation2 + $0x160] sm:$0xff] %v1385
      %1484 = vst [vmem:[#allocation2 + $0x168] sm:$0xff] %v1386
      %1485 = vst [vmem:[#allocation2 + $0x170] sm:$0xff] %v1387
      %1486 = vst [vmem:[#allocation2 + $0x178] sm:$0xff] %v1388
      %1487 = vst [vmem:[#allocation2 + $0x180] sm:$0xff] %v1389
      %1488 = vst [vmem:[#allocation2 + $0x188] sm:$0xff] %v1390
      %1489 = vst [vmem:[#allocation2 + $0x190] sm:$0xff] %v1391
      %1490 = vst [vmem:[#allocation2 + $0x198] sm:$0xff] %v1392
      %1491 = vst [vmem:[#allocation2 + $0x1a0] sm:$0xff] %v1393
      %1492 = vst [vmem:[#allocation2 + $0x1a8] sm:$0xff] %v1394
      %1493 = vst [vmem:[#allocation2 + $0x1b0] sm:$0xff] %v1395
      %1494 = vst [vmem:[#allocation2 + $0x1b8] sm:$0xff] %v1396
      %1495 = vst [vmem:[#allocation2 + $0x1c0] sm:$0xff] %v1397
      %1496 = vst [vmem:[#allocation2 + $0x1c8] sm:$0xff] %v1398
      %1497 = vst [vmem:[#allocation2 + $0x1d0] sm:$0xff] %v1399
      %1498 = vst [vmem:[#allocation2 + $0x1d8] sm:$0xff] %v1400
      %1499 = vst [vmem:[#allocation2 + $0x1e0] sm:$0xff] %v1401
      %1500 = vst [vmem:[#allocation2 + $0x1e8] sm:$0xff] %v1402
      %1501 = vst [vmem:[#allocation2 + $0x1f0] sm:$0xff] %v1403
      %1502 = vst [vmem:[#allocation2 + $0x1f8] sm:$0xff] %v1404
      %1503 = vst [vmem:[#allocation2 + $0x200] sm:$0xff] %v1405
      %1504 = vst [vmem:[#allocation2 + $0x208] sm:$0xff] %v1406
      %1505 = vst [vmem:[#allocation2 + $0x210] sm:$0xff] %v1407
      %1506 = vst [vmem:[#allocation2 + $0x218] sm:$0xff] %v1408
      %1507 = vst [vmem:[#allocation2 + $0x220] sm:$0xff] %v1409
      %1508 = vst [vmem:[#allocation2 + $0x228] sm:$0xff] %v1410
      %1509 = vst [vmem:[#allocation2 + $0x230] sm:$0xff] %v1411
      %1510 = vst [vmem:[#allocation2 + $0x238] sm:$0xff] %v1412
      %1511 = vst [vmem:[#allocation2 + $0x240] sm:$0xff] %v1413
      %1512 = vst [vmem:[#allocation2 + $0x248] sm:$0xff] %v1414
      %1513 = vst [vmem:[#allocation2 + $0x250] sm:$0xff] %v1415
      %1514 = vst [vmem:[#allocation2 + $0x258] sm:$0xff] %v1416
      %1515 = vst [vmem:[#allocation2 + $0x260] sm:$0xff] %v1417
      %1516 = vst [vmem:[#allocation2 + $0x268] sm:$0xff] %v1418
      %1517 = vst [vmem:[#allocation2 + $0x270] sm:$0xff] %v1419
      %1518 = vst [vmem:[#allocation2 + $0x278] sm:$0xff] %v1420
      %1519 = vst [vmem:[#allocation2 + $0x280] sm:$0xff] %v1421
      %1520 = vst [vmem:[#allocation2 + $0x288] sm:$0xff] %v1422
      %1521 = vst [vmem:[#allocation2 + $0x290] sm:$0xff] %v1423
      %1522 = vst [vmem:[#allocation2 + $0x298] sm:$0xff] %v1424
      %1523 = vst [vmem:[#allocation2 + $0x2a0] sm:$0xff] %v1425
      %1524 = vst [vmem:[#allocation2 + $0x2a8] sm:$0xff] %v1426
      %1525 = vst [vmem:[#allocation2 + $0x2b0] sm:$0xff] %v1427
      %1526 = vst [vmem:[#allocation2 + $0x2b8] sm:$0xff] %v1428
      %1527 = vst [vmem:[#allocation2 + $0x2c0] sm:$0xff] %v1429
      %1528 = vst [vmem:[#allocation2 + $0x2c8] sm:$0xff] %v1430
      %1529 = vst [vmem:[#allocation2 + $0x2d0] sm:$0xff] %v1431
      %1530 = vst [vmem:[#allocation2 + $0x2d8] sm:$0xff] %v1432
      %1531 = vst [vmem:[#allocation2 + $0x2e0] sm:$0xff] %v1433
      %1532 = vst [vmem:[#allocation2 + $0x2e8] sm:$0xff] %v1434
      %1533 = vst [vmem:[#allocation2 + $0x2f0] sm:$0xff] %v1435
      %1534 = vst [vmem:[#allocation2 + $0x2f8] sm:$0xff] %v1436
      %1535 = vst [vmem:[#allocation2 + $0x300] sm:$0xff] %v1437
      %1536 = vst [vmem:[#allocation2 + $0x308] sm:$0xff] %v1438
      // Predicated region
      $region37: #{forward.6} parent=31 // pred_check
        %p1537 = pneg %p260
      $region38: #{forward.6} parent=31 // pred_check_branch
        %1539 = sbr.rel (%p1537) target = $region40
      $region39: #{forward.6} parent=31 // pred_region
        %v1540 = vld [vmem:[#allocation2] sm:$0xff]
        %v1541 = vld [vmem:[#allocation2 + $0x8] sm:$0xff]
        %v1542 = vld [vmem:[#allocation2 + $0x10] sm:$0xff]
        %v1543 = vld [vmem:[#allocation2 + $0x18] sm:$0xff]
        %v1544 = vld [vmem:[#allocation2 + $0x20] sm:$0xff]
        %v1545 = vld [vmem:[#allocation2 + $0x28] sm:$0xff]
        %v1546 = vld [vmem:[#allocation2 + $0x30] sm:$0xff]
        %v1547 = vld [vmem:[#allocation2 + $0x38] sm:$0xff]
        %v1548 = vld [vmem:[#allocation2 + $0x40] sm:$0xff]
        %v1549 = vld [vmem:[#allocation2 + $0x48] sm:$0xff]
        %v1550 = vld [vmem:[#allocation2 + $0x50] sm:$0xff]
        %v1551 = vld [vmem:[#allocation2 + $0x58] sm:$0xff]
        %v1552 = vld [vmem:[#allocation2 + $0x60] sm:$0xff]
        %v1553 = vld [vmem:[#allocation2 + $0x68] sm:$0xff]
        %v1554 = vld [vmem:[#allocation2 + $0x70] sm:$0xff]
        %v1555 = vld [vmem:[#allocation2 + $0x78] sm:$0xff]
        %v1556 = vld [vmem:[#allocation2 + $0x80] sm:$0xff]
        %v1557 = vld [vmem:[#allocation2 + $0x88] sm:$0xff]
        %v1558 = vld [vmem:[#allocation2 + $0x90] sm:$0xff]
        %v1559 = vld [vmem:[#allocation2 + $0x98] sm:$0xff]
        %v1560 = vld [vmem:[#allocation2 + $0xa0] sm:$0xff]
        %v1561 = vld [vmem:[#allocation2 + $0xa8] sm:$0xff]
        %v1562 = vld [vmem:[#allocation2 + $0xb0] sm:$0xff]
        %v1563 = vld [vmem:[#allocation2 + $0xb8] sm:$0xff]
        %v1564 = vld [vmem:[#allocation2 + $0xc0] sm:$0xff]
        %v1565 = vld [vmem:[#allocation2 + $0xc8] sm:$0xff]
        %v1566 = vld [vmem:[#allocation2 + $0xd0] sm:$0xff]
        %v1567 = vld [vmem:[#allocation2 + $0xd8] sm:$0xff]
        %v1568 = vld [vmem:[#allocation2 + $0xe0] sm:$0xff]
        %v1569 = vld [vmem:[#allocation2 + $0xe8] sm:$0xff]
        %v1570 = vld [vmem:[#allocation2 + $0xf0] sm:$0xff]
        %v1571 = vld [vmem:[#allocation2 + $0xf8] sm:$0xff]
        %v1572 = vld [vmem:[#allocation2 + $0x100] sm:$0xff]
        %v1573 = vld [vmem:[#allocation2 + $0x108] sm:$0xff]
        %v1574 = vld [vmem:[#allocation2 + $0x110] sm:$0xff]
        %v1575 = vld [vmem:[#allocation2 + $0x118] sm:$0xff]
        %v1576 = vld [vmem:[#allocation2 + $0x120] sm:$0xff]
        %v1577 = vld [vmem:[#allocation2 + $0x128] sm:$0xff]
        %v1578 = vld [vmem:[#allocation2 + $0x130] sm:$0xff]
        %v1579 = vld [vmem:[#allocation2 + $0x138] sm:$0xff]
        %v1580 = vld [vmem:[#allocation2 + $0x140] sm:$0xff]
        %v1581 = vld [vmem:[#allocation2 + $0x148] sm:$0xff]
        %v1582 = vld [vmem:[#allocation2 + $0x150] sm:$0xff]
        %v1583 = vld [vmem:[#allocation2 + $0x158] sm:$0xff]
        %v1584 = vld [vmem:[#allocation2 + $0x160] sm:$0xff]
        %v1585 = vld [vmem:[#allocation2 + $0x168] sm:$0xff]
        %v1586 = vld [vmem:[#allocation2 + $0x170] sm:$0xff]
        %v1587 = vld [vmem:[#allocation2 + $0x178] sm:$0xff]
        %v1588 = vld [vmem:[#allocation2 + $0x180] sm:$0xff]
        %v1589 = vld [vmem:[#allocation2 + $0x188] sm:$0xff]
        %v1590 = vld [vmem:[#allocation2 + $0x190] sm:$0xff]
        %v1591 = vld [vmem:[#allocation2 + $0x198] sm:$0xff]
        %v1592 = vld [vmem:[#allocation2 + $0x1a0] sm:$0xff]
        %v1593 = vld [vmem:[#allocation2 + $0x1a8] sm:$0xff]
        %v1594 = vld [vmem:[#allocation2 + $0x1b0] sm:$0xff]
        %v1595 = vld [vmem:[#allocation2 + $0x1b8] sm:$0xff]
        %v1596 = vld [vmem:[#allocation2 + $0x1c0] sm:$0xff]
        %v1597 = vld [vmem:[#allocation2 + $0x1c8] sm:$0xff]
        %v1598 = vld [vmem:[#allocation2 + $0x1d0] sm:$0xff]
        %v1599 = vld [vmem:[#allocation2 + $0x1d8] sm:$0xff]
        %v1600 = vld [vmem:[#allocation2 + $0x1e0] sm:$0xff]
        %v1601 = vld [vmem:[#allocation2 + $0x1e8] sm:$0xff]
        %v1602 = vld [vmem:[#allocation2 + $0x1f0] sm:$0xff]
        %v1603 = vld [vmem:[#allocation2 + $0x1f8] sm:$0xff]
        %v1604 = vld [vmem:[#allocation2 + $0x200] sm:$0xff]
        %v1605 = vld [vmem:[#allocation2 + $0x208] sm:$0xff]
        %v1606 = vld [vmem:[#allocation2 + $0x210] sm:$0xff]
        %v1607 = vld [vmem:[#allocation2 + $0x218] sm:$0xff]
        %v1608 = vld [vmem:[#allocation2 + $0x220] sm:$0xff]
        %v1609 = vld [vmem:[#allocation2 + $0x228] sm:$0xff]
        %v1610 = vld [vmem:[#allocation2 + $0x230] sm:$0xff]
        %v1611 = vld [vmem:[#allocation2 + $0x238] sm:$0xff]
        %v1612 = vld [vmem:[#allocation2 + $0x240] sm:$0xff]
        %v1613 = vld [vmem:[#allocation2 + $0x248] sm:$0xff]
        %v1614 = vld [vmem:[#allocation2 + $0x250] sm:$0xff]
        %v1615 = vld [vmem:[#allocation2 + $0x258] sm:$0xff]
        %v1616 = vld [vmem:[#allocation2 + $0x260] sm:$0xff]
        %v1617 = vld [vmem:[#allocation2 + $0x268] sm:$0xff]
        %v1618 = vld [vmem:[#allocation2 + $0x270] sm:$0xff]
        %v1619 = vld [vmem:[#allocation2 + $0x278] sm:$0xff]
        %v1620 = vld [vmem:[#allocation2 + $0x280] sm:$0xff]
        %v1621 = vld [vmem:[#allocation2 + $0x288] sm:$0xff]
        %v1622 = vld [vmem:[#allocation2 + $0x290] sm:$0xff]
        %v1623 = vld [vmem:[#allocation2 + $0x298] sm:$0xff]
        %v1624 = vld [vmem:[#allocation2 + $0x2a0] sm:$0xff]
        %v1625 = vld [vmem:[#allocation2 + $0x2a8] sm:$0xff]
        %v1626 = vld [vmem:[#allocation2 + $0x2b0] sm:$0xff]
        %v1627 = vld [vmem:[#allocation2 + $0x2b8] sm:$0xff]
        %v1628 = vld [vmem:[#allocation2 + $0x2c0] sm:$0xff]
        %v1629 = vld [vmem:[#allocation2 + $0x2c8] sm:$0xff]
        %v1630 = vld [vmem:[#allocation2 + $0x2d0] sm:$0xff]
        %v1631 = vld [vmem:[#allocation2 + $0x2d8] sm:$0xff]
        %v1632 = vld [vmem:[#allocation2 + $0x2e0] sm:$0xff]
        %v1633 = vld [vmem:[#allocation2 + $0x2e8] sm:$0xff]
        %v1634 = vld [vmem:[#allocation2 + $0x2f0] sm:$0xff]
        %v1635 = vld [vmem:[#allocation2 + $0x2f8] sm:$0xff]
        %v1636 = vld [vmem:[#allocation2 + $0x300] sm:$0xff]
        %v1637 = vld [vmem:[#allocation2 + $0x308] sm:$0xff]
        %v1638 = vld [vmem:[%s249] sm:$0x1]
        %v1640 = vlaneseq
        %v1641 = vshrl.u32 %v1640, 7
        %v1642 = vsub.s32 0, %v1641
        %v1643 = vrot.slane %v1638, %v1642
        %v1645 = vadd.f32 %v1540, %v1643
        %v1646 = vadd.f32 %v1541, %v1643
        %v1647 = vadd.f32 %v1542, %v1643
        %v1648 = vadd.f32 %v1543, %v1643
        %v1649 = vadd.f32 %v1544, %v1643
        %v1650 = vadd.f32 %v1545, %v1643
        %v1651 = vadd.f32 %v1546, %v1643
        %v1652 = vadd.f32 %v1547, %v1643
        %v1653 = vadd.f32 %v1548, %v1643
        %v1654 = vadd.f32 %v1549, %v1643
        %v1655 = vadd.f32 %v1550, %v1643
        %v1656 = vadd.f32 %v1551, %v1643
        %v1657 = vadd.f32 %v1552, %v1643
        %v1658 = vadd.f32 %v1553, %v1643
        %v1659 = vadd.f32 %v1554, %v1643
        %v1660 = vadd.f32 %v1555, %v1643
        %v1661 = vadd.f32 %v1556, %v1643
        %v1662 = vadd.f32 %v1557, %v1643
        %v1663 = vadd.f32 %v1558, %v1643
        %v1664 = vadd.f32 %v1559, %v1643
        %v1665 = vadd.f32 %v1560, %v1643
        %v1666 = vadd.f32 %v1561, %v1643
        %v1667 = vadd.f32 %v1562, %v1643
        %v1668 = vadd.f32 %v1563, %v1643
        %v1669 = vadd.f32 %v1564, %v1643
        %v1670 = vadd.f32 %v1565, %v1643
        %v1671 = vadd.f32 %v1566, %v1643
        %v1672 = vadd.f32 %v1567, %v1643
        %v1673 = vadd.f32 %v1568, %v1643
        %v1674 = vadd.f32 %v1569, %v1643
        %v1675 = vadd.f32 %v1570, %v1643
        %v1676 = vadd.f32 %v1571, %v1643
        %v1677 = vadd.f32 %v1572, %v1643
        %v1678 = vadd.f32 %v1573, %v1643
        %v1679 = vadd.f32 %v1574, %v1643
        %v1680 = vadd.f32 %v1575, %v1643
        %v1681 = vadd.f32 %v1576, %v1643
        %v1682 = vadd.f32 %v1577, %v1643
        %v1683 = vadd.f32 %v1578, %v1643
        %v1684 = vadd.f32 %v1579, %v1643
        %v1685 = vadd.f32 %v1580, %v1643
        %v1686 = vadd.f32 %v1581, %v1643
        %v1687 = vadd.f32 %v1582, %v1643
        %v1688 = vadd.f32 %v1583, %v1643
        %v1689 = vadd.f32 %v1584, %v1643
        %v1690 = vadd.f32 %v1585, %v1643
        %v1691 = vadd.f32 %v1586, %v1643
        %v1692 = vadd.f32 %v1587, %v1643
        %v1693 = vadd.f32 %v1588, %v1643
        %v1694 = vadd.f32 %v1589, %v1643
        %v1695 = vadd.f32 %v1590, %v1643
        %v1696 = vadd.f32 %v1591, %v1643
        %v1697 = vadd.f32 %v1592, %v1643
        %v1698 = vadd.f32 %v1593, %v1643
        %v1699 = vadd.f32 %v1594, %v1643
        %v1700 = vadd.f32 %v1595, %v1643
        %v1701 = vadd.f32 %v1596, %v1643
        %v1702 = vadd.f32 %v1597, %v1643
        %v1703 = vadd.f32 %v1598, %v1643
        %v1704 = vadd.f32 %v1599, %v1643
        %v1705 = vadd.f32 %v1600, %v1643
        %v1706 = vadd.f32 %v1601, %v1643
        %v1707 = vadd.f32 %v1602, %v1643
        %v1708 = vadd.f32 %v1603, %v1643
        %v1709 = vadd.f32 %v1604, %v1643
        %v1710 = vadd.f32 %v1605, %v1643
        %v1711 = vadd.f32 %v1606, %v1643
        %v1712 = vadd.f32 %v1607, %v1643
        %v1713 = vadd.f32 %v1608, %v1643
        %v1714 = vadd.f32 %v1609, %v1643
        %v1715 = vadd.f32 %v1610, %v1643
        %v1716 = vadd.f32 %v1611, %v1643
        %v1717 = vadd.f32 %v1612, %v1643
        %v1718 = vadd.f32 %v1613, %v1643
        %v1719 = vadd.f32 %v1614, %v1643
        %v1720 = vadd.f32 %v1615, %v1643
        %v1721 = vadd.f32 %v1616, %v1643
        %v1722 = vadd.f32 %v1617, %v1643
        %v1723 = vadd.f32 %v1618, %v1643
        %v1724 = vadd.f32 %v1619, %v1643
        %v1725 = vadd.f32 %v1620, %v1643
        %v1726 = vadd.f32 %v1621, %v1643
        %v1727 = vadd.f32 %v1622, %v1643
        %v1728 = vadd.f32 %v1623, %v1643
        %v1729 = vadd.f32 %v1624, %v1643
        %v1730 = vadd.f32 %v1625, %v1643
        %v1731 = vadd.f32 %v1626, %v1643
        %v1732 = vadd.f32 %v1627, %v1643
        %v1733 = vadd.f32 %v1628, %v1643
        %v1734 = vadd.f32 %v1629, %v1643
        %v1735 = vadd.f32 %v1630, %v1643
        %v1736 = vadd.f32 %v1631, %v1643
        %v1737 = vadd.f32 %v1632, %v1643
        %v1738 = vadd.f32 %v1633, %v1643
        %v1739 = vadd.f32 %v1634, %v1643
        %v1740 = vadd.f32 %v1635, %v1643
        %v1741 = vadd.f32 %v1636, %v1643
        %v1742 = vadd.f32 %v1637, %v1643
        %vm1743 = vcmp.gt.f32.partialorder %v1645, 0.0
        %vm1744 = vcmp.gt.f32.partialorder %v1646, 0.0
        %vm1745 = vcmp.gt.f32.partialorder %v1647, 0.0
        %vm1746 = vcmp.gt.f32.partialorder %v1648, 0.0
        %vm1747 = vcmp.gt.f32.partialorder %v1649, 0.0
        %vm1748 = vcmp.gt.f32.partialorder %v1650, 0.0
        %vm1749 = vcmp.gt.f32.partialorder %v1651, 0.0
        %vm1750 = vcmp.gt.f32.partialorder %v1652, 0.0
        %vm1751 = vcmp.gt.f32.partialorder %v1653, 0.0
        %vm1752 = vcmp.gt.f32.partialorder %v1654, 0.0
        %vm1753 = vcmp.gt.f32.partialorder %v1655, 0.0
        %vm1754 = vcmp.gt.f32.partialorder %v1656, 0.0
        %vm1755 = vcmp.gt.f32.partialorder %v1657, 0.0
        %vm1756 = vcmp.gt.f32.partialorder %v1658, 0.0
        %vm1757 = vcmp.gt.f32.partialorder %v1659, 0.0
        %vm1758 = vcmp.gt.f32.partialorder %v1660, 0.0
        %vm1759 = vcmp.gt.f32.partialorder %v1661, 0.0
        %vm1760 = vcmp.gt.f32.partialorder %v1662, 0.0
        %vm1761 = vcmp.gt.f32.partialorder %v1663, 0.0
        %vm1762 = vcmp.gt.f32.partialorder %v1664, 0.0
        %vm1763 = vcmp.gt.f32.partialorder %v1665, 0.0
        %vm1764 = vcmp.gt.f32.partialorder %v1666, 0.0
        %vm1765 = vcmp.gt.f32.partialorder %v1667, 0.0
        %vm1766 = vcmp.gt.f32.partialorder %v1668, 0.0
        %vm1767 = vcmp.gt.f32.partialorder %v1669, 0.0
        %vm1768 = vcmp.gt.f32.partialorder %v1670, 0.0
        %vm1769 = vcmp.gt.f32.partialorder %v1671, 0.0
        %vm1770 = vcmp.gt.f32.partialorder %v1672, 0.0
        %vm1771 = vcmp.gt.f32.partialorder %v1673, 0.0
        %vm1772 = vcmp.gt.f32.partialorder %v1674, 0.0
        %vm1773 = vcmp.gt.f32.partialorder %v1675, 0.0
        %vm1774 = vcmp.gt.f32.partialorder %v1676, 0.0
        %vm1775 = vcmp.gt.f32.partialorder %v1677, 0.0
        %vm1776 = vcmp.gt.f32.partialorder %v1678, 0.0
        %vm1777 = vcmp.gt.f32.partialorder %v1679, 0.0
        %vm1778 = vcmp.gt.f32.partialorder %v1680, 0.0
        %vm1779 = vcmp.gt.f32.partialorder %v1681, 0.0
        %vm1780 = vcmp.gt.f32.partialorder %v1682, 0.0
        %vm1781 = vcmp.gt.f32.partialorder %v1683, 0.0
        %vm1782 = vcmp.gt.f32.partialorder %v1684, 0.0
        %vm1783 = vcmp.gt.f32.partialorder %v1685, 0.0
        %vm1784 = vcmp.gt.f32.partialorder %v1686, 0.0
        %vm1785 = vcmp.gt.f32.partialorder %v1687, 0.0
        %vm1786 = vcmp.gt.f32.partialorder %v1688, 0.0
        %vm1787 = vcmp.gt.f32.partialorder %v1689, 0.0
        %vm1788 = vcmp.gt.f32.partialorder %v1690, 0.0
        %vm1789 = vcmp.gt.f32.partialorder %v1691, 0.0
        %vm1790 = vcmp.gt.f32.partialorder %v1692, 0.0
        %vm1791 = vcmp.gt.f32.partialorder %v1693, 0.0
        %vm1792 = vcmp.gt.f32.partialorder %v1694, 0.0
        %vm1793 = vcmp.gt.f32.partialorder %v1695, 0.0
        %vm1794 = vcmp.gt.f32.partialorder %v1696, 0.0
        %vm1795 = vcmp.gt.f32.partialorder %v1697, 0.0
        %vm1796 = vcmp.gt.f32.partialorder %v1698, 0.0
        %vm1797 = vcmp.gt.f32.partialorder %v1699, 0.0
        %vm1798 = vcmp.gt.f32.partialorder %v1700, 0.0
        %vm1799 = vcmp.gt.f32.partialorder %v1701, 0.0
        %vm1800 = vcmp.gt.f32.partialorder %v1702, 0.0
        %vm1801 = vcmp.gt.f32.partialorder %v1703, 0.0
        %vm1802 = vcmp.gt.f32.partialorder %v1704, 0.0
        %vm1803 = vcmp.gt.f32.partialorder %v1705, 0.0
        %vm1804 = vcmp.gt.f32.partialorder %v1706, 0.0
        %vm1805 = vcmp.gt.f32.partialorder %v1707, 0.0
        %vm1806 = vcmp.gt.f32.partialorder %v1708, 0.0
        %vm1807 = vcmp.gt.f32.partialorder %v1709, 0.0
        %vm1808 = vcmp.gt.f32.partialorder %v1710, 0.0
        %vm1809 = vcmp.gt.f32.partialorder %v1711, 0.0
        %vm1810 = vcmp.gt.f32.partialorder %v1712, 0.0
        %vm1811 = vcmp.gt.f32.partialorder %v1713, 0.0
        %vm1812 = vcmp.gt.f32.partialorder %v1714, 0.0
        %vm1813 = vcmp.gt.f32.partialorder %v1715, 0.0
        %vm1814 = vcmp.gt.f32.partialorder %v1716, 0.0
        %vm1815 = vcmp.gt.f32.partialorder %v1717, 0.0
        %vm1816 = vcmp.gt.f32.partialorder %v1718, 0.0
        %vm1817 = vcmp.gt.f32.partialorder %v1719, 0.0
        %vm1818 = vcmp.gt.f32.partialorder %v1720, 0.0
        %vm1819 = vcmp.gt.f32.partialorder %v1721, 0.0
        %vm1820 = vcmp.gt.f32.partialorder %v1722, 0.0
        %vm1821 = vcmp.gt.f32.partialorder %v1723, 0.0
        %vm1822 = vcmp.gt.f32.partialorder %v1724, 0.0
        %vm1823 = vcmp.gt.f32.partialorder %v1725, 0.0
        %vm1824 = vcmp.gt.f32.partialorder %v1726, 0.0
        %vm1825 = vcmp.gt.f32.partialorder %v1727, 0.0
        %vm1826 = vcmp.gt.f32.partialorder %v1728, 0.0
        %vm1827 = vcmp.gt.f32.partialorder %v1729, 0.0
        %vm1828 = vcmp.gt.f32.partialorder %v1730, 0.0
        %vm1829 = vcmp.gt.f32.partialorder %v1731, 0.0
        %vm1830 = vcmp.gt.f32.partialorder %v1732, 0.0
        %vm1831 = vcmp.gt.f32.partialorder %v1733, 0.0
        %vm1832 = vcmp.gt.f32.partialorder %v1734, 0.0
        %vm1833 = vcmp.gt.f32.partialorder %v1735, 0.0
        %vm1834 = vcmp.gt.f32.partialorder %v1736, 0.0
        %vm1835 = vcmp.gt.f32.partialorder %v1737, 0.0
        %vm1836 = vcmp.gt.f32.partialorder %v1738, 0.0
        %vm1837 = vcmp.gt.f32.partialorder %v1739, 0.0
        %vm1838 = vcmp.gt.f32.partialorder %v1740, 0.0
        %vm1839 = vcmp.gt.f32.partialorder %v1741, 0.0
        %vm1840 = vcmp.gt.f32.partialorder %v1742, 0.0
        %v1841 = vmul.f32 %v1645, 0.2
        %v1842 = vmul.f32 %v1646, 0.2
        %v1843 = vmul.f32 %v1647, 0.2
        %v1844 = vmul.f32 %v1648, 0.2
        %v1845 = vmul.f32 %v1649, 0.2
        %v1846 = vmul.f32 %v1650, 0.2
        %v1847 = vmul.f32 %v1651, 0.2
        %v1848 = vmul.f32 %v1652, 0.2
        %v1849 = vmul.f32 %v1653, 0.2
        %v1850 = vmul.f32 %v1654, 0.2
        %v1851 = vmul.f32 %v1655, 0.2
        %v1852 = vmul.f32 %v1656, 0.2
        %v1853 = vmul.f32 %v1657, 0.2
        %v1854 = vmul.f32 %v1658, 0.2
        %v1855 = vmul.f32 %v1659, 0.2
        %v1856 = vmul.f32 %v1660, 0.2
        %v1857 = vmul.f32 %v1661, 0.2
        %v1858 = vmul.f32 %v1662, 0.2
        %v1859 = vmul.f32 %v1663, 0.2
        %v1860 = vmul.f32 %v1664, 0.2
        %v1861 = vmul.f32 %v1665, 0.2
        %v1862 = vmul.f32 %v1666, 0.2
        %v1863 = vmul.f32 %v1667, 0.2
        %v1864 = vmul.f32 %v1668, 0.2
        %v1865 = vmul.f32 %v1669, 0.2
        %v1866 = vmul.f32 %v1670, 0.2
        %v1867 = vmul.f32 %v1671, 0.2
        %v1868 = vmul.f32 %v1672, 0.2
        %v1869 = vmul.f32 %v1673, 0.2
        %v1870 = vmul.f32 %v1674, 0.2
        %v1871 = vmul.f32 %v1675, 0.2
        %v1872 = vmul.f32 %v1676, 0.2
        %v1873 = vmul.f32 %v1677, 0.2
        %v1874 = vmul.f32 %v1678, 0.2
        %v1875 = vmul.f32 %v1679, 0.2
        %v1876 = vmul.f32 %v1680, 0.2
        %v1877 = vmul.f32 %v1681, 0.2
        %v1878 = vmul.f32 %v1682, 0.2
        %v1879 = vmul.f32 %v1683, 0.2
        %v1880 = vmul.f32 %v1684, 0.2
        %v1881 = vmul.f32 %v1685, 0.2
        %v1882 = vmul.f32 %v1686, 0.2
        %v1883 = vmul.f32 %v1687, 0.2
        %v1884 = vmul.f32 %v1688, 0.2
        %v1885 = vmul.f32 %v1689, 0.2
        %v1886 = vmul.f32 %v1690, 0.2
        %v1887 = vmul.f32 %v1691, 0.2
        %v1888 = vmul.f32 %v1692, 0.2
        %v1889 = vmul.f32 %v1693, 0.2
        %v1890 = vmul.f32 %v1694, 0.2
        %v1891 = vmul.f32 %v1695, 0.2
        %v1892 = vmul.f32 %v1696, 0.2
        %v1893 = vmul.f32 %v1697, 0.2
        %v1894 = vmul.f32 %v1698, 0.2
        %v1895 = vmul.f32 %v1699, 0.2
        %v1896 = vmul.f32 %v1700, 0.2
        %v1897 = vmul.f32 %v1701, 0.2
        %v1898 = vmul.f32 %v1702, 0.2
        %v1899 = vmul.f32 %v1703, 0.2
        %v1900 = vmul.f32 %v1704, 0.2
        %v1901 = vmul.f32 %v1705, 0.2
        %v1902 = vmul.f32 %v1706, 0.2
        %v1903 = vmul.f32 %v1707, 0.2
        %v1904 = vmul.f32 %v1708, 0.2
        %v1905 = vmul.f32 %v1709, 0.2
        %v1906 = vmul.f32 %v1710, 0.2
        %v1907 = vmul.f32 %v1711, 0.2
        %v1908 = vmul.f32 %v1712, 0.2
        %v1909 = vmul.f32 %v1713, 0.2
        %v1910 = vmul.f32 %v1714, 0.2
        %v1911 = vmul.f32 %v1715, 0.2
        %v1912 = vmul.f32 %v1716, 0.2
        %v1913 = vmul.f32 %v1717, 0.2
        %v1914 = vmul.f32 %v1718, 0.2
        %v1915 = vmul.f32 %v1719, 0.2
        %v1916 = vmul.f32 %v1720, 0.2
        %v1917 = vmul.f32 %v1721, 0.2
        %v1918 = vmul.f32 %v1722, 0.2
        %v1919 = vmul.f32 %v1723, 0.2
        %v1920 = vmul.f32 %v1724, 0.2
        %v1921 = vmul.f32 %v1725, 0.2
        %v1922 = vmul.f32 %v1726, 0.2
        %v1923 = vmul.f32 %v1727, 0.2
        %v1924 = vmul.f32 %v1728, 0.2
        %v1925 = vmul.f32 %v1729, 0.2
        %v1926 = vmul.f32 %v1730, 0.2
        %v1927 = vmul.f32 %v1731, 0.2
        %v1928 = vmul.f32 %v1732, 0.2
        %v1929 = vmul.f32 %v1733, 0.2
        %v1930 = vmul.f32 %v1734, 0.2
        %v1931 = vmul.f32 %v1735, 0.2
        %v1932 = vmul.f32 %v1736, 0.2
        %v1933 = vmul.f32 %v1737, 0.2
        %v1934 = vmul.f32 %v1738, 0.2
        %v1935 = vmul.f32 %v1739, 0.2
        %v1936 = vmul.f32 %v1740, 0.2
        %v1937 = vmul.f32 %v1741, 0.2
        %v1938 = vmul.f32 %v1742, 0.2
        %v1939 = vsel %vm1743, %v1645, %v1841
        %v1940 = vsel %vm1744, %v1646, %v1842
        %v1941 = vsel %vm1745, %v1647, %v1843
        %v1942 = vsel %vm1746, %v1648, %v1844
        %v1943 = vsel %vm1747, %v1649, %v1845
        %v1944 = vsel %vm1748, %v1650, %v1846
        %v1945 = vsel %vm1749, %v1651, %v1847
        %v1946 = vsel %vm1750, %v1652, %v1848
        %v1947 = vsel %vm1751, %v1653, %v1849
        %v1948 = vsel %vm1752, %v1654, %v1850
        %v1949 = vsel %vm1753, %v1655, %v1851
        %v1950 = vsel %vm1754, %v1656, %v1852
        %v1951 = vsel %vm1755, %v1657, %v1853
        %v1952 = vsel %vm1756, %v1658, %v1854
        %v1953 = vsel %vm1757, %v1659, %v1855
        %v1954 = vsel %vm1758, %v1660, %v1856
        %v1955 = vsel %vm1759, %v1661, %v1857
        %v1956 = vsel %vm1760, %v1662, %v1858
        %v1957 = vsel %vm1761, %v1663, %v1859
        %v1958 = vsel %vm1762, %v1664, %v1860
        %v1959 = vsel %vm1763, %v1665, %v1861
        %v1960 = vsel %vm1764, %v1666, %v1862
        %v1961 = vsel %vm1765, %v1667, %v1863
        %v1962 = vsel %vm1766, %v1668, %v1864
        %v1963 = vsel %vm1767, %v1669, %v1865
        %v1964 = vsel %vm1768, %v1670, %v1866
        %v1965 = vsel %vm1769, %v1671, %v1867
        %v1966 = vsel %vm1770, %v1672, %v1868
        %v1967 = vsel %vm1771, %v1673, %v1869
        %v1968 = vsel %vm1772, %v1674, %v1870
        %v1969 = vsel %vm1773, %v1675, %v1871
        %v1970 = vsel %vm1774, %v1676, %v1872
        %v1971 = vsel %vm1775, %v1677, %v1873
        %v1972 = vsel %vm1776, %v1678, %v1874
        %v1973 = vsel %vm1777, %v1679, %v1875
        %v1974 = vsel %vm1778, %v1680, %v1876
        %v1975 = vsel %vm1779, %v1681, %v1877
        %v1976 = vsel %vm1780, %v1682, %v1878
        %v1977 = vsel %vm1781, %v1683, %v1879
        %v1978 = vsel %vm1782, %v1684, %v1880
        %v1979 = vsel %vm1783, %v1685, %v1881
        %v1980 = vsel %vm1784, %v1686, %v1882
        %v1981 = vsel %vm1785, %v1687, %v1883
        %v1982 = vsel %vm1786, %v1688, %v1884
        %v1983 = vsel %vm1787, %v1689, %v1885
        %v1984 = vsel %vm1788, %v1690, %v1886
        %v1985 = vsel %vm1789, %v1691, %v1887
        %v1986 = vsel %vm1790, %v1692, %v1888
        %v1987 = vsel %vm1791, %v1693, %v1889
        %v1988 = vsel %vm1792, %v1694, %v1890
        %v1989 = vsel %vm1793, %v1695, %v1891
        %v1990 = vsel %vm1794, %v1696, %v1892
        %v1991 = vsel %vm1795, %v1697, %v1893
        %v1992 = vsel %vm1796, %v1698, %v1894
        %v1993 = vsel %vm1797, %v1699, %v1895
        %v1994 = vsel %vm1798, %v1700, %v1896
        %v1995 = vsel %vm1799, %v1701, %v1897
        %v1996 = vsel %vm1800, %v1702, %v1898
        %v1997 = vsel %vm1801, %v1703, %v1899
        %v1998 = vsel %vm1802, %v1704, %v1900
        %v1999 = vsel %vm1803, %v1705, %v1901
        %v2000 = vsel %vm1804, %v1706, %v1902
        %v2001 = vsel %vm1805, %v1707, %v1903
        %v2002 = vsel %vm1806, %v1708, %v1904
        %v2003 = vsel %vm1807, %v1709, %v1905
        %v2004 = vsel %vm1808, %v1710, %v1906
        %v2005 = vsel %vm1809, %v1711, %v1907
        %v2006 = vsel %vm1810, %v1712, %v1908
        %v2007 = vsel %vm1811, %v1713, %v1909
        %v2008 = vsel %vm1812, %v1714, %v1910
        %v2009 = vsel %vm1813, %v1715, %v1911
        %v2010 = vsel %vm1814, %v1716, %v1912
        %v2011 = vsel %vm1815, %v1717, %v1913
        %v2012 = vsel %vm1816, %v1718, %v1914
        %v2013 = vsel %vm1817, %v1719, %v1915
        %v2014 = vsel %vm1818, %v1720, %v1916
        %v2015 = vsel %vm1819, %v1721, %v1917
        %v2016 = vsel %vm1820, %v1722, %v1918
        %v2017 = vsel %vm1821, %v1723, %v1919
        %v2018 = vsel %vm1822, %v1724, %v1920
        %v2019 = vsel %vm1823, %v1725, %v1921
        %v2020 = vsel %vm1824, %v1726, %v1922
        %v2021 = vsel %vm1825, %v1727, %v1923
        %v2022 = vsel %vm1826, %v1728, %v1924
        %v2023 = vsel %vm1827, %v1729, %v1925
        %v2024 = vsel %vm1828, %v1730, %v1926
        %v2025 = vsel %vm1829, %v1731, %v1927
        %v2026 = vsel %vm1830, %v1732, %v1928
        %v2027 = vsel %vm1831, %v1733, %v1929
        %v2028 = vsel %vm1832, %v1734, %v1930
        %v2029 = vsel %vm1833, %v1735, %v1931
        %v2030 = vsel %vm1834, %v1736, %v1932
        %v2031 = vsel %vm1835, %v1737, %v1933
        %v2032 = vsel %vm1836, %v1738, %v1934
        %v2033 = vsel %vm1837, %v1739, %v1935
        %v2034 = vsel %vm1838, %v1740, %v1936
        %v2035 = vsel %vm1839, %v1741, %v1937
        %v2036 = vsel %vm1840, %v1742, %v1938
        %2037 = vst [vmem:[%s257] sm:$0xff] %v1939
        %2038 = vst [vmem:[%s257 + $0x8] sm:$0xff] %v1940
        %2039 = vst [vmem:[%s257 + $0x10] sm:$0xff] %v1941
        %2040 = vst [vmem:[%s257 + $0x18] sm:$0xff] %v1942
        %2041 = vst [vmem:[%s257 + $0x20] sm:$0xff] %v1943
        %2042 = vst [vmem:[%s257 + $0x28] sm:$0xff] %v1944
        %2043 = vst [vmem:[%s257 + $0x30] sm:$0xff] %v1945
        %2044 = vst [vmem:[%s257 + $0x38] sm:$0xff] %v1946
        %2045 = vst [vmem:[%s257 + $0x40] sm:$0xff] %v1947
        %2046 = vst [vmem:[%s257 + $0x48] sm:$0xff] %v1948
        %2047 = vst [vmem:[%s257 + $0x50] sm:$0xff] %v1949
        %2048 = vst [vmem:[%s257 + $0x58] sm:$0xff] %v1950
        %2049 = vst [vmem:[%s257 + $0x60] sm:$0xff] %v1951
        %2050 = vst [vmem:[%s257 + $0x68] sm:$0xff] %v1952
        %2051 = vst [vmem:[%s257 + $0x70] sm:$0xff] %v1953
        %2052 = vst [vmem:[%s257 + $0x78] sm:$0xff] %v1954
        %2053 = vst [vmem:[%s257 + $0x80] sm:$0xff] %v1955
        %2054 = vst [vmem:[%s257 + $0x88] sm:$0xff] %v1956
        %2055 = vst [vmem:[%s257 + $0x90] sm:$0xff] %v1957
        %2056 = vst [vmem:[%s257 + $0x98] sm:$0xff] %v1958
        %2057 = vst [vmem:[%s257 + $0xa0] sm:$0xff] %v1959
        %2058 = vst [vmem:[%s257 + $0xa8] sm:$0xff] %v1960
        %2059 = vst [vmem:[%s257 + $0xb0] sm:$0xff] %v1961
        %2060 = vst [vmem:[%s257 + $0xb8] sm:$0xff] %v1962
        %2061 = vst [vmem:[%s257 + $0xc0] sm:$0xff] %v1963
        %2062 = vst [vmem:[%s257 + $0xc8] sm:$0xff] %v1964
        %2063 = vst [vmem:[%s257 + $0xd0] sm:$0xff] %v1965
        %2064 = vst [vmem:[%s257 + $0xd8] sm:$0xff] %v1966
        %2065 = vst [vmem:[%s257 + $0xe0] sm:$0xff] %v1967
        %2066 = vst [vmem:[%s257 + $0xe8] sm:$0xff] %v1968
        %2067 = vst [vmem:[%s257 + $0xf0] sm:$0xff] %v1969
        %2068 = vst [vmem:[%s257 + $0xf8] sm:$0xff] %v1970
        %2069 = vst [vmem:[%s257 + $0x100] sm:$0xff] %v1971
        %2070 = vst [vmem:[%s257 + $0x108] sm:$0xff] %v1972
        %2071 = vst [vmem:[%s257 + $0x110] sm:$0xff] %v1973
        %2072 = vst [vmem:[%s257 + $0x118] sm:$0xff] %v1974
        %2073 = vst [vmem:[%s257 + $0x120] sm:$0xff] %v1975
        %2074 = vst [vmem:[%s257 + $0x128] sm:$0xff] %v1976
        %2075 = vst [vmem:[%s257 + $0x130] sm:$0xff] %v1977
        %2076 = vst [vmem:[%s257 + $0x138] sm:$0xff] %v1978
        %2077 = vst [vmem:[%s257 + $0x140] sm:$0xff] %v1979
        %2078 = vst [vmem:[%s257 + $0x148] sm:$0xff] %v1980
        %2079 = vst [vmem:[%s257 + $0x150] sm:$0xff] %v1981
        %2080 = vst [vmem:[%s257 + $0x158] sm:$0xff] %v1982
        %2081 = vst [vmem:[%s257 + $0x160] sm:$0xff] %v1983
        %2082 = vst [vmem:[%s257 + $0x168] sm:$0xff] %v1984
        %2083 = vst [vmem:[%s257 + $0x170] sm:$0xff] %v1985
        %2084 = vst [vmem:[%s257 + $0x178] sm:$0xff] %v1986
        %2085 = vst [vmem:[%s257 + $0x180] sm:$0xff] %v1987
        %2086 = vst [vmem:[%s257 + $0x188] sm:$0xff] %v1988
        %2087 = vst [vmem:[%s257 + $0x190] sm:$0xff] %v1989
        %2088 = vst [vmem:[%s257 + $0x198] sm:$0xff] %v1990
        %2089 = vst [vmem:[%s257 + $0x1a0] sm:$0xff] %v1991
        %2090 = vst [vmem:[%s257 + $0x1a8] sm:$0xff] %v1992
        %2091 = vst [vmem:[%s257 + $0x1b0] sm:$0xff] %v1993
        %2092 = vst [vmem:[%s257 + $0x1b8] sm:$0xff] %v1994
        %2093 = vst [vmem:[%s257 + $0x1c0] sm:$0xff] %v1995
        %2094 = vst [vmem:[%s257 + $0x1c8] sm:$0xff] %v1996
        %2095 = vst [vmem:[%s257 + $0x1d0] sm:$0xff] %v1997
        %2096 = vst [vmem:[%s257 + $0x1d8] sm:$0xff] %v1998
        %2097 = vst [vmem:[%s257 + $0x1e0] sm:$0xff] %v1999
        %2098 = vst [vmem:[%s257 + $0x1e8] sm:$0xff] %v2000
        %2099 = vst [vmem:[%s257 + $0x1f0] sm:$0xff] %v2001
        %2100 = vst [vmem:[%s257 + $0x1f8] sm:$0xff] %v2002
        %2101 = vst [vmem:[%s257 + $0x200] sm:$0xff] %v2003
        %2102 = vst [vmem:[%s257 + $0x208] sm:$0xff] %v2004
        %2103 = vst [vmem:[%s257 + $0x210] sm:$0xff] %v2005
        %2104 = vst [vmem:[%s257 + $0x218] sm:$0xff] %v2006
        %2105 = vst [vmem:[%s257 + $0x220] sm:$0xff] %v2007
        %2106 = vst [vmem:[%s257 + $0x228] sm:$0xff] %v2008
        %2107 = vst [vmem:[%s257 + $0x230] sm:$0xff] %v2009
        %2108 = vst [vmem:[%s257 + $0x238] sm:$0xff] %v2010
        %2109 = vst [vmem:[%s257 + $0x240] sm:$0xff] %v2011
        %2110 = vst [vmem:[%s257 + $0x248] sm:$0xff] %v2012
        %2111 = vst [vmem:[%s257 + $0x250] sm:$0xff] %v2013
        %2112 = vst [vmem:[%s257 + $0x258] sm:$0xff] %v2014
        %2113 = vst [vmem:[%s257 + $0x260] sm:$0xff] %v2015
        %2114 = vst [vmem:[%s257 + $0x268] sm:$0xff] %v2016
        %2115 = vst [vmem:[%s257 + $0x270] sm:$0xff] %v2017
        %2116 = vst [vmem:[%s257 + $0x278] sm:$0xff] %v2018
        %2117 = vst [vmem:[%s257 + $0x280] sm:$0xff] %v2019
        %2118 = vst [vmem:[%s257 + $0x288] sm:$0xff] %v2020
        %2119 = vst [vmem:[%s257 + $0x290] sm:$0xff] %v2021
        %2120 = vst [vmem:[%s257 + $0x298] sm:$0xff] %v2022
        %2121 = vst [vmem:[%s257 + $0x2a0] sm:$0xff] %v2023
        %2122 = vst [vmem:[%s257 + $0x2a8] sm:$0xff] %v2024
        %2123 = vst [vmem:[%s257 + $0x2b0] sm:$0xff] %v2025
        %2124 = vst [vmem:[%s257 + $0x2b8] sm:$0xff] %v2026
        %2125 = vst [vmem:[%s257 + $0x2c0] sm:$0xff] %v2027
        %2126 = vst [vmem:[%s257 + $0x2c8] sm:$0xff] %v2028
        %2127 = vst [vmem:[%s257 + $0x2d0] sm:$0xff] %v2029
        %2128 = vst [vmem:[%s257 + $0x2d8] sm:$0xff] %v2030
        %2129 = vst [vmem:[%s257 + $0x2e0] sm:$0xff] %v2031
        %2130 = vst [vmem:[%s257 + $0x2e8] sm:$0xff] %v2032
        %2131 = vst [vmem:[%s257 + $0x2f0] sm:$0xff] %v2033
        %2132 = vst [vmem:[%s257 + $0x2f8] sm:$0xff] %v2034
        %2133 = vst [vmem:[%s257 + $0x300] sm:$0xff] %v2035
        %2134 = vst [vmem:[%s257 + $0x308] sm:$0xff] %v2036
      $region40: #{forward.6} parent=31 // pred_fallthru
        _
      %s2135 = smul.u32 98, %s19
      %p2136 = scmp.lt.s32.totalorder %s2135, 195
      %s2137 = scalar_select %p2136, %s2135, 195
      %p2138 = scmp.lt.s32.totalorder %s20, 0
      %s2139 = scalar_select %p2138, %s20, 0
      %s2140 = sadd.s32 %s2139, %s2137
      %s2141 = smul.addr %s2140, 8
      %s2142 = scalar_lea.vmem %s3, %s2141
      // Predicated region
      $region41: #{forward.6} parent=31 // pred_check
        %p2143 = pneg %p135
      $region42: #{forward.6} parent=31 // pred_check_branch
        %2145 = sbr.rel (%p2143) target = $region44
      $region43: #{forward.6} parent=31 // pred_region
        %s2146 = smul.u32 98, %s19
      $region44: #{forward.6} parent=31 // pred_fallthru
        _
    $region32: #{forward.6} parent=5 // pred_fallthru
      _
    %p2147 = scmp.le.s32.totalorder 2, %s9
    // Predicated region
    $region45: #{forward.6} parent=5 // pred_check
      %p2148 = pneg %p2147
    $region46: #{forward.6} parent=5 // pred_check_branch
      %2150 = sbr.rel (%p2148) target = $region48
    $region47: #{forward.6} parent=5 // pred_region
      %s2151 = ssub.s32 %s9, 2
      // Predicated region
      $region49: #{forward.6} parent=47 // pred_check
        %p2152 = pneg %p141
      $region50: #{forward.6} parent=47 // pred_check_branch
        %2154 = sbr.rel (%p2152) target = $region52
      $region51: #{forward.6} parent=47 // pred_region
        %s2155 = smul.u32 98, %s22
        %p2156 = scmp.lt.s32.totalorder %s2155, 195
        %s2157 = scalar_select %p2156, %s2155, 195
        %p2158 = scmp.lt.s32.totalorder %s23, 0
        %s2159 = scalar_select %p2158, %s23, 0
        %s2160 = sadd.s32 %s2159, %s2157
        %s2161 = smul.addr %s2160, 8
        %s2162 = scalar_lea.vmem %s3, %s2161
      $region52: #{forward.6} parent=47 // pred_fallthru
        _
    $region48: #{forward.6} parent=5 // pred_fallthru
      _
  $region6: #{forward.6} parent=0 // loop_footer
    %s13 = sadd.s32 1, %s9
  $region7: #{forward.6} parent=0 // loop_footer_branch
    %8 = sbr.rel target = $region3
  $region8: #{forward.6} parent=0 // loop_exit
    _

// kernel: forward.7
$region0: #{forward.7}
  #allocation0 [shape = 'u32[]', space=smem, size = 0x4, offset = 0x4, fixed_abs, tag = 'smem constant byte address 0x4 - core index']
  #allocation1 [shape = 'u32[144,128]{1,0:T(1,128)}', space=vmem, size = 0x12000, scoped, tag = 'internal scratch']
  %s0 = inlined_call_operand.vmem [shape: f32[4,32,448], index: 0, kind: input, shape index: {}]
  %s1 = inlined_call_operand.vmem [shape: f32[32,448], index: 1, kind: output, shape index: {}]
  %s2 = sld [smem:[#allocation0]]
  $region14: #{forward.7} parent=0
    _
  %s4 = ssub.s32 1, %s2
  %s5 = scalar_select 0, %s4, %s2
  // Predicated region
  $region2: #{forward.7} parent=0 // pred_check
    _
  $region3: #{forward.7} parent=0 // pred_check_branch
    %7 = sbr.rel (0) target = $region5
  $region4: #{forward.7} parent=0 // pred_region
    _
  $region5: #{forward.7} parent=0 // pred_fallthru
    _
  %v8 = vld [vmem:[%s0] sm:$0xff]
  %v9 = vld [vmem:[%s0 + $0x8] sm:$0xff]
  %v10 = vld [vmem:[%s0 + $0x10] sm:$0xff]
  %v11 = vld [vmem:[%s0 + $0x18] sm:$0xff]
  %v12 = vld [vmem:[%s0 + $0x20] sm:$0xff]
  %v13 = vld [vmem:[%s0 + $0x28] sm:$0xff]
  %v14 = vld [vmem:[%s0 + $0x30] sm:$0xff]
  %v15 = vld [vmem:[%s0 + $0x38] sm:$0xff]
  %v16 = vld [vmem:[%s0 + $0x40] sm:$0xff]
  %v17 = vld [vmem:[%s0 + $0x48] sm:$0xff]
  %v18 = vld [vmem:[%s0 + $0x50] sm:$0xff]
  %v19 = vld [vmem:[%s0 + $0x58] sm:$0xff]
  %v20 = vld [vmem:[%s0 + $0x60] sm:$0xff]
  %v21 = vld [vmem:[%s0 + $0x68] sm:$0xff]
  %v22 = vld [vmem:[%s0 + $0x70] sm:$0xff]
  %v23 = vld [vmem:[%s0 + $0x78] sm:$0xff]
  %v24 = vld [vmem:[%s0 + $0x80] sm:$0xff]
  %v25 = vld [vmem:[%s0 + $0x88] sm:$0xff]
  %v26 = vld [vmem:[%s0 + $0x90] sm:$0xff]
  %v27 = vld [vmem:[%s0 + $0x98] sm:$0xff]
  %v28 = vld [vmem:[%s0 + $0xa0] sm:$0xff]
  %v29 = vld [vmem:[%s0 + $0xa8] sm:$0xff]
  %v30 = vld [vmem:[%s0 + $0xb0] sm:$0xff]
  %v31 = vld [vmem:[%s0 + $0xb8] sm:$0xff]
  %v32 = vld [vmem:[%s0 + $0xc0] sm:$0xff]
  %v33 = vld [vmem:[%s0 + $0xc8] sm:$0xff]
  %v34 = vld [vmem:[%s0 + $0xd0] sm:$0xff]
  %v35 = vld [vmem:[%s0 + $0xd8] sm:$0xff]
  %v36 = vld [vmem:[%s0 + $0xe0] sm:$0xff]
  %v37 = vld [vmem:[%s0 + $0xe8] sm:$0xff]
  %v38 = vld [vmem:[%s0 + $0xf0] sm:$0xff]
  %v39 = vld [vmem:[%s0 + $0xf8] sm:$0xff]
  %v40 = vld [vmem:[%s0 + $0x100] sm:$0xff]
  %v41 = vld [vmem:[%s0 + $0x108] sm:$0xff]
  %v42 = vld [vmem:[%s0 + $0x110] sm:$0xff]
  %v43 = vld [vmem:[%s0 + $0x118] sm:$0xff]
  %v44 = vld [vmem:[%s0 + $0x120] sm:$0xff]
  %v45 = vld [vmem:[%s0 + $0x128] sm:$0xff]
  %v46 = vld [vmem:[%s0 + $0x130] sm:$0xff]
  %v47 = vld [vmem:[%s0 + $0x138] sm:$0xff]
  %v48 = vld [vmem:[%s0 + $0x140] sm:$0xff]
  %v49 = vld [vmem:[%s0 + $0x148] sm:$0xff]
  %v50 = vld [vmem:[%s0 + $0x150] sm:$0xff]
  %v51 = vld [vmem:[%s0 + $0x158] sm:$0xff]
  %v52 = vld [vmem:[%s0 + $0x160] sm:$0xff]
  %v53 = vld [vmem:[%s0 + $0x168] sm:$0xff]
  %v54 = vld [vmem:[%s0 + $0x170] sm:$0xff]
  %v55 = vld [vmem:[%s0 + $0x178] sm:$0xff]
  %v56 = vld [vmem:[%s0 + $0x180] sm:$0xff]
  %v57 = vld [vmem:[%s0 + $0x188] sm:$0xff]
  %v58 = vld [vmem:[%s0 + $0x190] sm:$0xff]
  %v59 = vld [vmem:[%s0 + $0x198] sm:$0xff]
  %v60 = vld [vmem:[%s0 + $0x1a0] sm:$0xff]
  %v61 = vld [vmem:[%s0 + $0x1a8] sm:$0xff]
  %v62 = vld [vmem:[%s0 + $0x1b0] sm:$0xff]
  %v63 = vld [vmem:[%s0 + $0x1b8] sm:$0xff]
  %v64 = vld [vmem:[%s0 + $0x1c0] sm:$0xff]
  %v65 = vld [vmem:[%s0 + $0x1c8] sm:$0xff]
  %v66 = vld [vmem:[%s0 + $0x1d0] sm:$0xff]
  %v67 = vld [vmem:[%s0 + $0x1d8] sm:$0xff]
  %v68 = vld [vmem:[%s0 + $0x1e0] sm:$0xff]
  %v69 = vld [vmem:[%s0 + $0x1e8] sm:$0xff]
  %v70 = vld [vmem:[%s0 + $0x1f0] sm:$0xff]
  %v71 = vld [vmem:[%s0 + $0x1f8] sm:$0xff]
  %v72 = vmax.f32 %v8, %v24
  %v73 = vmax.f32 %v72, %v40
  %v74 = vmax.f32 %v73, %v56
  %v75 = vmax.f32 %v9, %v25
  %v76 = vmax.f32 %v75, %v41
  %v77 = vmax.f32 %v76, %v57
  %v78 = vmax.f32 %v10, %v26
  %v79 = vmax.f32 %v78, %v42
  %v80 = vmax.f32 %v79, %v58
  %vm81 = vcmask 523264
  %v82 = vsel %vm81, %v11, -inf
  %v83 = vsel %vm81, %v27, -inf
  %v84 = vmax.f32 %v82, %v83
  %v85 = vsel %vm81, %v43, -inf
  %v86 = vmax.f32 %v84, %v85
  %v87 = vsel %vm81, %v59, -inf
  %v88 = vmax.f32 %v86, %v87
  %v89 = vmax.f32 %v12, %v28
  %v90 = vmax.f32 %v89, %v44
  %v91 = vmax.f32 %v90, %v60
  %v92 = vmax.f32 %v13, %v29
  %v93 = vmax.f32 %v92, %v45
  %v94 = vmax.f32 %v93, %v61
  %v95 = vmax.f32 %v14, %v30
  %v96 = vmax.f32 %v95, %v46
  %v97 = vmax.f32 %v96, %v62
  %v98 = vsel %vm81, %v15, -inf
  %v99 = vsel %vm81, %v31, -inf
  %v100 = vmax.f32 %v98, %v99
  %v101 = vsel %vm81, %v47, -inf
  %v102 = vmax.f32 %v100, %v101
  %v103 = vsel %vm81, %v63, -inf
  %v104 = vmax.f32 %v102, %v103
  %v105 = vmax.f32 %v16, %v32
  %v106 = vmax.f32 %v105, %v48
  %v107 = vmax.f32 %v106, %v64
  %v108 = vmax.f32 %v17, %v33
  %v109 = vmax.f32 %v108, %v49
  %v110 = vmax.f32 %v109, %v65
  %v111 = vmax.f32 %v18, %v34
  %v112 = vmax.f32 %v111, %v50
  %v113 = vmax.f32 %v112, %v66
  %v114 = vsel %vm81, %v19, -inf
  %v115 = vsel %vm81, %v35, -inf
  %v116 = vmax.f32 %v114, %v115
  %v117 = vsel %vm81, %v51, -inf
  %v118 = vmax.f32 %v116, %v117
  %v119 = vsel %vm81, %v67, -inf
  %v120 = vmax.f32 %v118, %v119
  %v121 = vmax.f32 %v20, %v36
  %v122 = vmax.f32 %v121, %v52
  %v123 = vmax.f32 %v122, %v68
  %v124 = vmax.f32 %v21, %v37
  %v125 = vmax.f32 %v124, %v53
  %v126 = vmax.f32 %v125, %v69
  %v127 = vmax.f32 %v22, %v38
  %v128 = vmax.f32 %v127, %v54
  %v129 = vmax.f32 %v128, %v70
  %v130 = vsel %vm81, %v23, -inf
  %v131 = vsel %vm81, %v39, -inf
  %v132 = vmax.f32 %v130, %v131
  %v133 = vsel %vm81, %v55, -inf
  %v134 = vmax.f32 %v132, %v133
  %v135 = vsel %vm81, %v71, -inf
  %v136 = vmax.f32 %v134, %v135
  %137 = vst [vmem:[%s1] sm:$0xff] %v74
  %138 = vst [vmem:[%s1 + $0x8] sm:$0xff] %v77
  %139 = vst [vmem:[%s1 + $0x10] sm:$0xff] %v80
  %140 = vst.msk [vmem:[%s1 + $0x18] sm:$0xff] %vm81, %v88
  %141 = vst [vmem:[%s1 + $0x20] sm:$0xff] %v91
  %142 = vst [vmem:[%s1 + $0x28] sm:$0xff] %v94
  %143 = vst [vmem:[%s1 + $0x30] sm:$0xff] %v97
  %144 = vst.msk [vmem:[%s1 + $0x38] sm:$0xff] %vm81, %v104
  %145 = vst [vmem:[%s1 + $0x40] sm:$0xff] %v107
  %146 = vst [vmem:[%s1 + $0x48] sm:$0xff] %v110
  %147 = vst [vmem:[%s1 + $0x50] sm:$0xff] %v113
  %148 = vst.msk [vmem:[%s1 + $0x58] sm:$0xff] %vm81, %v120
  %149 = vst [vmem:[%s1 + $0x60] sm:$0xff] %v123
  %150 = vst [vmem:[%s1 + $0x68] sm:$0xff] %v126
  %151 = vst [vmem:[%s1 + $0x70] sm:$0xff] %v129
  %152 = vst.msk [vmem:[%s1 + $0x78] sm:$0xff] %vm81, %v136
  // Predicated region
  $region6: #{forward.7} parent=0 // pred_check
    _
  $region7: #{forward.7} parent=0 // pred_check_branch
    %154 = sbr.rel (0) target = $region9
  $region8: #{forward.7} parent=0 // pred_region
    _
  $region9: #{forward.7} parent=0 // pred_fallthru
    _
  // Predicated region
  $region10: #{forward.7} parent=0 // pred_check
    _
  $region11: #{forward.7} parent=0 // pred_check_branch
    %156 = sbr.rel (0) target = $region13
  $region12: #{forward.7} parent=0 // pred_region
    _
  $region13: #{forward.7} parent=0 // pred_fallthru
    _

// kernel: forward.8
$region0: #{forward.8}
  #allocation0 [shape = 'u32[]', space=smem, size = 0x4, offset = 0x4, fixed_abs, tag = 'smem constant byte address 0x4 - core index']
  #allocation1 [shape = 'u32[144,128]{1,0:T(1,128)}', space=vmem, size = 0x12000, scoped, tag = 'internal scratch']
  #allocation2 [shape = 'f32[208,128]{1,0:T(8,128)}', space=vmem, size = 0x1a000, scoped, tag = 'scratch operand']
  %s0 = inlined_call_operand.vmem [shape: bf16[208,896], index: 0, kind: input, shape index: {}]
  %s1 = inlined_call_operand.vmem [shape: bf16[896,128], index: 1, kind: input, shape index: {}]
  %s2 = inlined_call_operand.vmem [shape: f32[1,128], index: 2, kind: input, shape index: {}]
  %s3 = inlined_call_operand.vmem [shape: f32[208,128], index: 3, kind: output, shape index: {}]
  %s4 = sld [smem:[#allocation0]]
  $region30: #{forward.8} parent=0
    _
  %s6 = ssub.s32 1, %s4
  %s7 = scalar_select 0, %s6, %s4
  // Predicated region
  $region2: #{forward.8} parent=0 // pred_check
    _
  $region3: #{forward.8} parent=0 // pred_check_branch
    %9 = sbr.rel (0) target = $region5
  $region4: #{forward.8} parent=0 // pred_region
    _
  $region5: #{forward.8} parent=0 // pred_fallthru
    _
  // Predicated region
  $region6: #{forward.8} parent=0 // pred_check
    _
  $region7: #{forward.8} parent=0 // pred_check_branch
    %11 = sbr.rel (0) target = $region9
  $region8: #{forward.8} parent=0 // pred_region
    _
  $region9: #{forward.8} parent=0 // pred_fallthru
    _
  // Predicated region
  $region10: #{forward.8} parent=0 // pred_check
    _
  $region11: #{forward.8} parent=0 // pred_check_branch
    %13 = sbr.rel (0) target = $region13
  $region12: #{forward.8} parent=0 // pred_region
    _
  $region13: #{forward.8} parent=0 // pred_fallthru
    _
  %p15 = scmp.eq.s32.totalorder 0, 0
  // Predicated region
  $region14: #{forward.8} parent=0 // pred_check
    %p16 = pneg %p15
  $region15: #{forward.8} parent=0 // pred_check_branch
    %18 = sbr.rel (%p16) target = $region17
  $region16: #{forward.8} parent=0 // pred_region
    %19 = vst [vmem:[#allocation2] sm:$0xff] 0.0
    %20 = vst [vmem:[#allocation2 + $0x8] sm:$0xff] 0.0
    %21 = vst [vmem:[#allocation2 + $0x10] sm:$0xff] 0.0
    %22 = vst [vmem:[#allocation2 + $0x18] sm:$0xff] 0.0
    %23 = vst [vmem:[#allocation2 + $0x20] sm:$0xff] 0.0
    %24 = vst [vmem:[#allocation2 + $0x28] sm:$0xff] 0.0
    %25 = vst [vmem:[#allocation2 + $0x30] sm:$0xff] 0.0
    %26 = vst [vmem:[#allocation2 + $0x38] sm:$0xff] 0.0
    %27 = vst [vmem:[#allocation2 + $0x40] sm:$0xff] 0.0
    %28 = vst [vmem:[#allocation2 + $0x48] sm:$0xff] 0.0
    %29 = vst [vmem:[#allocation2 + $0x50] sm:$0xff] 0.0
    %30 = vst [vmem:[#allocation2 + $0x58] sm:$0xff] 0.0
    %31 = vst [vmem:[#allocation2 + $0x60] sm:$0xff] 0.0
    %32 = vst [vmem:[#allocation2 + $0x68] sm:$0xff] 0.0
    %33 = vst [vmem:[#allocation2 + $0x70] sm:$0xff] 0.0
    %34 = vst [vmem:[#allocation2 + $0x78] sm:$0xff] 0.0
    %35 = vst [vmem:[#allocation2 + $0x80] sm:$0xff] 0.0
    %36 = vst [vmem:[#allocation2 + $0x88] sm:$0xff] 0.0
    %37 = vst [vmem:[#allocation2 + $0x90] sm:$0xff] 0.0
    %38 = vst [vmem:[#allocation2 + $0x98] sm:$0xff] 0.0
    %39 = vst [vmem:[#allocation2 + $0xa0] sm:$0xff] 0.0
    %40 = vst [vmem:[#allocation2 + $0xa8] sm:$0xff] 0.0
    %41 = vst [vmem:[#allocation2 + $0xb0] sm:$0xff] 0.0
    %42 = vst [vmem:[#allocation2 + $0xb8] sm:$0xff] 0.0
    %43 = vst [vmem:[#allocation2 + $0xc0] sm:$0xff] 0.0
    %44 = vst [vmem:[#allocation2 + $0xc8] sm:$0xff] 0.0
  $region17: #{forward.8} parent=0 // pred_fallthru
    _
  %v45 = vld [vmem:[#allocation2] sm:$0xff]
  %v46 = vld [vmem:[#allocation2 + $0x8] sm:$0xff]
  %v47 = vld [vmem:[#allocation2 + $0x10] sm:$0xff]
  %v48 = vld [vmem:[#allocation2 + $0x18] sm:$0xff]
  %v49 = vld [vmem:[#allocation2 + $0x20] sm:$0xff]
  %v50 = vld [vmem:[#allocation2 + $0x28] sm:$0xff]
  %v51 = vld [vmem:[#allocation2 + $0x30] sm:$0xff]
  %v52 = vld [vmem:[#allocation2 + $0x38] sm:$0xff]
  %v53 = vld [vmem:[#allocation2 + $0x40] sm:$0xff]
  %v54 = vld [vmem:[#allocation2 + $0x48] sm:$0xff]
  %v55 = vld [vmem:[#allocation2 + $0x50] sm:$0xff]
  %v56 = vld [vmem:[#allocation2 + $0x58] sm:$0xff]
  %v57 = vld [vmem:[#allocation2 + $0x60] sm:$0xff]
  %v58 = vld [vmem:[#allocation2 + $0x68] sm:$0xff]
  %v59 = vld [vmem:[#allocation2 + $0x70] sm:$0xff]
  %v60 = vld [vmem:[#allocation2 + $0x78] sm:$0xff]
  %v61 = vld [vmem:[#allocation2 + $0x80] sm:$0xff]
  %v62 = vld [vmem:[#allocation2 + $0x88] sm:$0xff]
  %v63 = vld [vmem:[#allocation2 + $0x90] sm:$0xff]
  %v64 = vld [vmem:[#allocation2 + $0x98] sm:$0xff]
  %v65 = vld [vmem:[#allocation2 + $0xa0] sm:$0xff]
  %v66 = vld [vmem:[#allocation2 + $0xa8] sm:$0xff]
  %v67 = vld [vmem:[#allocation2 + $0xb0] sm:$0xff]
  %v68 = vld [vmem:[#allocation2 + $0xb8] sm:$0xff]
  %v69 = vld [vmem:[#allocation2 + $0xc0] sm:$0xff]
  %v70 = vld [vmem:[#allocation2 + $0xc8] sm:$0xff]
  %v71 = vld [vmem:[%s0] sm:$0xff]
  %v72 = vld [vmem:[%s0 + $0x8] sm:$0xff]
  %v73 = vld [vmem:[%s0 + $0x10] sm:$0xff]
  %v74 = vld [vmem:[%s0 + $0x18] sm:$0xf]
  %v75 = vld [vmem:[%s0 + $0x1c] sm:$0xff]
  %v76 = vld [vmem:[%s0 + $0x24] sm:$0xff]
  %v77 = vld [vmem:[%s0 + $0x2c] sm:$0xff]
  %v78 = vld [vmem:[%s0 + $0x34] sm:$0xf]
  %v79 = vld [vmem:[%s0 + $0x38] sm:$0xff]
  %v80 = vld [vmem:[%s0 + $0x40] sm:$0xff]
  %v81 = vld [vmem:[%s0 + $0x48] sm:$0xff]
  %v82 = vld [vmem:[%s0 + $0x50] sm:$0xf]
  %v83 = vld [vmem:[%s0 + $0x54] sm:$0xff]
  %v84 = vld [vmem:[%s0 + $0x5c] sm:$0xff]
  %v85 = vld [vmem:[%s0 + $0x64] sm:$0xff]
  %v86 = vld [vmem:[%s0 + $0x6c] sm:$0xf]
  %v87 = vld [vmem:[%s0 + $0x70] sm:$0xff]
  %v88 = vld [vmem:[%s0 + $0x78] sm:$0xff]
  %v89 = vld [vmem:[%s0 + $0x80] sm:$0xff]
  %v90 = vld [vmem:[%s0 + $0x88] sm:$0xf]
  %v91 = vld [vmem:[%s0 + $0x8c] sm:$0xff]
  %v92 = vld [vmem:[%s0 + $0x94] sm:$0xff]
  %v93 = vld [vmem:[%s0 + $0x9c] sm:$0xff]
  %v94 = vld [vmem:[%s0 + $0xa4] sm:$0xf]
  %v95 = vld [vmem:[%s0 + $0xa8] sm:$0xff]
  %v96 = vld [vmem:[%s0 + $0xb0] sm:$0xff]
  %v97 = vld [vmem:[%s0 + $0xb8] sm:$0xff]
  %v98 = vld [vmem:[%s0 + $0xc0] sm:$0xf]
  %v99 = vld [vmem:[%s0 + $0xc4] sm:$0xff]
  %v100 = vld [vmem:[%s0 + $0xcc] sm:$0xff]
  %v101 = vld [vmem:[%s0 + $0xd4] sm:$0xff]
  %v102 = vld [vmem:[%s0 + $0xdc] sm:$0xf]
  %v103 = vld [vmem:[%s0 + $0xe0] sm:$0xff]
  %v104 = vld [vmem:[%s0 + $0xe8] sm:$0xff]
  %v105 = vld [vmem:[%s0 + $0xf0] sm:$0xff]
  %v106 = vld [vmem:[%s0 + $0xf8] sm:$0xf]
  %v107 = vld [vmem:[%s0 + $0xfc] sm:$0xff]
  %v108 = vld [vmem:[%s0 + $0x104] sm:$0xff]
  %v109 = vld [vmem:[%s0 + $0x10c] sm:$0xff]
  %v110 = vld [vmem:[%s0 + $0x114] sm:$0xf]
  %v111 = vld [vmem:[%s0 + $0x118] sm:$0xff]
  %v112 = vld [vmem:[%s0 + $0x120] sm:$0xff]
  %v113 = vld [vmem:[%s0 + $0x128] sm:$0xff]
  %v114 = vld [vmem:[%s0 + $0x130] sm:$0xf]
  %v115 = vld [vmem:[%s0 + $0x134] sm:$0xff]
  %v116 = vld [vmem:[%s0 + $0x13c] sm:$0xff]
  %v117 = vld [vmem:[%s0 + $0x144] sm:$0xff]
  %v118 = vld [vmem:[%s0 + $0x14c] sm:$0xf]
  %v119 = vld [vmem:[%s0 + $0x150] sm:$0xff]
  %v120 = vld [vmem:[%s0 + $0x158] sm:$0xff]
  %v121 = vld [vmem:[%s0 + $0x160] sm:$0xff]
  %v122 = vld [vmem:[%s0 + $0x168] sm:$0xf]
  %v123 = vld [vmem:[%s0 + $0x16c] sm:$0xff]
  %v124 = vld [vmem:[%s0 + $0x174] sm:$0xff]
  %v125 = vld [vmem:[%s0 + $0x17c] sm:$0xff]
  %v126 = vld [vmem:[%s0 + $0x184] sm:$0xf]
  %v127 = vld [vmem:[%s0 + $0x188] sm:$0xff]
  %v128 = vld [vmem:[%s0 + $0x190] sm:$0xff]
  %v129 = vld [vmem:[%s0 + $0x198] sm:$0xff]
  %v130 = vld [vmem:[%s0 + $0x1a0] sm:$0xf]
  %v131 = vld [vmem:[%s0 + $0x1a4] sm:$0xff]
  %v132 = vld [vmem:[%s0 + $0x1ac] sm:$0xff]
  %v133 = vld [vmem:[%s0 + $0x1b4] sm:$0xff]
  %v134 = vld [vmem:[%s0 + $0x1bc] sm:$0xf]
  %v135 = vld [vmem:[%s0 + $0x1c0] sm:$0xff]
  %v136 = vld [vmem:[%s0 + $0x1c8] sm:$0xff]
  %v137 = vld [vmem:[%s0 + $0x1d0] sm:$0xff]
  %v138 = vld [vmem:[%s0 + $0x1d8] sm:$0xf]
  %v139 = vld [vmem:[%s0 + $0x1dc] sm:$0xff]
  %v140 = vld [vmem:[%s0 + $0x1e4] sm:$0xff]
  %v141 = vld [vmem:[%s0 + $0x1ec] sm:$0xff]
  %v142 = vld [vmem:[%s0 + $0x1f4] sm:$0xf]
  %v143 = vld [vmem:[%s0 + $0x1f8] sm:$0xff]
  %v144 = vld [vmem:[%s0 + $0x200] sm:$0xff]
  %v145 = vld [vmem:[%s0 + $0x208] sm:$0xff]
  %v146 = vld [vmem:[%s0 + $0x210] sm:$0xf]
  %v147 = vld [vmem:[%s0 + $0x214] sm:$0xff]
  %v148 = vld [vmem:[%s0 + $0x21c] sm:$0xff]
  %v149 = vld [vmem:[%s0 + $0x224] sm:$0xff]
  %v150 = vld [vmem:[%s0 + $0x22c] sm:$0xf]
  %v151 = vld [vmem:[%s0 + $0x230] sm:$0xff]
  %v152 = vld [vmem:[%s0 + $0x238] sm:$0xff]
  %v153 = vld [vmem:[%s0 + $0x240] sm:$0xff]
  %v154 = vld [vmem:[%s0 + $0x248] sm:$0xf]
  %v155 = vld [vmem:[%s0 + $0x24c] sm:$0xff]
  %v156 = vld [vmem:[%s0 + $0x254] sm:$0xff]
  %v157 = vld [vmem:[%s0 + $0x25c] sm:$0xff]
  %v158 = vld [vmem:[%s0 + $0x264] sm:$0xf]
  %v159 = vld [vmem:[%s0 + $0x268] sm:$0xff]
  %v160 = vld [vmem:[%s0 + $0x270] sm:$0xff]
  %v161 = vld [vmem:[%s0 + $0x278] sm:$0xff]
  %v162 = vld [vmem:[%s0 + $0x280] sm:$0xf]
  %v163 = vld [vmem:[%s0 + $0x284] sm:$0xff]
  %v164 = vld [vmem:[%s0 + $0x28c] sm:$0xff]
  %v165 = vld [vmem:[%s0 + $0x294] sm:$0xff]
  %v166 = vld [vmem:[%s0 + $0x29c] sm:$0xf]
  %v167 = vld [vmem:[%s0 + $0x2a0] sm:$0xff]
  %v168 = vld [vmem:[%s0 + $0x2a8] sm:$0xff]
  %v169 = vld [vmem:[%s0 + $0x2b0] sm:$0xff]
  %v170 = vld [vmem:[%s0 + $0x2b8] sm:$0xf]
  %v171 = vld [vmem:[%s0 + $0x2bc] sm:$0xff]
  %v172 = vld [vmem:[%s0 + $0x2c4] sm:$0xff]
  %v173 = vld [vmem:[%s0 + $0x2cc] sm:$0xff]
  %v174 = vld [vmem:[%s0 + $0x2d4] sm:$0xf]
  %v175 = vld [vmem:[%s1] sm:$0xf]
  %v176 = vld [vmem:[%s1 + $0x4] sm:$0xf]
  %v177 = vld [vmem:[%s1 + $0x8] sm:$0xf]
  %v178 = vld [vmem:[%s1 + $0xc] sm:$0xf]
  %v179 = vld [vmem:[%s1 + $0x10] sm:$0xf]
  %v180 = vld [vmem:[%s1 + $0x14] sm:$0xf]
  %v181 = vld [vmem:[%s1 + $0x18] sm:$0xf]
  %v182 = vld [vmem:[%s1 + $0x1c] sm:$0xf]
  %v183 = vld [vmem:[%s1 + $0x20] sm:$0xf]
  %v184 = vld [vmem:[%s1 + $0x24] sm:$0xf]
  %v185 = vld [vmem:[%s1 + $0x28] sm:$0xf]
  %v186 = vld [vmem:[%s1 + $0x2c] sm:$0xf]
  %v187 = vld [vmem:[%s1 + $0x30] sm:$0xf]
  %v188 = vld [vmem:[%s1 + $0x34] sm:$0xf]
  %v189 = vld [vmem:[%s1 + $0x38] sm:$0xf]
  %v190 = vld [vmem:[%s1 + $0x3c] sm:$0xf]
  %v191 = vld [vmem:[%s1 + $0x40] sm:$0xf]
  %v192 = vld [vmem:[%s1 + $0x44] sm:$0xf]
  %v193 = vld [vmem:[%s1 + $0x48] sm:$0xf]
  %v194 = vld [vmem:[%s1 + $0x4c] sm:$0xf]
  %v195 = vld [vmem:[%s1 + $0x50] sm:$0xf]
  %v196 = vld [vmem:[%s1 + $0x54] sm:$0xf]
  %v197 = vld [vmem:[%s1 + $0x58] sm:$0xf]
  %v198 = vld [vmem:[%s1 + $0x5c] sm:$0xf]
  %v199 = vld [vmem:[%s1 + $0x60] sm:$0xf]
  %v200 = vld [vmem:[%s1 + $0x64] sm:$0xf]
  %v201 = vld [vmem:[%s1 + $0x68] sm:$0xf]
  %v202 = vld [vmem:[%s1 + $0x6c] sm:$0xf]
  %v203 = vld [vmem:[%s1 + $0x70] sm:$0xf]
  %v204 = vld [vmem:[%s1 + $0x74] sm:$0xf]
  %v205 = vld [vmem:[%s1 + $0x78] sm:$0xf]
  %v206 = vld [vmem:[%s1 + $0x7c] sm:$0xf]
  %v207 = vld [vmem:[%s1 + $0x80] sm:$0xf]
  %v208 = vld [vmem:[%s1 + $0x84] sm:$0xf]
  %v209 = vld [vmem:[%s1 + $0x88] sm:$0xf]
  %v210 = vld [vmem:[%s1 + $0x8c] sm:$0xf]
  %v211 = vld [vmem:[%s1 + $0x90] sm:$0xf]
  %v212 = vld [vmem:[%s1 + $0x94] sm:$0xf]
  %v213 = vld [vmem:[%s1 + $0x98] sm:$0xf]
  %v214 = vld [vmem:[%s1 + $0x9c] sm:$0xf]
  %v215 = vld [vmem:[%s1 + $0xa0] sm:$0xf]
  %v216 = vld [vmem:[%s1 + $0xa4] sm:$0xf]
  %v217 = vld [vmem:[%s1 + $0xa8] sm:$0xf]
  %v218 = vld [vmem:[%s1 + $0xac] sm:$0xf]
  %v219 = vld [vmem:[%s1 + $0xb0] sm:$0xf]
  %v220 = vld [vmem:[%s1 + $0xb4] sm:$0xf]
  %v221 = vld [vmem:[%s1 + $0xb8] sm:$0xf]
  %v222 = vld [vmem:[%s1 + $0xbc] sm:$0xf]
  %v223 = vld [vmem:[%s1 + $0xc0] sm:$0xf]
  %v224 = vld [vmem:[%s1 + $0xc4] sm:$0xf]
  %v225 = vld [vmem:[%s1 + $0xc8] sm:$0xf]
  %v226 = vld [vmem:[%s1 + $0xcc] sm:$0xf]
  %v227 = vld [vmem:[%s1 + $0xd0] sm:$0xf]
  %v228 = vld [vmem:[%s1 + $0xd4] sm:$0xf]
  %v229 = vld [vmem:[%s1 + $0xd8] sm:$0xf]
  %v230 = vld [vmem:[%s1 + $0xdc] sm:$0xf]
  %v231 = vld [vmem:[%s1 + $0xe0] sm:$0xf]
  %v232 = vld [vmem:[%s1 + $0xe4] sm:$0xf]
  %v233 = vld [vmem:[%s1 + $0xe8] sm:$0xf]
  %v234 = vld [vmem:[%s1 + $0xec] sm:$0xf]
  %v235 = vld [vmem:[%s1 + $0xf0] sm:$0xf]
  %v236 = vld [vmem:[%s1 + $0xf4] sm:$0xf]
  %v237 = vld [vmem:[%s1 + $0xf8] sm:$0xf]
  %v238 = vld [vmem:[%s1 + $0xfc] sm:$0xf]
  %v239 = vld [vmem:[%s1 + $0x100] sm:$0xf]
  %v240 = vld [vmem:[%s1 + $0x104] sm:$0xf]
  %v241 = vld [vmem:[%s1 + $0x108] sm:$0xf]
  %v242 = vld [vmem:[%s1 + $0x10c] sm:$0xf]
  %v243 = vld [vmem:[%s1 + $0x110] sm:$0xf]
  %v244 = vld [vmem:[%s1 + $0x114] sm:$0xf]
  %v245 = vld [vmem:[%s1 + $0x118] sm:$0xf]
  %v246 = vld [vmem:[%s1 + $0x11c] sm:$0xf]
  %v247 = vld [vmem:[%s1 + $0x120] sm:$0xf]
  %v248 = vld [vmem:[%s1 + $0x124] sm:$0xf]
  %v249 = vld [vmem:[%s1 + $0x128] sm:$0xf]
  %v250 = vld [vmem:[%s1 + $0x12c] sm:$0xf]
  %v251 = vld [vmem:[%s1 + $0x130] sm:$0xf]
  %v252 = vld [vmem:[%s1 + $0x134] sm:$0xf]
  %v253 = vld [vmem:[%s1 + $0x138] sm:$0xf]
  %v254 = vld [vmem:[%s1 + $0x13c] sm:$0xf]
  %v255 = vld [vmem:[%s1 + $0x140] sm:$0xf]
  %v256 = vld [vmem:[%s1 + $0x144] sm:$0xf]
  %v257 = vld [vmem:[%s1 + $0x148] sm:$0xf]
  %v258 = vld [vmem:[%s1 + $0x14c] sm:$0xf]
  %v259 = vld [vmem:[%s1 + $0x150] sm:$0xf]
  %v260 = vld [vmem:[%s1 + $0x154] sm:$0xf]
  %v261 = vld [vmem:[%s1 + $0x158] sm:$0xf]
  %v262 = vld [vmem:[%s1 + $0x15c] sm:$0xf]
  %v263 = vld [vmem:[%s1 + $0x160] sm:$0xf]
  %v264 = vld [vmem:[%s1 + $0x164] sm:$0xf]
  %v265 = vld [vmem:[%s1 + $0x168] sm:$0xf]
  %v266 = vld [vmem:[%s1 + $0x16c] sm:$0xf]
  %v267 = vld [vmem:[%s1 + $0x170] sm:$0xf]
  %v268 = vld [vmem:[%s1 + $0x174] sm:$0xf]
  %v269 = vld [vmem:[%s1 + $0x178] sm:$0xf]
  %v270 = vld [vmem:[%s1 + $0x17c] sm:$0xf]
  %v271 = vld [vmem:[%s1 + $0x180] sm:$0xf]
  %v272 = vld [vmem:[%s1 + $0x184] sm:$0xf]
  %v273 = vld [vmem:[%s1 + $0x188] sm:$0xf]
  %v274 = vld [vmem:[%s1 + $0x18c] sm:$0xf]
  %v275 = vld [vmem:[%s1 + $0x190] sm:$0xf]
  %v276 = vld [vmem:[%s1 + $0x194] sm:$0xf]
  %v277 = vld [vmem:[%s1 + $0x198] sm:$0xf]
  %v278 = vld [vmem:[%s1 + $0x19c] sm:$0xf]
  %v279 = vld [vmem:[%s1 + $0x1a0] sm:$0xf]
  %v280 = vld [vmem:[%s1 + $0x1a4] sm:$0xf]
  %v281 = vld [vmem:[%s1 + $0x1a8] sm:$0xf]
  %v282 = vld [vmem:[%s1 + $0x1ac] sm:$0xf]
  %v283 = vld [vmem:[%s1 + $0x1b0] sm:$0xf]
  %v284 = vld [vmem:[%s1 + $0x1b4] sm:$0xf]
  %v285 = vld [vmem:[%s1 + $0x1b8] sm:$0xf]
  %v286 = vld [vmem:[%s1 + $0x1bc] sm:$0xf]
  %v391 = vunpack.c.l.b16 %v71
  %v392 = vunpack.c.h.b16 %v71
  %v393 = vunpack.c.l.b16 %v72
  %v394 = vunpack.c.h.b16 %v72
  %v395 = vunpack.c.l.b16 %v73
  %v396 = vunpack.c.h.b16 %v73
  %v397 = vunpack.c.l.b16 %v74
  %v398 = vunpack.c.l.b16 %v75
  %v399 = vunpack.c.h.b16 %v75
  %v400 = vunpack.c.l.b16 %v76
  %v401 = vunpack.c.h.b16 %v76
  %v402 = vunpack.c.l.b16 %v77
  %v403 = vunpack.c.h.b16 %v77
  %v404 = vunpack.c.l.b16 %v78
  %v405 = vunpack.c.l.b16 %v79
  %v406 = vunpack.c.h.b16 %v79
  %v407 = vunpack.c.l.b16 %v80
  %v408 = vunpack.c.h.b16 %v80
  %v409 = vunpack.c.l.b16 %v81
  %v410 = vunpack.c.h.b16 %v81
  %v411 = vunpack.c.l.b16 %v82
  %v412 = vunpack.c.l.b16 %v83
  %v413 = vunpack.c.h.b16 %v83
  %v414 = vunpack.c.l.b16 %v84
  %v415 = vunpack.c.h.b16 %v84
  %v416 = vunpack.c.l.b16 %v85
  %v417 = vunpack.c.h.b16 %v85
  %v418 = vunpack.c.l.b16 %v86
  %v419 = vunpack.c.l.b16 %v87
  %v420 = vunpack.c.h.b16 %v87
  %v421 = vunpack.c.l.b16 %v88
  %v422 = vunpack.c.h.b16 %v88
  %v423 = vunpack.c.l.b16 %v89
  %v424 = vunpack.c.h.b16 %v89
  %v425 = vunpack.c.l.b16 %v90
  %v426 = vunpack.c.l.b16 %v91
  %v427 = vunpack.c.h.b16 %v91
  %v428 = vunpack.c.l.b16 %v92
  %v429 = vunpack.c.h.b16 %v92
  %v430 = vunpack.c.l.b16 %v93
  %v431 = vunpack.c.h.b16 %v93
  %v432 = vunpack.c.l.b16 %v94
  %v433 = vunpack.c.l.b16 %v95
  %v434 = vunpack.c.h.b16 %v95
  %v435 = vunpack.c.l.b16 %v96
  %v436 = vunpack.c.h.b16 %v96
  %v437 = vunpack.c.l.b16 %v97
  %v438 = vunpack.c.h.b16 %v97
  %v439 = vunpack.c.l.b16 %v98
  %v440 = vunpack.c.l.b16 %v99
  %v441 = vunpack.c.h.b16 %v99
  %v442 = vunpack.c.l.b16 %v100
  %v443 = vunpack.c.h.b16 %v100
  %v444 = vunpack.c.l.b16 %v101
  %v445 = vunpack.c.h.b16 %v101
  %v446 = vunpack.c.l.b16 %v102
  %v447 = vunpack.c.l.b16 %v103
  %v448 = vunpack.c.h.b16 %v103
  %v449 = vunpack.c.l.b16 %v104
  %v450 = vunpack.c.h.b16 %v104
  %v451 = vunpack.c.l.b16 %v105
  %v452 = vunpack.c.h.b16 %v105
  %v453 = vunpack.c.l.b16 %v106
  %v454 = vunpack.c.l.b16 %v107
  %v455 = vunpack.c.h.b16 %v107
  %v456 = vunpack.c.l.b16 %v108
  %v457 = vunpack.c.h.b16 %v108
  %v458 = vunpack.c.l.b16 %v109
  %v459 = vunpack.c.h.b16 %v109
  %v460 = vunpack.c.l.b16 %v110
  %v461 = vunpack.c.l.b16 %v111
  %v462 = vunpack.c.h.b16 %v111
  %v463 = vunpack.c.l.b16 %v112
  %v464 = vunpack.c.h.b16 %v112
  %v465 = vunpack.c.l.b16 %v113
  %v466 = vunpack.c.h.b16 %v113
  %v467 = vunpack.c.l.b16 %v114
  %v468 = vunpack.c.l.b16 %v115
  %v469 = vunpack.c.h.b16 %v115
  %v470 = vunpack.c.l.b16 %v116
  %v471 = vunpack.c.h.b16 %v116
  %v472 = vunpack.c.l.b16 %v117
  %v473 = vunpack.c.h.b16 %v117
  %v474 = vunpack.c.l.b16 %v118
  %v475 = vunpack.c.l.b16 %v119
  %v476 = vunpack.c.h.b16 %v119
  %v477 = vunpack.c.l.b16 %v120
  %v478 = vunpack.c.h.b16 %v120
  %v479 = vunpack.c.l.b16 %v121
  %v480 = vunpack.c.h.b16 %v121
  %v481 = vunpack.c.l.b16 %v122
  %v482 = vunpack.c.l.b16 %v123
  %v483 = vunpack.c.h.b16 %v123
  %v484 = vunpack.c.l.b16 %v124
  %v485 = vunpack.c.h.b16 %v124
  %v486 = vunpack.c.l.b16 %v125
  %v487 = vunpack.c.h.b16 %v125
  %v488 = vunpack.c.l.b16 %v126
  %v489 = vunpack.c.l.b16 %v127
  %v490 = vunpack.c.h.b16 %v127
  %v491 = vunpack.c.l.b16 %v128
  %v492 = vunpack.c.h.b16 %v128
  %v493 = vunpack.c.l.b16 %v129
  %v494 = vunpack.c.h.b16 %v129
  %v495 = vunpack.c.l.b16 %v130
  %v496 = vunpack.c.l.b16 %v131
  %v497 = vunpack.c.h.b16 %v131
  %v498 = vunpack.c.l.b16 %v132
  %v499 = vunpack.c.h.b16 %v132
  %v500 = vunpack.c.l.b16 %v133
  %v501 = vunpack.c.h.b16 %v133
  %v502 = vunpack.c.l.b16 %v134
  %v503 = vunpack.c.l.b16 %v135
  %v504 = vunpack.c.h.b16 %v135
  %v505 = vunpack.c.l.b16 %v136
  %v506 = vunpack.c.h.b16 %v136
  %v507 = vunpack.c.l.b16 %v137
  %v508 = vunpack.c.h.b16 %v137
  %v509 = vunpack.c.l.b16 %v138
  %v510 = vunpack.c.l.b16 %v139
  %v511 = vunpack.c.h.b16 %v139
  %v512 = vunpack.c.l.b16 %v140
  %v513 = vunpack.c.h.b16 %v140
  %v514 = vunpack.c.l.b16 %v141
  %v515 = vunpack.c.h.b16 %v141
  %v516 = vunpack.c.l.b16 %v142
  %v517 = vunpack.c.l.b16 %v143
  %v518 = vunpack.c.h.b16 %v143
  %v519 = vunpack.c.l.b16 %v144
  %v520 = vunpack.c.h.b16 %v144
  %v521 = vunpack.c.l.b16 %v145
  %v522 = vunpack.c.h.b16 %v145
  %v523 = vunpack.c.l.b16 %v146
  %v524 = vunpack.c.l.b16 %v147
  %v525 = vunpack.c.h.b16 %v147
  %v526 = vunpack.c.l.b16 %v148
  %v527 = vunpack.c.h.b16 %v148
  %v528 = vunpack.c.l.b16 %v149
  %v529 = vunpack.c.h.b16 %v149
  %v530 = vunpack.c.l.b16 %v150
  %v531 = vunpack.c.l.b16 %v151
  %v532 = vunpack.c.h.b16 %v151
  %v533 = vunpack.c.l.b16 %v152
  %v534 = vunpack.c.h.b16 %v152
  %v535 = vunpack.c.l.b16 %v153
  %v536 = vunpack.c.h.b16 %v153
  %v537 = vunpack.c.l.b16 %v154
  %v538 = vunpack.c.l.b16 %v155
  %v539 = vunpack.c.h.b16 %v155
  %v540 = vunpack.c.l.b16 %v156
  %v541 = vunpack.c.h.b16 %v156
  %v542 = vunpack.c.l.b16 %v157
  %v543 = vunpack.c.h.b16 %v157
  %v544 = vunpack.c.l.b16 %v158
  %v545 = vunpack.c.l.b16 %v159
  %v546 = vunpack.c.h.b16 %v159
  %v547 = vunpack.c.l.b16 %v160
  %v548 = vunpack.c.h.b16 %v160
  %v549 = vunpack.c.l.b16 %v161
  %v550 = vunpack.c.h.b16 %v161
  %v551 = vunpack.c.l.b16 %v162
  %v552 = vunpack.c.l.b16 %v163
  %v553 = vunpack.c.h.b16 %v163
  %v554 = vunpack.c.l.b16 %v164
  %v555 = vunpack.c.h.b16 %v164
  %v556 = vunpack.c.l.b16 %v165
  %v557 = vunpack.c.h.b16 %v165
  %v558 = vunpack.c.l.b16 %v166
  %v559 = vunpack.c.l.b16 %v167
  %v560 = vunpack.c.h.b16 %v167
  %v561 = vunpack.c.l.b16 %v168
  %v562 = vunpack.c.h.b16 %v168
  %v563 = vunpack.c.l.b16 %v169
  %v564 = vunpack.c.h.b16 %v169
  %v565 = vunpack.c.l.b16 %v170
  %v566 = vunpack.c.l.b16 %v171
  %v567 = vunpack.c.h.b16 %v171
  %v568 = vunpack.c.l.b16 %v172
  %v569 = vunpack.c.h.b16 %v172
  %v570 = vunpack.c.l.b16 %v173
  %v571 = vunpack.c.h.b16 %v173
  %v572 = vunpack.c.l.b16 %v174
  %v573 = vpack.c.b16 %v398, %v391
  %v574 = vpack.c.b16 %v399, %v392
  %v575 = vpack.c.b16 %v400, %v393
  %v576 = vpack.c.b16 %v401, %v394
  %v577 = vpack.c.b16 %v402, %v395
  %v578 = vpack.c.b16 %v403, %v396
  %v579 = vpack.c.b16 %v404, %v397
  %v580 = vpack.c.b16 %v412, %v405
  %v581 = vpack.c.b16 %v413, %v406
  %v582 = vpack.c.b16 %v414, %v407
  %v583 = vpack.c.b16 %v415, %v408
  %v584 = vpack.c.b16 %v416, %v409
  %v585 = vpack.c.b16 %v417, %v410
  %v586 = vpack.c.b16 %v418, %v411
  %v587 = vpack.c.b16 %v426, %v419
  %v588 = vpack.c.b16 %v427, %v420
  %v589 = vpack.c.b16 %v428, %v421
  %v590 = vpack.c.b16 %v429, %v422
  %v591 = vpack.c.b16 %v430, %v423
  %v592 = vpack.c.b16 %v431, %v424
  %v593 = vpack.c.b16 %v432, %v425
  %v594 = vpack.c.b16 %v440, %v433
  %v595 = vpack.c.b16 %v441, %v434
  %v596 = vpack.c.b16 %v442, %v435
  %v597 = vpack.c.b16 %v443, %v436
  %v598 = vpack.c.b16 %v444, %v437
  %v599 = vpack.c.b16 %v445, %v438
  %v600 = vpack.c.b16 %v446, %v439
  %v601 = vpack.c.b16 %v454, %v447
  %v602 = vpack.c.b16 %v455, %v448
  %v603 = vpack.c.b16 %v456, %v449
  %v604 = vpack.c.b16 %v457, %v450
  %v605 = vpack.c.b16 %v458, %v451
  %v606 = vpack.c.b16 %v459, %v452
  %v607 = vpack.c.b16 %v460, %v453
  %v608 = vpack.c.b16 %v468, %v461
  %v609 = vpack.c.b16 %v469, %v462
  %v610 = vpack.c.b16 %v470, %v463
  %v611 = vpack.c.b16 %v471, %v464
  %v612 = vpack.c.b16 %v472, %v465
  %v613 = vpack.c.b16 %v473, %v466
  %v614 = vpack.c.b16 %v474, %v467
  %v615 = vpack.c.b16 %v482, %v475
  %v616 = vpack.c.b16 %v483, %v476
  %v617 = vpack.c.b16 %v484, %v477
  %v618 = vpack.c.b16 %v485, %v478
  %v619 = vpack.c.b16 %v486, %v479
  %v620 = vpack.c.b16 %v487, %v480
  %v621 = vpack.c.b16 %v488, %v481
  %v622 = vpack.c.b16 %v496, %v489
  %v623 = vpack.c.b16 %v497, %v490
  %v624 = vpack.c.b16 %v498, %v491
  %v625 = vpack.c.b16 %v499, %v492
  %v626 = vpack.c.b16 %v500, %v493
  %v627 = vpack.c.b16 %v501, %v494
  %v628 = vpack.c.b16 %v502, %v495
  %v629 = vpack.c.b16 %v510, %v503
  %v630 = vpack.c.b16 %v511, %v504
  %v631 = vpack.c.b16 %v512, %v505
  %v632 = vpack.c.b16 %v513, %v506
  %v633 = vpack.c.b16 %v514, %v507
  %v634 = vpack.c.b16 %v515, %v508
  %v635 = vpack.c.b16 %v516, %v509
  %v636 = vpack.c.b16 %v524, %v517
  %v637 = vpack.c.b16 %v525, %v518
  %v638 = vpack.c.b16 %v526, %v519
  %v639 = vpack.c.b16 %v527, %v520
  %v640 = vpack.c.b16 %v528, %v521
  %v641 = vpack.c.b16 %v529, %v522
  %v642 = vpack.c.b16 %v530, %v523
  %v643 = vpack.c.b16 %v538, %v531
  %v644 = vpack.c.b16 %v539, %v532
  %v645 = vpack.c.b16 %v540, %v533
  %v646 = vpack.c.b16 %v541, %v534
  %v647 = vpack.c.b16 %v542, %v535
  %v648 = vpack.c.b16 %v543, %v536
  %v649 = vpack.c.b16 %v544, %v537
  %v650 = vpack.c.b16 %v552, %v545
  %v651 = vpack.c.b16 %v553, %v546
  %v652 = vpack.c.b16 %v554, %v547
  %v653 = vpack.c.b16 %v555, %v548
  %v654 = vpack.c.b16 %v556, %v549
  %v655 = vpack.c.b16 %v557, %v550
  %v656 = vpack.c.b16 %v558, %v551
  %v657 = vpack.c.b16 %v566, %v559
  %v658 = vpack.c.b16 %v567, %v560
  %v659 = vpack.c.b16 %v568, %v561
  %v660 = vpack.c.b16 %v569, %v562
  %v661 = vpack.c.b16 %v570, %v563
  %v662 = vpack.c.b16 %v571, %v564
  %v663 = vpack.c.b16 %v572, %v565
  %v867 = vunpack.c.l.b16 %v175
  %v868 = vunpack.c.l.b16 %v176
  %v869 = vunpack.c.l.b16 %v177
  %v870 = vunpack.c.l.b16 %v178
  %v871 = vunpack.c.l.b16 %v179
  %v872 = vunpack.c.l.b16 %v180
  %v873 = vunpack.c.l.b16 %v181
  %v874 = vunpack.c.l.b16 %v182
  %v875 = vunpack.c.l.b16 %v183
  %v876 = vunpack.c.l.b16 %v184
  %v877 = vunpack.c.l.b16 %v185
  %v878 = vunpack.c.l.b16 %v186
  %v879 = vunpack.c.l.b16 %v187
  %v880 = vunpack.c.l.b16 %v188
  %v881 = vunpack.c.l.b16 %v189
  %v882 = vunpack.c.l.b16 %v190
  %v883 = vunpack.c.l.b16 %v191
  %v884 = vunpack.c.l.b16 %v192
  %v885 = vunpack.c.l.b16 %v193
  %v886 = vunpack.c.l.b16 %v194
  %v887 = vunpack.c.l.b16 %v195
  %v888 = vunpack.c.l.b16 %v196
  %v889 = vunpack.c.l.b16 %v197
  %v890 = vunpack.c.l.b16 %v198
  %v891 = vunpack.c.l.b16 %v199
  %v892 = vunpack.c.l.b16 %v200
  %v893 = vunpack.c.l.b16 %v201
  %v894 = vunpack.c.l.b16 %v202
  %v895 = vunpack.c.l.b16 %v203
  %v896 = vunpack.c.l.b16 %v204
  %v897 = vunpack.c.l.b16 %v205
  %v898 = vunpack.c.l.b16 %v206
  %v899 = vunpack.c.l.b16 %v207
  %v900 = vunpack.c.l.b16 %v208
  %v901 = vunpack.c.l.b16 %v209
  %v902 = vunpack.c.l.b16 %v210
  %v903 = vunpack.c.l.b16 %v211
  %v904 = vunpack.c.l.b16 %v212
  %v905 = vunpack.c.l.b16 %v213
  %v906 = vunpack.c.l.b16 %v214
  %v907 = vunpack.c.l.b16 %v215
  %v908 = vunpack.c.l.b16 %v216
  %v909 = vunpack.c.l.b16 %v217
  %v910 = vunpack.c.l.b16 %v218
  %v911 = vunpack.c.l.b16 %v219
  %v912 = vunpack.c.l.b16 %v220
  %v913 = vunpack.c.l.b16 %v221
  %v914 = vunpack.c.l.b16 %v222
  %v915 = vunpack.c.l.b16 %v223
  %v916 = vunpack.c.l.b16 %v224
  %v917 = vunpack.c.l.b16 %v225
  %v918 = vunpack.c.l.b16 %v226
  %v919 = vunpack.c.l.b16 %v227
  %v920 = vunpack.c.l.b16 %v228
  %v921 = vunpack.c.l.b16 %v229
  %v922 = vunpack.c.l.b16 %v230
  %v923 = vunpack.c.l.b16 %v231
  %v924 = vunpack.c.l.b16 %v232
  %v925 = vunpack.c.l.b16 %v233
  %v926 = vunpack.c.l.b16 %v234
  %v927 = vunpack.c.l.b16 %v235
  %v928 = vunpack.c.l.b16 %v236
  %v929 = vunpack.c.l.b16 %v237
  %v930 = vunpack.c.l.b16 %v238
  %v931 = vunpack.c.l.b16 %v239
  %v932 = vunpack.c.l.b16 %v240
  %v933 = vunpack.c.l.b16 %v241
  %v934 = vunpack.c.l.b16 %v242
  %v935 = vunpack.c.l.b16 %v243
  %v936 = vunpack.c.l.b16 %v244
  %v937 = vunpack.c.l.b16 %v245
  %v938 = vunpack.c.l.b16 %v246
  %v939 = vunpack.c.l.b16 %v247
  %v940 = vunpack.c.l.b16 %v248
  %v941 = vunpack.c.l.b16 %v249
  %v942 = vunpack.c.l.b16 %v250
  %v943 = vunpack.c.l.b16 %v251
  %v944 = vunpack.c.l.b16 %v252
  %v945 = vunpack.c.l.b16 %v253
  %v946 = vunpack.c.l.b16 %v254
  %v947 = vunpack.c.l.b16 %v255
  %v948 = vunpack.c.l.b16 %v256
  %v949 = vunpack.c.l.b16 %v257
  %v950 = vunpack.c.l.b16 %v258
  %v951 = vunpack.c.l.b16 %v259
  %v952 = vunpack.c.l.b16 %v260
  %v953 = vunpack.c.l.b16 %v261
  %v954 = vunpack.c.l.b16 %v262
  %v955 = vunpack.c.l.b16 %v263
  %v956 = vunpack.c.l.b16 %v264
  %v957 = vunpack.c.l.b16 %v265
  %v958 = vunpack.c.l.b16 %v266
  %v959 = vunpack.c.l.b16 %v267
  %v960 = vunpack.c.l.b16 %v268
  %v961 = vunpack.c.l.b16 %v269
  %v962 = vunpack.c.l.b16 %v270
  %v963 = vunpack.c.l.b16 %v271
  %v964 = vunpack.c.l.b16 %v272
  %v965 = vunpack.c.l.b16 %v273
  %v966 = vunpack.c.l.b16 %v274
  %v967 = vunpack.c.l.b16 %v275
  %v968 = vunpack.c.l.b16 %v276
  %v969 = vunpack.c.l.b16 %v277
  %v970 = vunpack.c.l.b16 %v278
  %v971 = vunpack.c.l.b16 %v279
  %v972 = vunpack.c.l.b16 %v280
  %v973 = vunpack.c.l.b16 %v281
  %v974 = vunpack.c.l.b16 %v282
  %v975 = vunpack.c.l.b16 %v283
  %v976 = vunpack.c.l.b16 %v284
  %v977 = vunpack.c.l.b16 %v285
  %v978 = vunpack.c.l.b16 %v286
  %v979 = vpack.c.b16 %v868, %v867
  %v980 = vpack.c.b16 %v870, %v869
  %v981 = vpack.c.b16 %v872, %v871
  %v982 = vpack.c.b16 %v874, %v873
  %v983 = vpack.c.b16 %v876, %v875
  %v984 = vpack.c.b16 %v878, %v877
  %v985 = vpack.c.b16 %v880, %v879
  %v986 = vpack.c.b16 %v882, %v881
  %v987 = vpack.c.b16 %v884, %v883
  %v988 = vpack.c.b16 %v886, %v885
  %v989 = vpack.c.b16 %v888, %v887
  %v990 = vpack.c.b16 %v890, %v889
  %v991 = vpack.c.b16 %v892, %v891
  %v992 = vpack.c.b16 %v894, %v893
  %v993 = vpack.c.b16 %v896, %v895
  %v994 = vpack.c.b16 %v898, %v897
  %v995 = vpack.c.b16 %v900, %v899
  %v996 = vpack.c.b16 %v902, %v901
  %v997 = vpack.c.b16 %v904, %v903
  %v998 = vpack.c.b16 %v906, %v905
  %v999 = vpack.c.b16 %v908, %v907
  %v1000 = vpack.c.b16 %v910, %v909
  %v1001 = vpack.c.b16 %v912, %v911
  %v1002 = vpack.c.b16 %v914, %v913
  %v1003 = vpack.c.b16 %v916, %v915
  %v1004 = vpack.c.b16 %v918, %v917
  %v1005 = vpack.c.b16 %v920, %v919
  %v1006 = vpack.c.b16 %v922, %v921
  %v1007 = vpack.c.b16 %v924, %v923
  %v1008 = vpack.c.b16 %v926, %v925
  %v1009 = vpack.c.b16 %v928, %v927
  %v1010 = vpack.c.b16 %v930, %v929
  %v1011 = vpack.c.b16 %v932, %v931
  %v1012 = vpack.c.b16 %v934, %v933
  %v1013 = vpack.c.b16 %v936, %v935
  %v1014 = vpack.c.b16 %v938, %v937
  %v1015 = vpack.c.b16 %v940, %v939
  %v1016 = vpack.c.b16 %v942, %v941
  %v1017 = vpack.c.b16 %v944, %v943
  %v1018 = vpack.c.b16 %v946, %v945
  %v1019 = vpack.c.b16 %v948, %v947
  %v1020 = vpack.c.b16 %v950, %v949
  %v1021 = vpack.c.b16 %v952, %v951
  %v1022 = vpack.c.b16 %v954, %v953
  %v1023 = vpack.c.b16 %v956, %v955
  %v1024 = vpack.c.b16 %v958, %v957
  %v1025 = vpack.c.b16 %v960, %v959
  %v1026 = vpack.c.b16 %v962, %v961
  %v1027 = vpack.c.b16 %v964, %v963
  %v1028 = vpack.c.b16 %v966, %v965
  %v1029 = vpack.c.b16 %v968, %v967
  %v1030 = vpack.c.b16 %v970, %v969
  %v1031 = vpack.c.b16 %v972, %v971
  %v1032 = vpack.c.b16 %v974, %v973
  %v1033 = vpack.c.b16 %v976, %v975
  %v1034 = vpack.c.b16 %v978, %v977
  %1091 = vmatprep.subr.bf16.mxu0 0
  %1092 = vmatpush1.bf16.msra.mxu0 %v979
  %1093 = vmatprep.subr.bf16.mxu0 0
  %1094 = vmatpush1.bf16.msra.mxu0 %v980
  %1095 = vmatprep.subr.bf16.mxu0 0
  %1096 = vmatpush1.bf16.msra.mxu0 %v981
  %1097 = vmatprep.subr.bf16.mxu0 0
  %1098 = vmatpush1.bf16.msra.mxu0 %v982
  %1099 = vmatprep.subr.bf16.mxu0 0
  %1100 = vmatpush1.bf16.msra.mxu0 %v983
  %1101 = vmatprep.subr.bf16.mxu0 0
  %1102 = vmatpush1.bf16.msra.mxu0 %v984
  %1103 = vmatprep.subr.bf16.mxu0 0
  %1104 = vmatpush1.bf16.msra.mxu0 %v985
  %1105 = vmatprep.subr.bf16.mxu0 0
  %1106 = vmatpush1.bf16.msra.mxu0 %v986
  %1107 = vmatprep.subr.bf16.mxu0 0
  %1108 = vmatpush1.bf16.msra.mxu0 %v987
  %1109 = vmatprep.subr.bf16.mxu0 0
  %1110 = vmatpush1.bf16.msra.mxu0 %v988
  %1111 = vmatprep.subr.bf16.mxu0 0
  %1112 = vmatpush1.bf16.msra.mxu0 %v989
  %1113 = vmatprep.subr.bf16.mxu0 0
  %1114 = vmatpush1.bf16.msra.mxu0 %v990
  %1115 = vmatprep.subr.bf16.mxu0 0
  %1116 = vmatpush1.bf16.msra.mxu0 %v991
  %1117 = vmatprep.subr.bf16.mxu0 0
  %1118 = vmatpush1.bf16.msra.mxu0 %v992
  %1119 = vmatprep.subr.bf16.mxu0 0
  %1120 = vmatpush1.bf16.msra.mxu0 %v993
  %1121 = vmatprep.subr.bf16.mxu0 0
  %1122 = vmatpush1.bf16.msra.mxu0 %v994
  %1123 = vmatprep.mubr.bf16.mxu0 %v574
  %1124 = vmatmul.mubr.bf16.gmra.mrb[0].mxu0 %v573
  %v1125 = vpop.f32.mrb[0].mxu0
  %v1126 = vadd.f32 0.0, %v1125
  %v1127 = vpop.f32.mrb[0].mxu0
  %v1128 = vpop.f32.mrb[0].mxu0
  %v1129 = vadd.f32 0.0, %v1128
  %v1130 = vpop.f32.mrb[0].mxu0
  %1131 = vmatprep.mubr.bf16.mxu0 %v581
  %1132 = vmatmul.mubr.bf16.gmra.mrb[0].mxu0 %v580
  %v1133 = vpop.f32.mrb[0].mxu0
  %v1134 = vadd.f32 0.0, %v1133
  %v1135 = vpop.f32.mrb[0].mxu0
  %v1136 = vpop.f32.mrb[0].mxu0
  %v1137 = vadd.f32 0.0, %v1136
  %v1138 = vpop.f32.mrb[0].mxu0
  %1139 = vmatprep.mubr.bf16.mxu0 %v588
  %1140 = vmatmul.mubr.bf16.gmra.mrb[0].mxu0 %v587
  %v1141 = vpop.f32.mrb[0].mxu0
  %v1142 = vadd.f32 0.0, %v1141
  %v1143 = vpop.f32.mrb[0].mxu0
  %v1144 = vpop.f32.mrb[0].mxu0
  %v1145 = vadd.f32 0.0, %v1144
  %v1146 = vpop.f32.mrb[0].mxu0
  %1147 = vmatprep.mubr.bf16.mxu0 %v595
  %1148 = vmatmul.mubr.bf16.gmra.mrb[0].mxu0 %v594
  %v1149 = vpop.f32.mrb[0].mxu0
  %v1150 = vadd.f32 0.0, %v1149
  %v1151 = vpop.f32.mrb[0].mxu0
  %v1152 = vpop.f32.mrb[0].mxu0
  %v1153 = vadd.f32 0.0, %v1152
  %v1154 = vpop.f32.mrb[0].mxu0
  %1155 = vmatprep.mubr.bf16.mxu0 %v602
  %1156 = vmatmul.mubr.bf16.gmra.mrb[0].mxu0 %v601
  %v1157 = vpop.f32.mrb[0].mxu0
  %v1158 = vadd.f32 0.0, %v1157
  %v1159 = vpop.f32.mrb[0].mxu0
  %v1160 = vpop.f32.mrb[0].mxu0
  %v1161 = vadd.f32 0.0, %v1160
  %v1162 = vpop.f32.mrb[0].mxu0
  %1163 = vmatprep.mubr.bf16.mxu0 %v609
  %1164 = vmatmul.mubr.bf16.gmra.mrb[0].mxu0 %v608
  %v1165 = vpop.f32.mrb[0].mxu0
  %v1166 = vadd.f32 0.0, %v1165
  %v1167 = vpop.f32.mrb[0].mxu0
  %v1168 = vpop.f32.mrb[0].mxu0
  %v1169 = vadd.f32 0.0, %v1168
  %v1170 = vpop.f32.mrb[0].mxu0
  %1171 = vmatprep.mubr.bf16.mxu0 %v616
  %1172 = vmatmul.mubr.bf16.gmra.mrb[0].mxu0 %v615
  %v1173 = vpop.f32.mrb[0].mxu0
  %v1174 = vadd.f32 0.0, %v1173
  %v1175 = vpop.f32.mrb[0].mxu0
  %v1176 = vpop.f32.mrb[0].mxu0
  %v1177 = vadd.f32 0.0, %v1176
  %v1178 = vpop.f32.mrb[0].mxu0
  %1179 = vmatprep.mubr.bf16.mxu0 %v623
  %1180 = vmatmul.mubr.bf16.gmra.mrb[0].mxu0 %v622
  %v1181 = vpop.f32.mrb[0].mxu0
  %v1182 = vadd.f32 0.0, %v1181
  %v1183 = vpop.f32.mrb[0].mxu0
  %v1184 = vpop.f32.mrb[0].mxu0
  %v1185 = vadd.f32 0.0, %v1184
  %v1186 = vpop.f32.mrb[0].mxu0
  %1187 = vmatprep.mubr.bf16.mxu0 %v630
  %1188 = vmatmul.mubr.bf16.gmra.mrb[0].mxu0 %v629
  %v1189 = vpop.f32.mrb[0].mxu0
  %v1190 = vadd.f32 0.0, %v1189
  %v1191 = vpop.f32.mrb[0].mxu0
  %v1192 = vpop.f32.mrb[0].mxu0
  %v1193 = vadd.f32 0.0, %v1192
  %v1194 = vpop.f32.mrb[0].mxu0
  %1195 = vmatprep.mubr.bf16.mxu0 %v637
  %1196 = vmatmul.mubr.bf16.gmra.mrb[0].mxu0 %v636
  %v1197 = vpop.f32.mrb[0].mxu0
  %v1198 = vadd.f32 0.0, %v1197
  %v1199 = vpop.f32.mrb[0].mxu0
  %v1200 = vpop.f32.mrb[0].mxu0
  %v1201 = vadd.f32 0.0, %v1200
  %v1202 = vpop.f32.mrb[0].mxu0
  %1203 = vmatprep.mubr.bf16.mxu0 %v644
  %1204 = vmatmul.mubr.bf16.gmra.mrb[0].mxu0 %v643
  %v1205 = vpop.f32.mrb[0].mxu0
  %v1206 = vadd.f32 0.0, %v1205
  %v1207 = vpop.f32.mrb[0].mxu0
  %v1208 = vpop.f32.mrb[0].mxu0
  %v1209 = vadd.f32 0.0, %v1208
  %v1210 = vpop.f32.mrb[0].mxu0
  %1211 = vmatprep.mubr.bf16.mxu0 %v651
  %1212 = vmatmul.mubr.bf16.gmra.mrb[0].mxu0 %v650
  %v1213 = vpop.f32.mrb[0].mxu0
  %v1214 = vadd.f32 0.0, %v1213
  %v1215 = vpop.f32.mrb[0].mxu0
  %v1216 = vpop.f32.mrb[0].mxu0
  %v1217 = vadd.f32 0.0, %v1216
  %v1218 = vpop.f32.mrb[0].mxu0
  %1219 = vmatprep.mubr.bf16.mxu0 %v658
  %1220 = vmatmul.mubr.bf16.gmra.mrb[0].mxu0 %v657
  %v1221 = vpop.f32.mrb[0].mxu0
  %v1222 = vadd.f32 0.0, %v1221
  %v1223 = vpop.f32.mrb[0].mxu0
  %v1224 = vpop.f32.mrb[0].mxu0
  %v1225 = vadd.f32 0.0, %v1224
  %v1226 = vpop.f32.mrb[0].mxu0
  %1227 = vdwg.mxu0
  %1228 = vmatprep.subr.bf16.mxu0 0
  %1229 = vmatpush1.bf16.msra.mxu0 %v995
  %1230 = vmatprep.subr.bf16.mxu0 0
  %1231 = vmatpush1.bf16.msra.mxu0 %v996
  %1232 = vmatprep.subr.bf16.mxu0 0
  %1233 = vmatpush1.bf16.msra.mxu0 %v997
  %1234 = vmatprep.subr.bf16.mxu0 0
  %1235 = vmatpush1.bf16.msra.mxu0 %v998
  %1236 = vmatprep.subr.bf16.mxu0 0
  %1237 = vmatpush1.bf16.msra.mxu0 %v999
  %1238 = vmatprep.subr.bf16.mxu0 0
  %1239 = vmatpush1.bf16.msra.mxu0 %v1000
  %1240 = vmatprep.subr.bf16.mxu0 0
  %1241 = vmatpush1.bf16.msra.mxu0 %v1001
  %1242 = vmatprep.subr.bf16.mxu0 0
  %1243 = vmatpush1.bf16.msra.mxu0 %v1002
  %1244 = vmatprep.subr.bf16.mxu0 0
  %1245 = vmatpush1.bf16.msra.mxu0 %v1003
  %1246 = vmatprep.subr.bf16.mxu0 0
  %1247 = vmatpush1.bf16.msra.mxu0 %v1004
  %1248 = vmatprep.subr.bf16.mxu0 0
  %1249 = vmatpush1.bf16.msra.mxu0 %v1005
  %1250 = vmatprep.subr.bf16.mxu0 0
  %1251 = vmatpush1.bf16.msra.mxu0 %v1006
  %1252 = vmatprep.subr.bf16.mxu0 0
  %1253 = vmatpush1.bf16.msra.mxu0 %v1007
  %1254 = vmatprep.subr.bf16.mxu0 0
  %1255 = vmatpush1.bf16.msra.mxu0 %v1008
  %1256 = vmatprep.subr.bf16.mxu0 0
  %1257 = vmatpush1.bf16.msra.mxu0 %v1009
  %1258 = vmatprep.subr.bf16.mxu0 0
  %1259 = vmatpush1.bf16.msra.mxu0 %v1010
  %1260 = vmatprep.mubr.bf16.mxu0 %v576
  %1261 = vmatmul.mubr.bf16.gmra.mrb[0].mxu0 %v575
  %v1262 = vpop.f32.mrb[0].mxu0
  %v1263 = vadd.f32 %v1126, %v1262
  %v1264 = vpop.f32.mrb[0].mxu0
  %v1265 = vpop.f32.mrb[0].mxu0
  %v1266 = vadd.f32 %v1129, %v1265
  %v1267 = vpop.f32.mrb[0].mxu0
  %1268 = vmatprep.mubr.bf16.mxu0 %v583
  %1269 = vmatmul.mubr.bf16.gmra.mrb[0].mxu0 %v582
  %v1270 = vpop.f32.mrb[0].mxu0
  %v1271 = vadd.f32 %v1134, %v1270
  %v1272 = vpop.f32.mrb[0].mxu0
  %v1273 = vpop.f32.mrb[0].mxu0
  %v1274 = vadd.f32 %v1137, %v1273
  %v1275 = vpop.f32.mrb[0].mxu0
  %1276 = vmatprep.mubr.bf16.mxu0 %v590
  %1277 = vmatmul.mubr.bf16.gmra.mrb[0].mxu0 %v589
  %v1278 = vpop.f32.mrb[0].mxu0
  %v1279 = vadd.f32 %v1142, %v1278
  %v1280 = vpop.f32.mrb[0].mxu0
  %v1281 = vpop.f32.mrb[0].mxu0
  %v1282 = vadd.f32 %v1145, %v1281
  %v1283 = vpop.f32.mrb[0].mxu0
  %1284 = vmatprep.mubr.bf16.mxu0 %v597
  %1285 = vmatmul.mubr.bf16.gmra.mrb[0].mxu0 %v596
  %v1286 = vpop.f32.mrb[0].mxu0
  %v1287 = vadd.f32 %v1150, %v1286
  %v1288 = vpop.f32.mrb[0].mxu0
  %v1289 = vpop.f32.mrb[0].mxu0
  %v1290 = vadd.f32 %v1153, %v1289
  %v1291 = vpop.f32.mrb[0].mxu0
  %1292 = vmatprep.mubr.bf16.mxu0 %v604
  %1293 = vmatmul.mubr.bf16.gmra.mrb[0].mxu0 %v603
  %v1294 = vpop.f32.mrb[0].mxu0
  %v1295 = vadd.f32 %v1158, %v1294
  %v1296 = vpop.f32.mrb[0].mxu0
  %v1297 = vpop.f32.mrb[0].mxu0
  %v1298 = vadd.f32 %v1161, %v1297
  %v1299 = vpop.f32.mrb[0].mxu0
  %1300 = vmatprep.mubr.bf16.mxu0 %v611
  %1301 = vmatmul.mubr.bf16.gmra.mrb[0].mxu0 %v610
  %v1302 = vpop.f32.mrb[0].mxu0
  %v1303 = vadd.f32 %v1166, %v1302
  %v1304 = vpop.f32.mrb[0].mxu0
  %v1305 = vpop.f32.mrb[0].mxu0
  %v1306 = vadd.f32 %v1169, %v1305
  %v1307 = vpop.f32.mrb[0].mxu0
  %1308 = vmatprep.mubr.bf16.mxu0 %v618
  %1309 = vmatmul.mubr.bf16.gmra.mrb[0].mxu0 %v617
  %v1310 = vpop.f32.mrb[0].mxu0
  %v1311 = vadd.f32 %v1174, %v1310
  %v1312 = vpop.f32.mrb[0].mxu0
  %v1313 = vpop.f32.mrb[0].mxu0
  %v1314 = vadd.f32 %v1177, %v1313
  %v1315 = vpop.f32.mrb[0].mxu0
  %1316 = vmatprep.mubr.bf16.mxu0 %v625
  %1317 = vmatmul.mubr.bf16.gmra.mrb[0].mxu0 %v624
  %v1318 = vpop.f32.mrb[0].mxu0
  %v1319 = vadd.f32 %v1182, %v1318
  %v1320 = vpop.f32.mrb[0].mxu0
  %v1321 = vpop.f32.mrb[0].mxu0
  %v1322 = vadd.f32 %v1185, %v1321
  %v1323 = vpop.f32.mrb[0].mxu0
  %1324 = vmatprep.mubr.bf16.mxu0 %v632
  %1325 = vmatmul.mubr.bf16.gmra.mrb[0].mxu0 %v631
  %v1326 = vpop.f32.mrb[0].mxu0
  %v1327 = vadd.f32 %v1190, %v1326
  %v1328 = vpop.f32.mrb[0].mxu0
  %v1329 = vpop.f32.mrb[0].mxu0
  %v1330 = vadd.f32 %v1193, %v1329
  %v1331 = vpop.f32.mrb[0].mxu0
  %1332 = vmatprep.mubr.bf16.mxu0 %v639
  %1333 = vmatmul.mubr.bf16.gmra.mrb[0].mxu0 %v638
  %v1334 = vpop.f32.mrb[0].mxu0
  %v1335 = vadd.f32 %v1198, %v1334
  %v1336 = vpop.f32.mrb[0].mxu0
  %v1337 = vpop.f32.mrb[0].mxu0
  %v1338 = vadd.f32 %v1201, %v1337
  %v1339 = vpop.f32.mrb[0].mxu0
  %1340 = vmatprep.mubr.bf16.mxu0 %v646
  %1341 = vmatmul.mubr.bf16.gmra.mrb[0].mxu0 %v645
  %v1342 = vpop.f32.mrb[0].mxu0
  %v1343 = vadd.f32 %v1206, %v1342
  %v1344 = vpop.f32.mrb[0].mxu0
  %v1345 = vpop.f32.mrb[0].mxu0
  %v1346 = vadd.f32 %v1209, %v1345
  %v1347 = vpop.f32.mrb[0].mxu0
  %1348 = vmatprep.mubr.bf16.mxu0 %v653
  %1349 = vmatmul.mubr.bf16.gmra.mrb[0].mxu0 %v652
  %v1350 = vpop.f32.mrb[0].mxu0
  %v1351 = vadd.f32 %v1214, %v1350
  %v1352 = vpop.f32.mrb[0].mxu0
  %v1353 = vpop.f32.mrb[0].mxu0
  %v1354 = vadd.f32 %v1217, %v1353
  %v1355 = vpop.f32.mrb[0].mxu0
  %1356 = vmatprep.mubr.bf16.mxu0 %v660
  %1357 = vmatmul.mubr.bf16.gmra.mrb[0].mxu0 %v659
  %v1358 = vpop.f32.mrb[0].mxu0
  %v1359 = vadd.f32 %v1222, %v1358
  %v1360 = vpop.f32.mrb[0].mxu0
  %v1361 = vpop.f32.mrb[0].mxu0
  %v1362 = vadd.f32 %v1225, %v1361
  %v1363 = vpop.f32.mrb[0].mxu0
  %1364 = vdwg.mxu0
  %1365 = vmatprep.subr.bf16.mxu0 0
  %1366 = vmatpush1.bf16.msra.mxu0 %v1011
  %1367 = vmatprep.subr.bf16.mxu0 0
  %1368 = vmatpush1.bf16.msra.mxu0 %v1012
  %1369 = vmatprep.subr.bf16.mxu0 0
  %1370 = vmatpush1.bf16.msra.mxu0 %v1013
  %1371 = vmatprep.subr.bf16.mxu0 0
  %1372 = vmatpush1.bf16.msra.mxu0 %v1014
  %1373 = vmatprep.subr.bf16.mxu0 0
  %1374 = vmatpush1.bf16.msra.mxu0 %v1015
  %1375 = vmatprep.subr.bf16.mxu0 0
  %1376 = vmatpush1.bf16.msra.mxu0 %v1016
  %1377 = vmatprep.subr.bf16.mxu0 0
  %1378 = vmatpush1.bf16.msra.mxu0 %v1017
  %1379 = vmatprep.subr.bf16.mxu0 0
  %1380 = vmatpush1.bf16.msra.mxu0 %v1018
  %1381 = vmatprep.subr.bf16.mxu0 0
  %1382 = vmatpush1.bf16.msra.mxu0 %v1019
  %1383 = vmatprep.subr.bf16.mxu0 0
  %1384 = vmatpush1.bf16.msra.mxu0 %v1020
  %1385 = vmatprep.subr.bf16.mxu0 0
  %1386 = vmatpush1.bf16.msra.mxu0 %v1021
  %1387 = vmatprep.subr.bf16.mxu0 0
  %1388 = vmatpush1.bf16.msra.mxu0 %v1022
  %1389 = vmatprep.subr.bf16.mxu0 0
  %1390 = vmatpush1.bf16.msra.mxu0 %v1023
  %1391 = vmatprep.subr.bf16.mxu0 0
  %1392 = vmatpush1.bf16.msra.mxu0 %v1024
  %1393 = vmatprep.subr.bf16.mxu0 0
  %1394 = vmatpush1.bf16.msra.mxu0 %v1025
  %1395 = vmatprep.subr.bf16.mxu0 0
  %1396 = vmatpush1.bf16.msra.mxu0 %v1026
  %1397 = vmatprep.mubr.bf16.mxu0 %v578
  %1398 = vmatmul.mubr.bf16.gmra.mrb[0].mxu0 %v577
  %v1399 = vpop.f32.mrb[0].mxu0
  %v1400 = vadd.f32 %v1263, %v1399
  %v1401 = vpop.f32.mrb[0].mxu0
  %v1402 = vpop.f32.mrb[0].mxu0
  %v1403 = vadd.f32 %v1266, %v1402
  %v1404 = vpop.f32.mrb[0].mxu0
  %1405 = vmatprep.mubr.bf16.mxu0 %v585
  %1406 = vmatmul.mubr.bf16.gmra.mrb[0].mxu0 %v584
  %v1407 = vpop.f32.mrb[0].mxu0
  %v1408 = vadd.f32 %v1271, %v1407
  %v1409 = vpop.f32.mrb[0].mxu0
  %v1410 = vpop.f32.mrb[0].mxu0
  %v1411 = vadd.f32 %v1274, %v1410
  %v1412 = vpop.f32.mrb[0].mxu0
  %1413 = vmatprep.mubr.bf16.mxu0 %v592
  %1414 = vmatmul.mubr.bf16.gmra.mrb[0].mxu0 %v591
  %v1415 = vpop.f32.mrb[0].mxu0
  %v1416 = vadd.f32 %v1279, %v1415
  %v1417 = vpop.f32.mrb[0].mxu0
  %v1418 = vpop.f32.mrb[0].mxu0
  %v1419 = vadd.f32 %v1282, %v1418
  %v1420 = vpop.f32.mrb[0].mxu0
  %1421 = vmatprep.mubr.bf16.mxu0 %v599
  %1422 = vmatmul.mubr.bf16.gmra.mrb[0].mxu0 %v598
  %v1423 = vpop.f32.mrb[0].mxu0
  %v1424 = vadd.f32 %v1287, %v1423
  %v1425 = vpop.f32.mrb[0].mxu0
  %v1426 = vpop.f32.mrb[0].mxu0
  %v1427 = vadd.f32 %v1290, %v1426
  %v1428 = vpop.f32.mrb[0].mxu0
  %1429 = vmatprep.mubr.bf16.mxu0 %v606
  %1430 = vmatmul.mubr.bf16.gmra.mrb[0].mxu0 %v605
  %v1431 = vpop.f32.mrb[0].mxu0
  %v1432 = vadd.f32 %v1295, %v1431
  %v1433 = vpop.f32.mrb[0].mxu0
  %v1434 = vpop.f32.mrb[0].mxu0
  %v1435 = vadd.f32 %v1298, %v1434
  %v1436 = vpop.f32.mrb[0].mxu0
  %1437 = vmatprep.mubr.bf16.mxu0 %v613
  %1438 = vmatmul.mubr.bf16.gmra.mrb[0].mxu0 %v612
  %v1439 = vpop.f32.mrb[0].mxu0
  %v1440 = vadd.f32 %v1303, %v1439
  %v1441 = vpop.f32.mrb[0].mxu0
  %v1442 = vpop.f32.mrb[0].mxu0
  %v1443 = vadd.f32 %v1306, %v1442
  %v1444 = vpop.f32.mrb[0].mxu0
  %1445 = vmatprep.mubr.bf16.mxu0 %v620
  %1446 = vmatmul.mubr.bf16.gmra.mrb[0].mxu0 %v619
  %v1447 = vpop.f32.mrb[0].mxu0
  %v1448 = vadd.f32 %v1311, %v1447
  %v1449 = vpop.f32.mrb[0].mxu0
  %v1450 = vpop.f32.mrb[0].mxu0
  %v1451 = vadd.f32 %v1314, %v1450
  %v1452 = vpop.f32.mrb[0].mxu0
  %1453 = vmatprep.mubr.bf16.mxu0 %v627
  %1454 = vmatmul.mubr.bf16.gmra.mrb[0].mxu0 %v626
  %v1455 = vpop.f32.mrb[0].mxu0
  %v1456 = vadd.f32 %v1319, %v1455
  %v1457 = vpop.f32.mrb[0].mxu0
  %v1458 = vpop.f32.mrb[0].mxu0
  %v1459 = vadd.f32 %v1322, %v1458
  %v1460 = vpop.f32.mrb[0].mxu0
  %1461 = vmatprep.mubr.bf16.mxu0 %v634
  %1462 = vmatmul.mubr.bf16.gmra.mrb[0].mxu0 %v633
  %v1463 = vpop.f32.mrb[0].mxu0
  %v1464 = vadd.f32 %v1327, %v1463
  %v1465 = vpop.f32.mrb[0].mxu0
  %v1466 = vpop.f32.mrb[0].mxu0
  %v1467 = vadd.f32 %v1330, %v1466
  %v1468 = vpop.f32.mrb[0].mxu0
  %1469 = vmatprep.mubr.bf16.mxu0 %v641
  %1470 = vmatmul.mubr.bf16.gmra.mrb[0].mxu0 %v640
  %v1471 = vpop.f32.mrb[0].mxu0
  %v1472 = vadd.f32 %v1335, %v1471
  %v1473 = vpop.f32.mrb[0].mxu0
  %v1474 = vpop.f32.mrb[0].mxu0
  %v1475 = vadd.f32 %v1338, %v1474
  %v1476 = vpop.f32.mrb[0].mxu0
  %1477 = vmatprep.mubr.bf16.mxu0 %v648
  %1478 = vmatmul.mubr.bf16.gmra.mrb[0].mxu0 %v647
  %v1479 = vpop.f32.mrb[0].mxu0
  %v1480 = vadd.f32 %v1343, %v1479
  %v1481 = vpop.f32.mrb[0].mxu0
  %v1482 = vpop.f32.mrb[0].mxu0
  %v1483 = vadd.f32 %v1346, %v1482
  %v1484 = vpop.f32.mrb[0].mxu0
  %1485 = vmatprep.mubr.bf16.mxu0 %v655
  %1486 = vmatmul.mubr.bf16.gmra.mrb[0].mxu0 %v654
  %v1487 = vpop.f32.mrb[0].mxu0
  %v1488 = vadd.f32 %v1351, %v1487
  %v1489 = vpop.f32.mrb[0].mxu0
  %v1490 = vpop.f32.mrb[0].mxu0
  %v1491 = vadd.f32 %v1354, %v1490
  %v1492 = vpop.f32.mrb[0].mxu0
  %1493 = vmatprep.mubr.bf16.mxu0 %v662
  %1494 = vmatmul.mubr.bf16.gmra.mrb[0].mxu0 %v661
  %v1495 = vpop.f32.mrb[0].mxu0
  %v1496 = vadd.f32 %v1359, %v1495
  %v1497 = vpop.f32.mrb[0].mxu0
  %v1498 = vpop.f32.mrb[0].mxu0
  %v1499 = vadd.f32 %v1362, %v1498
  %v1500 = vpop.f32.mrb[0].mxu0
  %1501 = vdwg.mxu0
  %1502 = vmatprep.subr.bf16.mxu0 0
  %1503 = vmatpush1.bf16.msra.mxu0 %v1027
  %1504 = vmatprep.subr.bf16.mxu0 0
  %1505 = vmatpush1.bf16.msra.mxu0 %v1028
  %1506 = vmatprep.subr.bf16.mxu0 0
  %1507 = vmatpush1.bf16.msra.mxu0 %v1029
  %1508 = vmatprep.subr.bf16.mxu0 0
  %1509 = vmatpush1.bf16.msra.mxu0 %v1030
  %1510 = vmatprep.subr.bf16.mxu0 0
  %1511 = vmatpush1.bf16.msra.mxu0 %v1031
  %1512 = vmatprep.subr.bf16.mxu0 0
  %1513 = vmatpush1.bf16.msra.mxu0 %v1032
  %1514 = vmatprep.subr.bf16.mxu0 0
  %1515 = vmatpush1.bf16.msra.mxu0 %v1033
  %1516 = vmatprep.subr.bf16.mxu0 0
  %1517 = vmatpush1.bf16.msra.mxu0 %v1034
  %1518 = vmatprep.subr.bf16.mxu0 0
  %1519 = vmatpush1.bf16.msra.mxu0 0
  %1520 = vmatprep.subr.bf16.mxu0 0
  %1521 = vmatpush1.bf16.msra.mxu0 0
  %1522 = vmatprep.subr.bf16.mxu0 0
  %1523 = vmatpush1.bf16.msra.mxu0 0
  %1524 = vmatprep.subr.bf16.mxu0 0
  %1525 = vmatpush1.bf16.msra.mxu0 0
  %1526 = vmatprep.subr.bf16.mxu0 0
  %1527 = vmatpush1.bf16.msra.mxu0 0
  %1528 = vmatprep.subr.bf16.mxu0 0
  %1529 = vmatpush1.bf16.msra.mxu0 0
  %1530 = vmatprep.subr.bf16.mxu0 0
  %1531 = vmatpush1.bf16.msra.mxu0 0
  %1532 = vmatprep.subr.bf16.mxu0 0
  %1533 = vmatpush1.bf16.msra.mxu0 0
  %1534 = vmatprep.mubr.bf16.mxu0 0
  %1535 = vmatmul.mubr.bf16.gmra.mrb[0].mxu0 %v579
  %v1536 = vpop.f32.mrb[0].mxu0
  %v1537 = vadd.f32 %v1400, %v1536
  %v1538 = vpop.f32.mrb[0].mxu0
  %v1539 = vpop.f32.mrb[0].mxu0
  %v1540 = vadd.f32 %v1403, %v1539
  %v1541 = vpop.f32.mrb[0].mxu0
  %1542 = vmatprep.mubr.bf16.mxu0 0
  %1543 = vmatmul.mubr.bf16.gmra.mrb[0].mxu0 %v586
  %v1544 = vpop.f32.mrb[0].mxu0
  %v1545 = vadd.f32 %v1408, %v1544
  %v1546 = vpop.f32.mrb[0].mxu0
  %v1547 = vpop.f32.mrb[0].mxu0
  %v1548 = vadd.f32 %v1411, %v1547
  %v1549 = vpop.f32.mrb[0].mxu0
  %1550 = vmatprep.mubr.bf16.mxu0 0
  %1551 = vmatmul.mubr.bf16.gmra.mrb[0].mxu0 %v593
  %v1552 = vpop.f32.mrb[0].mxu0
  %v1553 = vadd.f32 %v1416, %v1552
  %v1554 = vpop.f32.mrb[0].mxu0
  %v1555 = vpop.f32.mrb[0].mxu0
  %v1556 = vadd.f32 %v1419, %v1555
  %v1557 = vpop.f32.mrb[0].mxu0
  %1558 = vmatprep.mubr.bf16.mxu0 0
  %1559 = vmatmul.mubr.bf16.gmra.mrb[0].mxu0 %v600
  %v1560 = vpop.f32.mrb[0].mxu0
  %v1561 = vadd.f32 %v1424, %v1560
  %v1562 = vpop.f32.mrb[0].mxu0
  %v1563 = vpop.f32.mrb[0].mxu0
  %v1564 = vadd.f32 %v1427, %v1563
  %v1565 = vpop.f32.mrb[0].mxu0
  %1566 = vmatprep.mubr.bf16.mxu0 0
  %1567 = vmatmul.mubr.bf16.gmra.mrb[0].mxu0 %v607
  %v1568 = vpop.f32.mrb[0].mxu0
  %v1569 = vadd.f32 %v1432, %v1568
  %v1570 = vpop.f32.mrb[0].mxu0
  %v1571 = vpop.f32.mrb[0].mxu0
  %v1572 = vadd.f32 %v1435, %v1571
  %v1573 = vpop.f32.mrb[0].mxu0
  %1574 = vmatprep.mubr.bf16.mxu0 0
  %1575 = vmatmul.mubr.bf16.gmra.mrb[0].mxu0 %v614
  %v1576 = vpop.f32.mrb[0].mxu0
  %v1577 = vadd.f32 %v1440, %v1576
  %v1578 = vpop.f32.mrb[0].mxu0
  %v1579 = vpop.f32.mrb[0].mxu0
  %v1580 = vadd.f32 %v1443, %v1579
  %v1581 = vpop.f32.mrb[0].mxu0
  %1582 = vmatprep.mubr.bf16.mxu0 0
  %1583 = vmatmul.mubr.bf16.gmra.mrb[0].mxu0 %v621
  %v1584 = vpop.f32.mrb[0].mxu0
  %v1585 = vadd.f32 %v1448, %v1584
  %v1586 = vpop.f32.mrb[0].mxu0
  %v1587 = vpop.f32.mrb[0].mxu0
  %v1588 = vadd.f32 %v1451, %v1587
  %v1589 = vpop.f32.mrb[0].mxu0
  %1590 = vmatprep.mubr.bf16.mxu0 0
  %1591 = vmatmul.mubr.bf16.gmra.mrb[0].mxu0 %v628
  %v1592 = vpop.f32.mrb[0].mxu0
  %v1593 = vadd.f32 %v1456, %v1592
  %v1594 = vpop.f32.mrb[0].mxu0
  %v1595 = vpop.f32.mrb[0].mxu0
  %v1596 = vadd.f32 %v1459, %v1595
  %v1597 = vpop.f32.mrb[0].mxu0
  %1598 = vmatprep.mubr.bf16.mxu0 0
  %1599 = vmatmul.mubr.bf16.gmra.mrb[0].mxu0 %v635
  %v1600 = vpop.f32.mrb[0].mxu0
  %v1601 = vadd.f32 %v1464, %v1600
  %v1602 = vpop.f32.mrb[0].mxu0
  %v1603 = vpop.f32.mrb[0].mxu0
  %v1604 = vadd.f32 %v1467, %v1603
  %v1605 = vpop.f32.mrb[0].mxu0
  %1606 = vmatprep.mubr.bf16.mxu0 0
  %1607 = vmatmul.mubr.bf16.gmra.mrb[0].mxu0 %v642
  %v1608 = vpop.f32.mrb[0].mxu0
  %v1609 = vadd.f32 %v1472, %v1608
  %v1610 = vpop.f32.mrb[0].mxu0
  %v1611 = vpop.f32.mrb[0].mxu0
  %v1612 = vadd.f32 %v1475, %v1611
  %v1613 = vpop.f32.mrb[0].mxu0
  %1614 = vmatprep.mubr.bf16.mxu0 0
  %1615 = vmatmul.mubr.bf16.gmra.mrb[0].mxu0 %v649
  %v1616 = vpop.f32.mrb[0].mxu0
  %v1617 = vadd.f32 %v1480, %v1616
  %v1618 = vpop.f32.mrb[0].mxu0
  %v1619 = vpop.f32.mrb[0].mxu0
  %v1620 = vadd.f32 %v1483, %v1619
  %v1621 = vpop.f32.mrb[0].mxu0
  %1622 = vmatprep.mubr.bf16.mxu0 0
  %1623 = vmatmul.mubr.bf16.gmra.mrb[0].mxu0 %v656
  %v1624 = vpop.f32.mrb[0].mxu0
  %v1625 = vadd.f32 %v1488, %v1624
  %v1626 = vpop.f32.mrb[0].mxu0
  %v1627 = vpop.f32.mrb[0].mxu0
  %v1628 = vadd.f32 %v1491, %v1627
  %v1629 = vpop.f32.mrb[0].mxu0
  %1630 = vmatprep.mubr.bf16.mxu0 0
  %1631 = vmatmul.mubr.bf16.gmra.mrb[0].mxu0 %v663
  %v1632 = vpop.f32.mrb[0].mxu0
  %v1633 = vadd.f32 %v1496, %v1632
  %v1634 = vpop.f32.mrb[0].mxu0
  %v1635 = vpop.f32.mrb[0].mxu0
  %v1636 = vadd.f32 %v1499, %v1635
  %v1637 = vpop.f32.mrb[0].mxu0
  %1638 = vdwg.mxu0
  %v1639 = vadd.f32 %v45, %v1537
  %v1640 = vadd.f32 %v46, %v1540
  %v1641 = vadd.f32 %v47, %v1545
  %v1642 = vadd.f32 %v48, %v1548
  %v1643 = vadd.f32 %v49, %v1553
  %v1644 = vadd.f32 %v50, %v1556
  %v1645 = vadd.f32 %v51, %v1561
  %v1646 = vadd.f32 %v52, %v1564
  %v1647 = vadd.f32 %v53, %v1569
  %v1648 = vadd.f32 %v54, %v1572
  %v1649 = vadd.f32 %v55, %v1577
  %v1650 = vadd.f32 %v56, %v1580
  %v1651 = vadd.f32 %v57, %v1585
  %v1652 = vadd.f32 %v58, %v1588
  %v1653 = vadd.f32 %v59, %v1593
  %v1654 = vadd.f32 %v60, %v1596
  %v1655 = vadd.f32 %v61, %v1601
  %v1656 = vadd.f32 %v62, %v1604
  %v1657 = vadd.f32 %v63, %v1609
  %v1658 = vadd.f32 %v64, %v1612
  %v1659 = vadd.f32 %v65, %v1617
  %v1660 = vadd.f32 %v66, %v1620
  %v1661 = vadd.f32 %v67, %v1625
  %v1662 = vadd.f32 %v68, %v1628
  %v1663 = vadd.f32 %v69, %v1633
  %v1664 = vadd.f32 %v70, %v1636
  %1665 = vst [vmem:[#allocation2] sm:$0xff] %v1639
  %1666 = vst [vmem:[#allocation2 + $0x8] sm:$0xff] %v1640
  %1667 = vst [vmem:[#allocation2 + $0x10] sm:$0xff] %v1641
  %1668 = vst [vmem:[#allocation2 + $0x18] sm:$0xff] %v1642
  %1669 = vst [vmem:[#allocation2 + $0x20] sm:$0xff] %v1643
  %1670 = vst [vmem:[#allocation2 + $0x28] sm:$0xff] %v1644
  %1671 = vst [vmem:[#allocation2 + $0x30] sm:$0xff] %v1645
  %1672 = vst [vmem:[#allocation2 + $0x38] sm:$0xff] %v1646
  %1673 = vst [vmem:[#allocation2 + $0x40] sm:$0xff] %v1647
  %1674 = vst [vmem:[#allocation2 + $0x48] sm:$0xff] %v1648
  %1675 = vst [vmem:[#allocation2 + $0x50] sm:$0xff] %v1649
  %1676 = vst [vmem:[#allocation2 + $0x58] sm:$0xff] %v1650
  %1677 = vst [vmem:[#allocation2 + $0x60] sm:$0xff] %v1651
  %1678 = vst [vmem:[#allocation2 + $0x68] sm:$0xff] %v1652
  %1679 = vst [vmem:[#allocation2 + $0x70] sm:$0xff] %v1653
  %1680 = vst [vmem:[#allocation2 + $0x78] sm:$0xff] %v1654
  %1681 = vst [vmem:[#allocation2 + $0x80] sm:$0xff] %v1655
  %1682 = vst [vmem:[#allocation2 + $0x88] sm:$0xff] %v1656
  %1683 = vst [vmem:[#allocation2 + $0x90] sm:$0xff] %v1657
  %1684 = vst [vmem:[#allocation2 + $0x98] sm:$0xff] %v1658
  %1685 = vst [vmem:[#allocation2 + $0xa0] sm:$0xff] %v1659
  %1686 = vst [vmem:[#allocation2 + $0xa8] sm:$0xff] %v1660
  %1687 = vst [vmem:[#allocation2 + $0xb0] sm:$0xff] %v1661
  %1688 = vst [vmem:[#allocation2 + $0xb8] sm:$0xff] %v1662
  %1689 = vst [vmem:[#allocation2 + $0xc0] sm:$0xff] %v1663
  %1690 = vst [vmem:[#allocation2 + $0xc8] sm:$0xff] %v1664
  // Predicated region
  $region18: #{forward.8} parent=0 // pred_check
    %p1691 = pneg %p15
  $region19: #{forward.8} parent=0 // pred_check_branch
    %1693 = sbr.rel (%p1691) target = $region21
  $region20: #{forward.8} parent=0 // pred_region
    %v1694 = vld [vmem:[#allocation2] sm:$0xff]
    %v1695 = vld [vmem:[#allocation2 + $0x8] sm:$0xff]
    %v1696 = vld [vmem:[#allocation2 + $0x10] sm:$0xff]
    %v1697 = vld [vmem:[#allocation2 + $0x18] sm:$0xff]
    %v1698 = vld [vmem:[#allocation2 + $0x20] sm:$0xff]
    %v1699 = vld [vmem:[#allocation2 + $0x28] sm:$0xff]
    %v1700 = vld [vmem:[#allocation2 + $0x30] sm:$0xff]
    %v1701 = vld [vmem:[#allocation2 + $0x38] sm:$0xff]
    %v1702 = vld [vmem:[#allocation2 + $0x40] sm:$0xff]
    %v1703 = vld [vmem:[#allocation2 + $0x48] sm:$0xff]
    %v1704 = vld [vmem:[#allocation2 + $0x50] sm:$0xff]
    %v1705 = vld [vmem:[#allocation2 + $0x58] sm:$0xff]
    %v1706 = vld [vmem:[#allocation2 + $0x60] sm:$0xff]
    %v1707 = vld [vmem:[#allocation2 + $0x68] sm:$0xff]
    %v1708 = vld [vmem:[#allocation2 + $0x70] sm:$0xff]
    %v1709 = vld [vmem:[#allocation2 + $0x78] sm:$0xff]
    %v1710 = vld [vmem:[#allocation2 + $0x80] sm:$0xff]
    %v1711 = vld [vmem:[#allocation2 + $0x88] sm:$0xff]
    %v1712 = vld [vmem:[#allocation2 + $0x90] sm:$0xff]
    %v1713 = vld [vmem:[#allocation2 + $0x98] sm:$0xff]
    %v1714 = vld [vmem:[#allocation2 + $0xa0] sm:$0xff]
    %v1715 = vld [vmem:[#allocation2 + $0xa8] sm:$0xff]
    %v1716 = vld [vmem:[#allocation2 + $0xb0] sm:$0xff]
    %v1717 = vld [vmem:[#allocation2 + $0xb8] sm:$0xff]
    %v1718 = vld [vmem:[#allocation2 + $0xc0] sm:$0xff]
    %v1719 = vld [vmem:[#allocation2 + $0xc8] sm:$0xff]
    %v1720 = vld [vmem:[%s2] sm:$0x1]
    %v1722 = vlaneseq
    %v1723 = vshrl.u32 %v1722, 7
    %v1724 = vsub.s32 0, %v1723
    %v1725 = vrot.slane %v1720, %v1724
    %v1727 = vadd.f32 %v1694, %v1725
    %v1728 = vadd.f32 %v1695, %v1725
    %v1729 = vadd.f32 %v1696, %v1725
    %v1730 = vadd.f32 %v1697, %v1725
    %v1731 = vadd.f32 %v1698, %v1725
    %v1732 = vadd.f32 %v1699, %v1725
    %v1733 = vadd.f32 %v1700, %v1725
    %v1734 = vadd.f32 %v1701, %v1725
    %v1735 = vadd.f32 %v1702, %v1725
    %v1736 = vadd.f32 %v1703, %v1725
    %v1737 = vadd.f32 %v1704, %v1725
    %v1738 = vadd.f32 %v1705, %v1725
    %v1739 = vadd.f32 %v1706, %v1725
    %v1740 = vadd.f32 %v1707, %v1725
    %v1741 = vadd.f32 %v1708, %v1725
    %v1742 = vadd.f32 %v1709, %v1725
    %v1743 = vadd.f32 %v1710, %v1725
    %v1744 = vadd.f32 %v1711, %v1725
    %v1745 = vadd.f32 %v1712, %v1725
    %v1746 = vadd.f32 %v1713, %v1725
    %v1747 = vadd.f32 %v1714, %v1725
    %v1748 = vadd.f32 %v1715, %v1725
    %v1749 = vadd.f32 %v1716, %v1725
    %v1750 = vadd.f32 %v1717, %v1725
    %v1751 = vadd.f32 %v1718, %v1725
    %v1752 = vadd.f32 %v1719, %v1725
    %vm1753 = vcmp.gt.f32.partialorder %v1727, 0.0
    %vm1754 = vcmp.gt.f32.partialorder %v1728, 0.0
    %vm1755 = vcmp.gt.f32.partialorder %v1729, 0.0
    %vm1756 = vcmp.gt.f32.partialorder %v1730, 0.0
    %vm1757 = vcmp.gt.f32.partialorder %v1731, 0.0
    %vm1758 = vcmp.gt.f32.partialorder %v1732, 0.0
    %vm1759 = vcmp.gt.f32.partialorder %v1733, 0.0
    %vm1760 = vcmp.gt.f32.partialorder %v1734, 0.0
    %vm1761 = vcmp.gt.f32.partialorder %v1735, 0.0
    %vm1762 = vcmp.gt.f32.partialorder %v1736, 0.0
    %vm1763 = vcmp.gt.f32.partialorder %v1737, 0.0
    %vm1764 = vcmp.gt.f32.partialorder %v1738, 0.0
    %vm1765 = vcmp.gt.f32.partialorder %v1739, 0.0
    %vm1766 = vcmp.gt.f32.partialorder %v1740, 0.0
    %vm1767 = vcmp.gt.f32.partialorder %v1741, 0.0
    %vm1768 = vcmp.gt.f32.partialorder %v1742, 0.0
    %vm1769 = vcmp.gt.f32.partialorder %v1743, 0.0
    %vm1770 = vcmp.gt.f32.partialorder %v1744, 0.0
    %vm1771 = vcmp.gt.f32.partialorder %v1745, 0.0
    %vm1772 = vcmp.gt.f32.partialorder %v1746, 0.0
    %vm1773 = vcmp.gt.f32.partialorder %v1747, 0.0
    %vm1774 = vcmp.gt.f32.partialorder %v1748, 0.0
    %vm1775 = vcmp.gt.f32.partialorder %v1749, 0.0
    %vm1776 = vcmp.gt.f32.partialorder %v1750, 0.0
    %vm1777 = vcmp.gt.f32.partialorder %v1751, 0.0
    %vm1778 = vcmp.gt.f32.partialorder %v1752, 0.0
    %v1779 = vmul.f32 %v1727, 0.2
    %v1780 = vmul.f32 %v1728, 0.2
    %v1781 = vmul.f32 %v1729, 0.2
    %v1782 = vmul.f32 %v1730, 0.2
    %v1783 = vmul.f32 %v1731, 0.2
    %v1784 = vmul.f32 %v1732, 0.2
    %v1785 = vmul.f32 %v1733, 0.2
    %v1786 = vmul.f32 %v1734, 0.2
    %v1787 = vmul.f32 %v1735, 0.2
    %v1788 = vmul.f32 %v1736, 0.2
    %v1789 = vmul.f32 %v1737, 0.2
    %v1790 = vmul.f32 %v1738, 0.2
    %v1791 = vmul.f32 %v1739, 0.2
    %v1792 = vmul.f32 %v1740, 0.2
    %v1793 = vmul.f32 %v1741, 0.2
    %v1794 = vmul.f32 %v1742, 0.2
    %v1795 = vmul.f32 %v1743, 0.2
    %v1796 = vmul.f32 %v1744, 0.2
    %v1797 = vmul.f32 %v1745, 0.2
    %v1798 = vmul.f32 %v1746, 0.2
    %v1799 = vmul.f32 %v1747, 0.2
    %v1800 = vmul.f32 %v1748, 0.2
    %v1801 = vmul.f32 %v1749, 0.2
    %v1802 = vmul.f32 %v1750, 0.2
    %v1803 = vmul.f32 %v1751, 0.2
    %v1804 = vmul.f32 %v1752, 0.2
    %v1805 = vsel %vm1753, %v1727, %v1779
    %v1806 = vsel %vm1754, %v1728, %v1780
    %v1807 = vsel %vm1755, %v1729, %v1781
    %v1808 = vsel %vm1756, %v1730, %v1782
    %v1809 = vsel %vm1757, %v1731, %v1783
    %v1810 = vsel %vm1758, %v1732, %v1784
    %v1811 = vsel %vm1759, %v1733, %v1785
    %v1812 = vsel %vm1760, %v1734, %v1786
    %v1813 = vsel %vm1761, %v1735, %v1787
    %v1814 = vsel %vm1762, %v1736, %v1788
    %v1815 = vsel %vm1763, %v1737, %v1789
    %v1816 = vsel %vm1764, %v1738, %v1790
    %v1817 = vsel %vm1765, %v1739, %v1791
    %v1818 = vsel %vm1766, %v1740, %v1792
    %v1819 = vsel %vm1767, %v1741, %v1793
    %v1820 = vsel %vm1768, %v1742, %v1794
    %v1821 = vsel %vm1769, %v1743, %v1795
    %v1822 = vsel %vm1770, %v1744, %v1796
    %v1823 = vsel %vm1771, %v1745, %v1797
    %v1824 = vsel %vm1772, %v1746, %v1798
    %v1825 = vsel %vm1773, %v1747, %v1799
    %v1826 = vsel %vm1774, %v1748, %v1800
    %v1827 = vsel %vm1775, %v1749, %v1801
    %v1828 = vsel %vm1776, %v1750, %v1802
    %v1829 = vsel %vm1777, %v1751, %v1803
    %v1830 = vsel %vm1778, %v1752, %v1804
    %1831 = vst [vmem:[%s3] sm:$0xff] %v1805
    %1832 = vst [vmem:[%s3 + $0x8] sm:$0xff] %v1806
    %1833 = vst [vmem:[%s3 + $0x10] sm:$0xff] %v1807
    %1834 = vst [vmem:[%s3 + $0x18] sm:$0xff] %v1808
    %1835 = vst [vmem:[%s3 + $0x20] sm:$0xff] %v1809
    %1836 = vst [vmem:[%s3 + $0x28] sm:$0xff] %v1810
    %1837 = vst [vmem:[%s3 + $0x30] sm:$0xff] %v1811
    %1838 = vst [vmem:[%s3 + $0x38] sm:$0xff] %v1812
    %1839 = vst [vmem:[%s3 + $0x40] sm:$0xff] %v1813
    %1840 = vst [vmem:[%s3 + $0x48] sm:$0xff] %v1814
    %1841 = vst [vmem:[%s3 + $0x50] sm:$0xff] %v1815
    %1842 = vst [vmem:[%s3 + $0x58] sm:$0xff] %v1816
    %1843 = vst [vmem:[%s3 + $0x60] sm:$0xff] %v1817
    %1844 = vst [vmem:[%s3 + $0x68] sm:$0xff] %v1818
    %1845 = vst [vmem:[%s3 + $0x70] sm:$0xff] %v1819
    %1846 = vst [vmem:[%s3 + $0x78] sm:$0xff] %v1820
    %1847 = vst [vmem:[%s3 + $0x80] sm:$0xff] %v1821
    %1848 = vst [vmem:[%s3 + $0x88] sm:$0xff] %v1822
    %1849 = vst [vmem:[%s3 + $0x90] sm:$0xff] %v1823
    %1850 = vst [vmem:[%s3 + $0x98] sm:$0xff] %v1824
    %1851 = vst [vmem:[%s3 + $0xa0] sm:$0xff] %v1825
    %1852 = vst [vmem:[%s3 + $0xa8] sm:$0xff] %v1826
    %1853 = vst [vmem:[%s3 + $0xb0] sm:$0xff] %v1827
    %1854 = vst [vmem:[%s3 + $0xb8] sm:$0xff] %v1828
    %1855 = vst [vmem:[%s3 + $0xc0] sm:$0xff] %v1829
    %1856 = vst [vmem:[%s3 + $0xc8] sm:$0xff] %v1830
  $region21: #{forward.8} parent=0 // pred_fallthru
    _
  // Predicated region
  $region22: #{forward.8} parent=0 // pred_check
    _
  $region23: #{forward.8} parent=0 // pred_check_branch
    %1858 = sbr.rel (0) target = $region25
  $region24: #{forward.8} parent=0 // pred_region
    _
  $region25: #{forward.8} parent=0 // pred_fallthru
    _
  // Predicated region
  $region26: #{forward.8} parent=0 // pred_check
    _
  $region27: #{forward.8} parent=0 // pred_check_branch
    %1860 = sbr.rel (0) target = $region29
  $region28: #{forward.8} parent=0 // pred_region
    _
  $region29: #{forward.8} parent=0 // pred_fallthru
    _

// kernel: forward.9
$region0: #{forward.9}
  #allocation0 [shape = 'u32[]', space=smem, size = 0x4, offset = 0x4, fixed_abs, tag = 'smem constant byte address 0x4 - core index']
  #allocation1 [shape = 'u32[144,128]{1,0:T(1,128)}', space=vmem, size = 0x12000, scoped, tag = 'internal scratch']
  %s0 = inlined_call_operand.vmem [shape: f32[4,16,320], index: 0, kind: input, shape index: {}]
  %s1 = inlined_call_operand.vmem [shape: f32[16,320], index: 1, kind: output, shape index: {}]
  %s2 = sld [smem:[#allocation0]]
  $region14: #{forward.9} parent=0
    _
  %s4 = ssub.s32 1, %s2
  %s5 = scalar_select 0, %s4, %s2
  // Predicated region
  $region2: #{forward.9} parent=0 // pred_check
    _
  $region3: #{forward.9} parent=0 // pred_check_branch
    %7 = sbr.rel (0) target = $region5
  $region4: #{forward.9} parent=0 // pred_region
    _
  $region5: #{forward.9} parent=0 // pred_fallthru
    _
  %v8 = vld [vmem:[%s0] sm:$0xff]
  %v9 = vld [vmem:[%s0 + $0x8] sm:$0xff]
  %v10 = vld [vmem:[%s0 + $0x10] sm:$0xff]
  %v11 = vld [vmem:[%s0 + $0x18] sm:$0xff]
  %v12 = vld [vmem:[%s0 + $0x20] sm:$0xff]
  %v13 = vld [vmem:[%s0 + $0x28] sm:$0xff]
  %v14 = vld [vmem:[%s0 + $0x30] sm:$0xff]
  %v15 = vld [vmem:[%s0 + $0x38] sm:$0xff]
  %v16 = vld [vmem:[%s0 + $0x40] sm:$0xff]
  %v17 = vld [vmem:[%s0 + $0x48] sm:$0xff]
  %v18 = vld [vmem:[%s0 + $0x50] sm:$0xff]
  %v19 = vld [vmem:[%s0 + $0x58] sm:$0xff]
  %v20 = vld [vmem:[%s0 + $0x60] sm:$0xff]
  %v21 = vld [vmem:[%s0 + $0x68] sm:$0xff]
  %v22 = vld [vmem:[%s0 + $0x70] sm:$0xff]
  %v23 = vld [vmem:[%s0 + $0x78] sm:$0xff]
  %v24 = vld [vmem:[%s0 + $0x80] sm:$0xff]
  %v25 = vld [vmem:[%s0 + $0x88] sm:$0xff]
  %v26 = vld [vmem:[%s0 + $0x90] sm:$0xff]
  %v27 = vld [vmem:[%s0 + $0x98] sm:$0xff]
  %v28 = vld [vmem:[%s0 + $0xa0] sm:$0xff]
  %v29 = vld [vmem:[%s0 + $0xa8] sm:$0xff]
  %v30 = vld [vmem:[%s0 + $0xb0] sm:$0xff]
  %v31 = vld [vmem:[%s0 + $0xb8] sm:$0xff]
  %v32 = vmax.f32 %v8, %v14
  %v33 = vmax.f32 %v32, %v20
  %v34 = vmax.f32 %v33, %v26
  %v35 = vmax.f32 %v9, %v15
  %v36 = vmax.f32 %v35, %v21
  %v37 = vmax.f32 %v36, %v27
  %vm38 = vcmask 523264
  %v39 = vsel %vm38, %v10, -inf
  %v40 = vsel %vm38, %v16, -inf
  %v41 = vmax.f32 %v39, %v40
  %v42 = vsel %vm38, %v22, -inf
  %v43 = vmax.f32 %v41, %v42
  %v44 = vsel %vm38, %v28, -inf
  %v45 = vmax.f32 %v43, %v44
  %v46 = vmax.f32 %v11, %v17
  %v47 = vmax.f32 %v46, %v23
  %v48 = vmax.f32 %v47, %v29
  %v49 = vmax.f32 %v12, %v18
  %v50 = vmax.f32 %v49, %v24
  %v51 = vmax.f32 %v50, %v30
  %v52 = vsel %vm38, %v13, -inf
  %v53 = vsel %vm38, %v19, -inf
  %v54 = vmax.f32 %v52, %v53
  %v55 = vsel %vm38, %v25, -inf
  %v56 = vmax.f32 %v54, %v55
  %v57 = vsel %vm38, %v31, -inf
  %v58 = vmax.f32 %v56, %v57
  %59 = vst [vmem:[%s1] sm:$0xff] %v34
  %60 = vst [vmem:[%s1 + $0x8] sm:$0xff] %v37
  %61 = vst.msk [vmem:[%s1 + $0x10] sm:$0xff] %vm38, %v45
  %62 = vst [vmem:[%s1 + $0x18] sm:$0xff] %v48
  %63 = vst [vmem:[%s1 + $0x20] sm:$0xff] %v51
  %64 = vst.msk [vmem:[%s1 + $0x28] sm:$0xff] %vm38, %v58
  // Predicated region
  $region6: #{forward.9} parent=0 // pred_check
    _
  $region7: #{forward.9} parent=0 // pred_check_branch
    %66 = sbr.rel (0) target = $region9
  $region8: #{forward.9} parent=0 // pred_region
    _
  $region9: #{forward.9} parent=0 // pred_fallthru
    _
  // Predicated region
  $region10: #{forward.9} parent=0 // pred_check
    _
  $region11: #{forward.9} parent=0 // pred_check_branch
    %68 = sbr.rel (0) target = $region13
  $region12: #{forward.9} parent=0 // pred_region
    _
  $region13: #{forward.9} parent=0 // pred_fallthru
    _

// kernel: forward.11
$region0: #{forward.11}
  #allocation0 [shape = 'u32[]', space=smem, size = 0x4, offset = 0x4, fixed_abs, tag = 'smem constant byte address 0x4 - core index']
  #allocation1 [shape = 'u32[144,128]{1,0:T(1,128)}', space=vmem, size = 0x12000, scoped, tag = 'internal scratch']
  #allocation2 [shape = 'f32[16,128]{1,0:T(8,128)}', space=vmem, size = 0x2000, scoped, tag = 'scratch operand']
  %s0 = inlined_call_operand.vmem [shape: bf16[16,128], index: 0, kind: input, shape index: {}]
  %s1 = inlined_call_operand.vmem [shape: bf16[128,128], index: 1, kind: input, shape index: {}]
  %s2 = inlined_call_operand.vmem [shape: f32[1,128], index: 2, kind: input, shape index: {}]
  %s3 = inlined_call_operand.vmem [shape: f32[16,128], index: 3, kind: output, shape index: {}]
  %s4 = sld [smem:[#allocation0]]
  $region30: #{forward.11} parent=0
    _
  %s6 = ssub.s32 1, %s4
  %s7 = scalar_select 0, %s6, %s4
  // Predicated region
  $region2: #{forward.11} parent=0 // pred_check
    _
  $region3: #{forward.11} parent=0 // pred_check_branch
    %9 = sbr.rel (0) target = $region5
  $region4: #{forward.11} parent=0 // pred_region
    _
  $region5: #{forward.11} parent=0 // pred_fallthru
    _
  // Predicated region
  $region6: #{forward.11} parent=0 // pred_check
    _
  $region7: #{forward.11} parent=0 // pred_check_branch
    %11 = sbr.rel (0) target = $region9
  $region8: #{forward.11} parent=0 // pred_region
    _
  $region9: #{forward.11} parent=0 // pred_fallthru
    _
  // Predicated region
  $region10: #{forward.11} parent=0 // pred_check
    _
  $region11: #{forward.11} parent=0 // pred_check_branch
    %13 = sbr.rel (0) target = $region13
  $region12: #{forward.11} parent=0 // pred_region
    _
  $region13: #{forward.11} parent=0 // pred_fallthru
    _
  %p15 = scmp.eq.s32.totalorder 0, 0
  // Predicated region
  $region14: #{forward.11} parent=0 // pred_check
    %p16 = pneg %p15
  $region15: #{forward.11} parent=0 // pred_check_branch
    %18 = sbr.rel (%p16) target = $region17
  $region16: #{forward.11} parent=0 // pred_region
    %19 = vst [vmem:[#allocation2] sm:$0xff] 0.0
    %20 = vst [vmem:[#allocation2 + $0x8] sm:$0xff] 0.0
  $region17: #{forward.11} parent=0 // pred_fallthru
    _
  %v21 = vld [vmem:[#allocation2] sm:$0xff]
  %v22 = vld [vmem:[#allocation2 + $0x8] sm:$0xff]
  %v23 = vld [vmem:[%s0] sm:$0xf]
  %v24 = vld [vmem:[%s0 + $0x4] sm:$0xf]
  %v25 = vld [vmem:[%s1] sm:$0xf]
  %v26 = vld [vmem:[%s1 + $0x4] sm:$0xf]
  %v27 = vld [vmem:[%s1 + $0x8] sm:$0xf]
  %v28 = vld [vmem:[%s1 + $0xc] sm:$0xf]
  %v29 = vld [vmem:[%s1 + $0x10] sm:$0xf]
  %v30 = vld [vmem:[%s1 + $0x14] sm:$0xf]
  %v31 = vld [vmem:[%s1 + $0x18] sm:$0xf]
  %v32 = vld [vmem:[%s1 + $0x1c] sm:$0xf]
  %v33 = vld [vmem:[%s1 + $0x20] sm:$0xf]
  %v34 = vld [vmem:[%s1 + $0x24] sm:$0xf]
  %v35 = vld [vmem:[%s1 + $0x28] sm:$0xf]
  %v36 = vld [vmem:[%s1 + $0x2c] sm:$0xf]
  %v37 = vld [vmem:[%s1 + $0x30] sm:$0xf]
  %v38 = vld [vmem:[%s1 + $0x34] sm:$0xf]
  %v39 = vld [vmem:[%s1 + $0x38] sm:$0xf]
  %v40 = vld [vmem:[%s1 + $0x3c] sm:$0xf]
  %v43 = vunpack.c.l.b16 %v23
  %v44 = vunpack.c.l.b16 %v24
  %v45 = vpack.c.b16 %v44, %v43
  %v63 = vunpack.c.l.b16 %v25
  %v64 = vunpack.c.l.b16 %v26
  %v65 = vunpack.c.l.b16 %v27
  %v66 = vunpack.c.l.b16 %v28
  %v67 = vunpack.c.l.b16 %v29
  %v68 = vunpack.c.l.b16 %v30
  %v69 = vunpack.c.l.b16 %v31
  %v70 = vunpack.c.l.b16 %v32
  %v71 = vunpack.c.l.b16 %v33
  %v72 = vunpack.c.l.b16 %v34
  %v73 = vunpack.c.l.b16 %v35
  %v74 = vunpack.c.l.b16 %v36
  %v75 = vunpack.c.l.b16 %v37
  %v76 = vunpack.c.l.b16 %v38
  %v77 = vunpack.c.l.b16 %v39
  %v78 = vunpack.c.l.b16 %v40
  %v79 = vpack.c.b16 %v64, %v63
  %v80 = vpack.c.b16 %v66, %v65
  %v81 = vpack.c.b16 %v68, %v67
  %v82 = vpack.c.b16 %v70, %v69
  %v83 = vpack.c.b16 %v72, %v71
  %v84 = vpack.c.b16 %v74, %v73
  %v85 = vpack.c.b16 %v76, %v75
  %v86 = vpack.c.b16 %v78, %v77
  %95 = vmatprep.subr.bf16.mxu0 0
  %96 = vmatpush1.bf16.msra.mxu0 %v79
  %97 = vmatprep.subr.bf16.mxu0 0
  %98 = vmatpush1.bf16.msra.mxu0 %v80
  %99 = vmatprep.subr.bf16.mxu0 0
  %100 = vmatpush1.bf16.msra.mxu0 %v81
  %101 = vmatprep.subr.bf16.mxu0 0
  %102 = vmatpush1.bf16.msra.mxu0 %v82
  %103 = vmatprep.subr.bf16.mxu0 0
  %104 = vmatpush1.bf16.msra.mxu0 %v83
  %105 = vmatprep.subr.bf16.mxu0 0
  %106 = vmatpush1.bf16.msra.mxu0 %v84
  %107 = vmatprep.subr.bf16.mxu0 0
  %108 = vmatpush1.bf16.msra.mxu0 %v85
  %109 = vmatprep.subr.bf16.mxu0 0
  %110 = vmatpush1.bf16.msra.mxu0 %v86
  %111 = vmatprep.subr.bf16.mxu0 0
  %112 = vmatpush1.bf16.msra.mxu0 0
  %113 = vmatprep.subr.bf16.mxu0 0
  %114 = vmatpush1.bf16.msra.mxu0 0
  %115 = vmatprep.subr.bf16.mxu0 0
  %116 = vmatpush1.bf16.msra.mxu0 0
  %117 = vmatprep.subr.bf16.mxu0 0
  %118 = vmatpush1.bf16.msra.mxu0 0
  %119 = vmatprep.subr.bf16.mxu0 0
  %120 = vmatpush1.bf16.msra.mxu0 0
  %121 = vmatprep.subr.bf16.mxu0 0
  %122 = vmatpush1.bf16.msra.mxu0 0
  %123 = vmatprep.subr.bf16.mxu0 0
  %124 = vmatpush1.bf16.msra.mxu0 0
  %125 = vmatprep.subr.bf16.mxu0 0
  %126 = vmatpush1.bf16.msra.mxu0 0
  %127 = vmatprep.mubr.bf16.mxu0 0
  %128 = vmatmul.mubr.bf16.gmra.mrb[0].mxu0 %v45
  %v129 = vpop.f32.mrb[0].mxu0
  %v130 = vadd.f32 0.0, %v129
  %v131 = vpop.f32.mrb[0].mxu0
  %v132 = vpop.f32.mrb[0].mxu0
  %v133 = vadd.f32 0.0, %v132
  %v134 = vpop.f32.mrb[0].mxu0
  %135 = vdwg.mxu0
  %v136 = vadd.f32 %v21, %v130
  %v137 = vadd.f32 %v22, %v133
  %138 = vst [vmem:[#allocation2] sm:$0xff] %v136
  %139 = vst [vmem:[#allocation2 + $0x8] sm:$0xff] %v137
  // Predicated region
  $region18: #{forward.11} parent=0 // pred_check
    %p140 = pneg %p15
  $region19: #{forward.11} parent=0 // pred_check_branch
    %142 = sbr.rel (%p140) target = $region21
  $region20: #{forward.11} parent=0 // pred_region
    %v143 = vld [vmem:[#allocation2] sm:$0xff]
    %v144 = vld [vmem:[#allocation2 + $0x8] sm:$0xff]
    %v145 = vld [vmem:[%s2] sm:$0x1]
    %v147 = vlaneseq
    %v148 = vshrl.u32 %v147, 7
    %v149 = vsub.s32 0, %v148
    %v150 = vrot.slane %v145, %v149
    %v152 = vadd.f32 %v143, %v150
    %v153 = vadd.f32 %v144, %v150
    %154 = vst [vmem:[%s3] sm:$0xff] %v152
    %155 = vst [vmem:[%s3 + $0x8] sm:$0xff] %v153
  $region21: #{forward.11} parent=0 // pred_fallthru
    _
  // Predicated region
  $region22: #{forward.11} parent=0 // pred_check
    _
  $region23: #{forward.11} parent=0 // pred_check_branch
    %157 = sbr.rel (0) target = $region25
  $region24: #{forward.11} parent=0 // pred_region
    _
  $region25: #{forward.11} parent=0 // pred_fallthru
    _
  // Predicated region
  $region26: #{forward.11} parent=0 // pred_check
    _
  $region27: #{forward.11} parent=0 // pred_check_branch
    %159 = sbr.rel (0) target = $region29
  $region28: #{forward.11} parent=0 // pred_region
    _
  $region29: #{forward.11} parent=0 // pred_fallthru
    _

// kernel: forward.10
$region0: #{forward.10}
  #allocation0 [shape = 'u32[]', space=smem, size = 0x4, offset = 0x4, fixed_abs, tag = 'smem constant byte address 0x4 - core index']
  #allocation1 [shape = 'u32[144,128]{1,0:T(1,128)}', space=vmem, size = 0x12000, scoped, tag = 'internal scratch']
  #allocation2 [shape = 'f32[16,128]{1,0:T(8,128)}', space=vmem, size = 0x2000, scoped, tag = 'scratch operand']
  %s0 = inlined_call_operand.vmem [shape: bf16[16,1664], index: 0, kind: input, shape index: {}]
  %s1 = inlined_call_operand.vmem [shape: bf16[1664,128], index: 1, kind: input, shape index: {}]
  %s2 = inlined_call_operand.vmem [shape: f32[1,128], index: 2, kind: input, shape index: {}]
  %s3 = inlined_call_operand.vmem [shape: f32[16,128], index: 3, kind: output, shape index: {}]
  %s4 = sld [smem:[#allocation0]]
  $region30: #{forward.10} parent=0
    _
  %s6 = ssub.s32 1, %s4
  %s7 = scalar_select 0, %s6, %s4
  // Predicated region
  $region2: #{forward.10} parent=0 // pred_check
    _
  $region3: #{forward.10} parent=0 // pred_check_branch
    %9 = sbr.rel (0) target = $region5
  $region4: #{forward.10} parent=0 // pred_region
    _
  $region5: #{forward.10} parent=0 // pred_fallthru
    _
  // Predicated region
  $region6: #{forward.10} parent=0 // pred_check
    _
  $region7: #{forward.10} parent=0 // pred_check_branch
    %11 = sbr.rel (0) target = $region9
  $region8: #{forward.10} parent=0 // pred_region
    _
  $region9: #{forward.10} parent=0 // pred_fallthru
    _
  // Predicated region
  $region10: #{forward.10} parent=0 // pred_check
    _
  $region11: #{forward.10} parent=0 // pred_check_branch
    %13 = sbr.rel (0) target = $region13
  $region12: #{forward.10} parent=0 // pred_region
    _
  $region13: #{forward.10} parent=0 // pred_fallthru
    _
  %p15 = scmp.eq.s32.totalorder 0, 0
  // Predicated region
  $region14: #{forward.10} parent=0 // pred_check
    %p16 = pneg %p15
  $region15: #{forward.10} parent=0 // pred_check_branch
    %18 = sbr.rel (%p16) target = $region17
  $region16: #{forward.10} parent=0 // pred_region
    %19 = vst [vmem:[#allocation2] sm:$0xff] 0.0
    %20 = vst [vmem:[#allocation2 + $0x8] sm:$0xff] 0.0
  $region17: #{forward.10} parent=0 // pred_fallthru
    _
  %v21 = vld [vmem:[#allocation2] sm:$0xff]
  %v22 = vld [vmem:[#allocation2 + $0x8] sm:$0xff]
  %v23 = vld [vmem:[%s0] sm:$0xff]
  %v24 = vld [vmem:[%s0 + $0x8] sm:$0xff]
  %v25 = vld [vmem:[%s0 + $0x10] sm:$0xff]
  %v26 = vld [vmem:[%s0 + $0x18] sm:$0xff]
  %v27 = vld [vmem:[%s0 + $0x20] sm:$0xff]
  %v28 = vld [vmem:[%s0 + $0x28] sm:$0xff]
  %v29 = vld [vmem:[%s0 + $0x30] sm:$0xf]
  %v30 = vld [vmem:[%s0 + $0x34] sm:$0xff]
  %v31 = vld [vmem:[%s0 + $0x3c] sm:$0xff]
  %v32 = vld [vmem:[%s0 + $0x44] sm:$0xff]
  %v33 = vld [vmem:[%s0 + $0x4c] sm:$0xff]
  %v34 = vld [vmem:[%s0 + $0x54] sm:$0xff]
  %v35 = vld [vmem:[%s0 + $0x5c] sm:$0xff]
  %v36 = vld [vmem:[%s0 + $0x64] sm:$0xf]
  %v37 = vld [vmem:[%s1] sm:$0xf]
  %v38 = vld [vmem:[%s1 + $0x4] sm:$0xf]
  %v39 = vld [vmem:[%s1 + $0x8] sm:$0xf]
  %v40 = vld [vmem:[%s1 + $0xc] sm:$0xf]
  %v41 = vld [vmem:[%s1 + $0x10] sm:$0xf]
  %v42 = vld [vmem:[%s1 + $0x14] sm:$0xf]
  %v43 = vld [vmem:[%s1 + $0x18] sm:$0xf]
  %v44 = vld [vmem:[%s1 + $0x1c] sm:$0xf]
  %v45 = vld [vmem:[%s1 + $0x20] sm:$0xf]
  %v46 = vld [vmem:[%s1 + $0x24] sm:$0xf]
  %v47 = vld [vmem:[%s1 + $0x28] sm:$0xf]
  %v48 = vld [vmem:[%s1 + $0x2c] sm:$0xf]
  %v49 = vld [vmem:[%s1 + $0x30] sm:$0xf]
  %v50 = vld [vmem:[%s1 + $0x34] sm:$0xf]
  %v51 = vld [vmem:[%s1 + $0x38] sm:$0xf]
  %v52 = vld [vmem:[%s1 + $0x3c] sm:$0xf]
  %v53 = vld [vmem:[%s1 + $0x40] sm:$0xf]
  %v54 = vld [vmem:[%s1 + $0x44] sm:$0xf]
  %v55 = vld [vmem:[%s1 + $0x48] sm:$0xf]
  %v56 = vld [vmem:[%s1 + $0x4c] sm:$0xf]
  %v57 = vld [vmem:[%s1 + $0x50] sm:$0xf]
  %v58 = vld [vmem:[%s1 + $0x54] sm:$0xf]
  %v59 = vld [vmem:[%s1 + $0x58] sm:$0xf]
  %v60 = vld [vmem:[%s1 + $0x5c] sm:$0xf]
  %v61 = vld [vmem:[%s1 + $0x60] sm:$0xf]
  %v62 = vld [vmem:[%s1 + $0x64] sm:$0xf]
  %v63 = vld [vmem:[%s1 + $0x68] sm:$0xf]
  %v64 = vld [vmem:[%s1 + $0x6c] sm:$0xf]
  %v65 = vld [vmem:[%s1 + $0x70] sm:$0xf]
  %v66 = vld [vmem:[%s1 + $0x74] sm:$0xf]
  %v67 = vld [vmem:[%s1 + $0x78] sm:$0xf]
  %v68 = vld [vmem:[%s1 + $0x7c] sm:$0xf]
  %v69 = vld [vmem:[%s1 + $0x80] sm:$0xf]
  %v70 = vld [vmem:[%s1 + $0x84] sm:$0xf]
  %v71 = vld [vmem:[%s1 + $0x88] sm:$0xf]
  %v72 = vld [vmem:[%s1 + $0x8c] sm:$0xf]
  %v73 = vld [vmem:[%s1 + $0x90] sm:$0xf]
  %v74 = vld [vmem:[%s1 + $0x94] sm:$0xf]
  %v75 = vld [vmem:[%s1 + $0x98] sm:$0xf]
  %v76 = vld [vmem:[%s1 + $0x9c] sm:$0xf]
  %v77 = vld [vmem:[%s1 + $0xa0] sm:$0xf]
  %v78 = vld [vmem:[%s1 + $0xa4] sm:$0xf]
  %v79 = vld [vmem:[%s1 + $0xa8] sm:$0xf]
  %v80 = vld [vmem:[%s1 + $0xac] sm:$0xf]
  %v81 = vld [vmem:[%s1 + $0xb0] sm:$0xf]
  %v82 = vld [vmem:[%s1 + $0xb4] sm:$0xf]
  %v83 = vld [vmem:[%s1 + $0xb8] sm:$0xf]
  %v84 = vld [vmem:[%s1 + $0xbc] sm:$0xf]
  %v85 = vld [vmem:[%s1 + $0xc0] sm:$0xf]
  %v86 = vld [vmem:[%s1 + $0xc4] sm:$0xf]
  %v87 = vld [vmem:[%s1 + $0xc8] sm:$0xf]
  %v88 = vld [vmem:[%s1 + $0xcc] sm:$0xf]
  %v89 = vld [vmem:[%s1 + $0xd0] sm:$0xf]
  %v90 = vld [vmem:[%s1 + $0xd4] sm:$0xf]
  %v91 = vld [vmem:[%s1 + $0xd8] sm:$0xf]
  %v92 = vld [vmem:[%s1 + $0xdc] sm:$0xf]
  %v93 = vld [vmem:[%s1 + $0xe0] sm:$0xf]
  %v94 = vld [vmem:[%s1 + $0xe4] sm:$0xf]
  %v95 = vld [vmem:[%s1 + $0xe8] sm:$0xf]
  %v96 = vld [vmem:[%s1 + $0xec] sm:$0xf]
  %v97 = vld [vmem:[%s1 + $0xf0] sm:$0xf]
  %v98 = vld [vmem:[%s1 + $0xf4] sm:$0xf]
  %v99 = vld [vmem:[%s1 + $0xf8] sm:$0xf]
  %v100 = vld [vmem:[%s1 + $0xfc] sm:$0xf]
  %v101 = vld [vmem:[%s1 + $0x100] sm:$0xf]
  %v102 = vld [vmem:[%s1 + $0x104] sm:$0xf]
  %v103 = vld [vmem:[%s1 + $0x108] sm:$0xf]
  %v104 = vld [vmem:[%s1 + $0x10c] sm:$0xf]
  %v105 = vld [vmem:[%s1 + $0x110] sm:$0xf]
  %v106 = vld [vmem:[%s1 + $0x114] sm:$0xf]
  %v107 = vld [vmem:[%s1 + $0x118] sm:$0xf]
  %v108 = vld [vmem:[%s1 + $0x11c] sm:$0xf]
  %v109 = vld [vmem:[%s1 + $0x120] sm:$0xf]
  %v110 = vld [vmem:[%s1 + $0x124] sm:$0xf]
  %v111 = vld [vmem:[%s1 + $0x128] sm:$0xf]
  %v112 = vld [vmem:[%s1 + $0x12c] sm:$0xf]
  %v113 = vld [vmem:[%s1 + $0x130] sm:$0xf]
  %v114 = vld [vmem:[%s1 + $0x134] sm:$0xf]
  %v115 = vld [vmem:[%s1 + $0x138] sm:$0xf]
  %v116 = vld [vmem:[%s1 + $0x13c] sm:$0xf]
  %v117 = vld [vmem:[%s1 + $0x140] sm:$0xf]
  %v118 = vld [vmem:[%s1 + $0x144] sm:$0xf]
  %v119 = vld [vmem:[%s1 + $0x148] sm:$0xf]
  %v120 = vld [vmem:[%s1 + $0x14c] sm:$0xf]
  %v121 = vld [vmem:[%s1 + $0x150] sm:$0xf]
  %v122 = vld [vmem:[%s1 + $0x154] sm:$0xf]
  %v123 = vld [vmem:[%s1 + $0x158] sm:$0xf]
  %v124 = vld [vmem:[%s1 + $0x15c] sm:$0xf]
  %v125 = vld [vmem:[%s1 + $0x160] sm:$0xf]
  %v126 = vld [vmem:[%s1 + $0x164] sm:$0xf]
  %v127 = vld [vmem:[%s1 + $0x168] sm:$0xf]
  %v128 = vld [vmem:[%s1 + $0x16c] sm:$0xf]
  %v129 = vld [vmem:[%s1 + $0x170] sm:$0xf]
  %v130 = vld [vmem:[%s1 + $0x174] sm:$0xf]
  %v131 = vld [vmem:[%s1 + $0x178] sm:$0xf]
  %v132 = vld [vmem:[%s1 + $0x17c] sm:$0xf]
  %v133 = vld [vmem:[%s1 + $0x180] sm:$0xf]
  %v134 = vld [vmem:[%s1 + $0x184] sm:$0xf]
  %v135 = vld [vmem:[%s1 + $0x188] sm:$0xf]
  %v136 = vld [vmem:[%s1 + $0x18c] sm:$0xf]
  %v137 = vld [vmem:[%s1 + $0x190] sm:$0xf]
  %v138 = vld [vmem:[%s1 + $0x194] sm:$0xf]
  %v139 = vld [vmem:[%s1 + $0x198] sm:$0xf]
  %v140 = vld [vmem:[%s1 + $0x19c] sm:$0xf]
  %v141 = vld [vmem:[%s1 + $0x1a0] sm:$0xf]
  %v142 = vld [vmem:[%s1 + $0x1a4] sm:$0xf]
  %v143 = vld [vmem:[%s1 + $0x1a8] sm:$0xf]
  %v144 = vld [vmem:[%s1 + $0x1ac] sm:$0xf]
  %v145 = vld [vmem:[%s1 + $0x1b0] sm:$0xf]
  %v146 = vld [vmem:[%s1 + $0x1b4] sm:$0xf]
  %v147 = vld [vmem:[%s1 + $0x1b8] sm:$0xf]
  %v148 = vld [vmem:[%s1 + $0x1bc] sm:$0xf]
  %v149 = vld [vmem:[%s1 + $0x1c0] sm:$0xf]
  %v150 = vld [vmem:[%s1 + $0x1c4] sm:$0xf]
  %v151 = vld [vmem:[%s1 + $0x1c8] sm:$0xf]
  %v152 = vld [vmem:[%s1 + $0x1cc] sm:$0xf]
  %v153 = vld [vmem:[%s1 + $0x1d0] sm:$0xf]
  %v154 = vld [vmem:[%s1 + $0x1d4] sm:$0xf]
  %v155 = vld [vmem:[%s1 + $0x1d8] sm:$0xf]
  %v156 = vld [vmem:[%s1 + $0x1dc] sm:$0xf]
  %v157 = vld [vmem:[%s1 + $0x1e0] sm:$0xf]
  %v158 = vld [vmem:[%s1 + $0x1e4] sm:$0xf]
  %v159 = vld [vmem:[%s1 + $0x1e8] sm:$0xf]
  %v160 = vld [vmem:[%s1 + $0x1ec] sm:$0xf]
  %v161 = vld [vmem:[%s1 + $0x1f0] sm:$0xf]
  %v162 = vld [vmem:[%s1 + $0x1f4] sm:$0xf]
  %v163 = vld [vmem:[%s1 + $0x1f8] sm:$0xf]
  %v164 = vld [vmem:[%s1 + $0x1fc] sm:$0xf]
  %v165 = vld [vmem:[%s1 + $0x200] sm:$0xf]
  %v166 = vld [vmem:[%s1 + $0x204] sm:$0xf]
  %v167 = vld [vmem:[%s1 + $0x208] sm:$0xf]
  %v168 = vld [vmem:[%s1 + $0x20c] sm:$0xf]
  %v169 = vld [vmem:[%s1 + $0x210] sm:$0xf]
  %v170 = vld [vmem:[%s1 + $0x214] sm:$0xf]
  %v171 = vld [vmem:[%s1 + $0x218] sm:$0xf]
  %v172 = vld [vmem:[%s1 + $0x21c] sm:$0xf]
  %v173 = vld [vmem:[%s1 + $0x220] sm:$0xf]
  %v174 = vld [vmem:[%s1 + $0x224] sm:$0xf]
  %v175 = vld [vmem:[%s1 + $0x228] sm:$0xf]
  %v176 = vld [vmem:[%s1 + $0x22c] sm:$0xf]
  %v177 = vld [vmem:[%s1 + $0x230] sm:$0xf]
  %v178 = vld [vmem:[%s1 + $0x234] sm:$0xf]
  %v179 = vld [vmem:[%s1 + $0x238] sm:$0xf]
  %v180 = vld [vmem:[%s1 + $0x23c] sm:$0xf]
  %v181 = vld [vmem:[%s1 + $0x240] sm:$0xf]
  %v182 = vld [vmem:[%s1 + $0x244] sm:$0xf]
  %v183 = vld [vmem:[%s1 + $0x248] sm:$0xf]
  %v184 = vld [vmem:[%s1 + $0x24c] sm:$0xf]
  %v185 = vld [vmem:[%s1 + $0x250] sm:$0xf]
  %v186 = vld [vmem:[%s1 + $0x254] sm:$0xf]
  %v187 = vld [vmem:[%s1 + $0x258] sm:$0xf]
  %v188 = vld [vmem:[%s1 + $0x25c] sm:$0xf]
  %v189 = vld [vmem:[%s1 + $0x260] sm:$0xf]
  %v190 = vld [vmem:[%s1 + $0x264] sm:$0xf]
  %v191 = vld [vmem:[%s1 + $0x268] sm:$0xf]
  %v192 = vld [vmem:[%s1 + $0x26c] sm:$0xf]
  %v193 = vld [vmem:[%s1 + $0x270] sm:$0xf]
  %v194 = vld [vmem:[%s1 + $0x274] sm:$0xf]
  %v195 = vld [vmem:[%s1 + $0x278] sm:$0xf]
  %v196 = vld [vmem:[%s1 + $0x27c] sm:$0xf]
  %v197 = vld [vmem:[%s1 + $0x280] sm:$0xf]
  %v198 = vld [vmem:[%s1 + $0x284] sm:$0xf]
  %v199 = vld [vmem:[%s1 + $0x288] sm:$0xf]
  %v200 = vld [vmem:[%s1 + $0x28c] sm:$0xf]
  %v201 = vld [vmem:[%s1 + $0x290] sm:$0xf]
  %v202 = vld [vmem:[%s1 + $0x294] sm:$0xf]
  %v203 = vld [vmem:[%s1 + $0x298] sm:$0xf]
  %v204 = vld [vmem:[%s1 + $0x29c] sm:$0xf]
  %v205 = vld [vmem:[%s1 + $0x2a0] sm:$0xf]
  %v206 = vld [vmem:[%s1 + $0x2a4] sm:$0xf]
  %v207 = vld [vmem:[%s1 + $0x2a8] sm:$0xf]
  %v208 = vld [vmem:[%s1 + $0x2ac] sm:$0xf]
  %v209 = vld [vmem:[%s1 + $0x2b0] sm:$0xf]
  %v210 = vld [vmem:[%s1 + $0x2b4] sm:$0xf]
  %v211 = vld [vmem:[%s1 + $0x2b8] sm:$0xf]
  %v212 = vld [vmem:[%s1 + $0x2bc] sm:$0xf]
  %v213 = vld [vmem:[%s1 + $0x2c0] sm:$0xf]
  %v214 = vld [vmem:[%s1 + $0x2c4] sm:$0xf]
  %v215 = vld [vmem:[%s1 + $0x2c8] sm:$0xf]
  %v216 = vld [vmem:[%s1 + $0x2cc] sm:$0xf]
  %v217 = vld [vmem:[%s1 + $0x2d0] sm:$0xf]
  %v218 = vld [vmem:[%s1 + $0x2d4] sm:$0xf]
  %v219 = vld [vmem:[%s1 + $0x2d8] sm:$0xf]
  %v220 = vld [vmem:[%s1 + $0x2dc] sm:$0xf]
  %v221 = vld [vmem:[%s1 + $0x2e0] sm:$0xf]
  %v222 = vld [vmem:[%s1 + $0x2e4] sm:$0xf]
  %v223 = vld [vmem:[%s1 + $0x2e8] sm:$0xf]
  %v224 = vld [vmem:[%s1 + $0x2ec] sm:$0xf]
  %v225 = vld [vmem:[%s1 + $0x2f0] sm:$0xf]
  %v226 = vld [vmem:[%s1 + $0x2f4] sm:$0xf]
  %v227 = vld [vmem:[%s1 + $0x2f8] sm:$0xf]
  %v228 = vld [vmem:[%s1 + $0x2fc] sm:$0xf]
  %v229 = vld [vmem:[%s1 + $0x300] sm:$0xf]
  %v230 = vld [vmem:[%s1 + $0x304] sm:$0xf]
  %v231 = vld [vmem:[%s1 + $0x308] sm:$0xf]
  %v232 = vld [vmem:[%s1 + $0x30c] sm:$0xf]
  %v233 = vld [vmem:[%s1 + $0x310] sm:$0xf]
  %v234 = vld [vmem:[%s1 + $0x314] sm:$0xf]
  %v235 = vld [vmem:[%s1 + $0x318] sm:$0xf]
  %v236 = vld [vmem:[%s1 + $0x31c] sm:$0xf]
  %v237 = vld [vmem:[%s1 + $0x320] sm:$0xf]
  %v238 = vld [vmem:[%s1 + $0x324] sm:$0xf]
  %v239 = vld [vmem:[%s1 + $0x328] sm:$0xf]
  %v240 = vld [vmem:[%s1 + $0x32c] sm:$0xf]
  %v241 = vld [vmem:[%s1 + $0x330] sm:$0xf]
  %v242 = vld [vmem:[%s1 + $0x334] sm:$0xf]
  %v243 = vld [vmem:[%s1 + $0x338] sm:$0xf]
  %v244 = vld [vmem:[%s1 + $0x33c] sm:$0xf]
  %v259 = vunpack.c.l.b16 %v23
  %v260 = vunpack.c.h.b16 %v23
  %v261 = vunpack.c.l.b16 %v24
  %v262 = vunpack.c.h.b16 %v24
  %v263 = vunpack.c.l.b16 %v25
  %v264 = vunpack.c.h.b16 %v25
  %v265 = vunpack.c.l.b16 %v26
  %v266 = vunpack.c.h.b16 %v26
  %v267 = vunpack.c.l.b16 %v27
  %v268 = vunpack.c.h.b16 %v27
  %v269 = vunpack.c.l.b16 %v28
  %v270 = vunpack.c.h.b16 %v28
  %v271 = vunpack.c.l.b16 %v29
  %v272 = vunpack.c.l.b16 %v30
  %v273 = vunpack.c.h.b16 %v30
  %v274 = vunpack.c.l.b16 %v31
  %v275 = vunpack.c.h.b16 %v31
  %v276 = vunpack.c.l.b16 %v32
  %v277 = vunpack.c.h.b16 %v32
  %v278 = vunpack.c.l.b16 %v33
  %v279 = vunpack.c.h.b16 %v33
  %v280 = vunpack.c.l.b16 %v34
  %v281 = vunpack.c.h.b16 %v34
  %v282 = vunpack.c.l.b16 %v35
  %v283 = vunpack.c.h.b16 %v35
  %v284 = vunpack.c.l.b16 %v36
  %v285 = vpack.c.b16 %v272, %v259
  %v286 = vpack.c.b16 %v273, %v260
  %v287 = vpack.c.b16 %v274, %v261
  %v288 = vpack.c.b16 %v275, %v262
  %v289 = vpack.c.b16 %v276, %v263
  %v290 = vpack.c.b16 %v277, %v264
  %v291 = vpack.c.b16 %v278, %v265
  %v292 = vpack.c.b16 %v279, %v266
  %v293 = vpack.c.b16 %v280, %v267
  %v294 = vpack.c.b16 %v281, %v268
  %v295 = vpack.c.b16 %v282, %v269
  %v296 = vpack.c.b16 %v283, %v270
  %v297 = vpack.c.b16 %v284, %v271
  %v519 = vunpack.c.l.b16 %v37
  %v520 = vunpack.c.l.b16 %v38
  %v521 = vunpack.c.l.b16 %v39
  %v522 = vunpack.c.l.b16 %v40
  %v523 = vunpack.c.l.b16 %v41
  %v524 = vunpack.c.l.b16 %v42
  %v525 = vunpack.c.l.b16 %v43
  %v526 = vunpack.c.l.b16 %v44
  %v527 = vunpack.c.l.b16 %v45
  %v528 = vunpack.c.l.b16 %v46
  %v529 = vunpack.c.l.b16 %v47
  %v530 = vunpack.c.l.b16 %v48
  %v531 = vunpack.c.l.b16 %v49
  %v532 = vunpack.c.l.b16 %v50
  %v533 = vunpack.c.l.b16 %v51
  %v534 = vunpack.c.l.b16 %v52
  %v535 = vunpack.c.l.b16 %v53
  %v536 = vunpack.c.l.b16 %v54
  %v537 = vunpack.c.l.b16 %v55
  %v538 = vunpack.c.l.b16 %v56
  %v539 = vunpack.c.l.b16 %v57
  %v540 = vunpack.c.l.b16 %v58
  %v541 = vunpack.c.l.b16 %v59
  %v542 = vunpack.c.l.b16 %v60
  %v543 = vunpack.c.l.b16 %v61
  %v544 = vunpack.c.l.b16 %v62
  %v545 = vunpack.c.l.b16 %v63
  %v546 = vunpack.c.l.b16 %v64
  %v547 = vunpack.c.l.b16 %v65
  %v548 = vunpack.c.l.b16 %v66
  %v549 = vunpack.c.l.b16 %v67
  %v550 = vunpack.c.l.b16 %v68
  %v551 = vunpack.c.l.b16 %v69
  %v552 = vunpack.c.l.b16 %v70
  %v553 = vunpack.c.l.b16 %v71
  %v554 = vunpack.c.l.b16 %v72
  %v555 = vunpack.c.l.b16 %v73
  %v556 = vunpack.c.l.b16 %v74
  %v557 = vunpack.c.l.b16 %v75
  %v558 = vunpack.c.l.b16 %v76
  %v559 = vunpack.c.l.b16 %v77
  %v560 = vunpack.c.l.b16 %v78
  %v561 = vunpack.c.l.b16 %v79
  %v562 = vunpack.c.l.b16 %v80
  %v563 = vunpack.c.l.b16 %v81
  %v564 = vunpack.c.l.b16 %v82
  %v565 = vunpack.c.l.b16 %v83
  %v566 = vunpack.c.l.b16 %v84
  %v567 = vunpack.c.l.b16 %v85
  %v568 = vunpack.c.l.b16 %v86
  %v569 = vunpack.c.l.b16 %v87
  %v570 = vunpack.c.l.b16 %v88
  %v571 = vunpack.c.l.b16 %v89
  %v572 = vunpack.c.l.b16 %v90
  %v573 = vunpack.c.l.b16 %v91
  %v574 = vunpack.c.l.b16 %v92
  %v575 = vunpack.c.l.b16 %v93
  %v576 = vunpack.c.l.b16 %v94
  %v577 = vunpack.c.l.b16 %v95
  %v578 = vunpack.c.l.b16 %v96
  %v579 = vunpack.c.l.b16 %v97
  %v580 = vunpack.c.l.b16 %v98
  %v581 = vunpack.c.l.b16 %v99
  %v582 = vunpack.c.l.b16 %v100
  %v583 = vunpack.c.l.b16 %v101
  %v584 = vunpack.c.l.b16 %v102
  %v585 = vunpack.c.l.b16 %v103
  %v586 = vunpack.c.l.b16 %v104
  %v587 = vunpack.c.l.b16 %v105
  %v588 = vunpack.c.l.b16 %v106
  %v589 = vunpack.c.l.b16 %v107
  %v590 = vunpack.c.l.b16 %v108
  %v591 = vunpack.c.l.b16 %v109
  %v592 = vunpack.c.l.b16 %v110
  %v593 = vunpack.c.l.b16 %v111
  %v594 = vunpack.c.l.b16 %v112
  %v595 = vunpack.c.l.b16 %v113
  %v596 = vunpack.c.l.b16 %v114
  %v597 = vunpack.c.l.b16 %v115
  %v598 = vunpack.c.l.b16 %v116
  %v599 = vunpack.c.l.b16 %v117
  %v600 = vunpack.c.l.b16 %v118
  %v601 = vunpack.c.l.b16 %v119
  %v602 = vunpack.c.l.b16 %v120
  %v603 = vunpack.c.l.b16 %v121
  %v604 = vunpack.c.l.b16 %v122
  %v605 = vunpack.c.l.b16 %v123
  %v606 = vunpack.c.l.b16 %v124
  %v607 = vunpack.c.l.b16 %v125
  %v608 = vunpack.c.l.b16 %v126
  %v609 = vunpack.c.l.b16 %v127
  %v610 = vunpack.c.l.b16 %v128
  %v611 = vunpack.c.l.b16 %v129
  %v612 = vunpack.c.l.b16 %v130
  %v613 = vunpack.c.l.b16 %v131
  %v614 = vunpack.c.l.b16 %v132
  %v615 = vunpack.c.l.b16 %v133
  %v616 = vunpack.c.l.b16 %v134
  %v617 = vunpack.c.l.b16 %v135
  %v618 = vunpack.c.l.b16 %v136
  %v619 = vunpack.c.l.b16 %v137
  %v620 = vunpack.c.l.b16 %v138
  %v621 = vunpack.c.l.b16 %v139
  %v622 = vunpack.c.l.b16 %v140
  %v623 = vunpack.c.l.b16 %v141
  %v624 = vunpack.c.l.b16 %v142
  %v625 = vunpack.c.l.b16 %v143
  %v626 = vunpack.c.l.b16 %v144
  %v627 = vunpack.c.l.b16 %v145
  %v628 = vunpack.c.l.b16 %v146
  %v629 = vunpack.c.l.b16 %v147
  %v630 = vunpack.c.l.b16 %v148
  %v631 = vunpack.c.l.b16 %v149
  %v632 = vunpack.c.l.b16 %v150
  %v633 = vunpack.c.l.b16 %v151
  %v634 = vunpack.c.l.b16 %v152
  %v635 = vunpack.c.l.b16 %v153
  %v636 = vunpack.c.l.b16 %v154
  %v637 = vunpack.c.l.b16 %v155
  %v638 = vunpack.c.l.b16 %v156
  %v639 = vunpack.c.l.b16 %v157
  %v640 = vunpack.c.l.b16 %v158
  %v641 = vunpack.c.l.b16 %v159
  %v642 = vunpack.c.l.b16 %v160
  %v643 = vunpack.c.l.b16 %v161
  %v644 = vunpack.c.l.b16 %v162
  %v645 = vunpack.c.l.b16 %v163
  %v646 = vunpack.c.l.b16 %v164
  %v647 = vunpack.c.l.b16 %v165
  %v648 = vunpack.c.l.b16 %v166
  %v649 = vunpack.c.l.b16 %v167
  %v650 = vunpack.c.l.b16 %v168
  %v651 = vunpack.c.l.b16 %v169
  %v652 = vunpack.c.l.b16 %v170
  %v653 = vunpack.c.l.b16 %v171
  %v654 = vunpack.c.l.b16 %v172
  %v655 = vunpack.c.l.b16 %v173
  %v656 = vunpack.c.l.b16 %v174
  %v657 = vunpack.c.l.b16 %v175
  %v658 = vunpack.c.l.b16 %v176
  %v659 = vunpack.c.l.b16 %v177
  %v660 = vunpack.c.l.b16 %v178
  %v661 = vunpack.c.l.b16 %v179
  %v662 = vunpack.c.l.b16 %v180
  %v663 = vunpack.c.l.b16 %v181
  %v664 = vunpack.c.l.b16 %v182
  %v665 = vunpack.c.l.b16 %v183
  %v666 = vunpack.c.l.b16 %v184
  %v667 = vunpack.c.l.b16 %v185
  %v668 = vunpack.c.l.b16 %v186
  %v669 = vunpack.c.l.b16 %v187
  %v670 = vunpack.c.l.b16 %v188
  %v671 = vunpack.c.l.b16 %v189
  %v672 = vunpack.c.l.b16 %v190
  %v673 = vunpack.c.l.b16 %v191
  %v674 = vunpack.c.l.b16 %v192
  %v675 = vunpack.c.l.b16 %v193
  %v676 = vunpack.c.l.b16 %v194
  %v677 = vunpack.c.l.b16 %v195
  %v678 = vunpack.c.l.b16 %v196
  %v679 = vunpack.c.l.b16 %v197
  %v680 = vunpack.c.l.b16 %v198
  %v681 = vunpack.c.l.b16 %v199
  %v682 = vunpack.c.l.b16 %v200
  %v683 = vunpack.c.l.b16 %v201
  %v684 = vunpack.c.l.b16 %v202
  %v685 = vunpack.c.l.b16 %v203
  %v686 = vunpack.c.l.b16 %v204
  %v687 = vunpack.c.l.b16 %v205
  %v688 = vunpack.c.l.b16 %v206
  %v689 = vunpack.c.l.b16 %v207
  %v690 = vunpack.c.l.b16 %v208
  %v691 = vunpack.c.l.b16 %v209
  %v692 = vunpack.c.l.b16 %v210
  %v693 = vunpack.c.l.b16 %v211
  %v694 = vunpack.c.l.b16 %v212
  %v695 = vunpack.c.l.b16 %v213
  %v696 = vunpack.c.l.b16 %v214
  %v697 = vunpack.c.l.b16 %v215
  %v698 = vunpack.c.l.b16 %v216
  %v699 = vunpack.c.l.b16 %v217
  %v700 = vunpack.c.l.b16 %v218
  %v701 = vunpack.c.l.b16 %v219
  %v702 = vunpack.c.l.b16 %v220
  %v703 = vunpack.c.l.b16 %v221
  %v704 = vunpack.c.l.b16 %v222
  %v705 = vunpack.c.l.b16 %v223
  %v706 = vunpack.c.l.b16 %v224
  %v707 = vunpack.c.l.b16 %v225
  %v708 = vunpack.c.l.b16 %v226
  %v709 = vunpack.c.l.b16 %v227
  %v710 = vunpack.c.l.b16 %v228
  %v711 = vunpack.c.l.b16 %v229
  %v712 = vunpack.c.l.b16 %v230
  %v713 = vunpack.c.l.b16 %v231
  %v714 = vunpack.c.l.b16 %v232
  %v715 = vunpack.c.l.b16 %v233
  %v716 = vunpack.c.l.b16 %v234
  %v717 = vunpack.c.l.b16 %v235
  %v718 = vunpack.c.l.b16 %v236
  %v719 = vunpack.c.l.b16 %v237
  %v720 = vunpack.c.l.b16 %v238
  %v721 = vunpack.c.l.b16 %v239
  %v722 = vunpack.c.l.b16 %v240
  %v723 = vunpack.c.l.b16 %v241
  %v724 = vunpack.c.l.b16 %v242
  %v725 = vunpack.c.l.b16 %v243
  %v726 = vunpack.c.l.b16 %v244
  %v727 = vpack.c.b16 %v520, %v519
  %v728 = vpack.c.b16 %v522, %v521
  %v729 = vpack.c.b16 %v524, %v523
  %v730 = vpack.c.b16 %v526, %v525
  %v731 = vpack.c.b16 %v528, %v527
  %v732 = vpack.c.b16 %v530, %v529
  %v733 = vpack.c.b16 %v532, %v531
  %v734 = vpack.c.b16 %v534, %v533
  %v735 = vpack.c.b16 %v536, %v535
  %v736 = vpack.c.b16 %v538, %v537
  %v737 = vpack.c.b16 %v540, %v539
  %v738 = vpack.c.b16 %v542, %v541
  %v739 = vpack.c.b16 %v544, %v543
  %v740 = vpack.c.b16 %v546, %v545
  %v741 = vpack.c.b16 %v548, %v547
  %v742 = vpack.c.b16 %v550, %v549
  %v743 = vpack.c.b16 %v552, %v551
  %v744 = vpack.c.b16 %v554, %v553
  %v745 = vpack.c.b16 %v556, %v555
  %v746 = vpack.c.b16 %v558, %v557
  %v747 = vpack.c.b16 %v560, %v559
  %v748 = vpack.c.b16 %v562, %v561
  %v749 = vpack.c.b16 %v564, %v563
  %v750 = vpack.c.b16 %v566, %v565
  %v751 = vpack.c.b16 %v568, %v567
  %v752 = vpack.c.b16 %v570, %v569
  %v753 = vpack.c.b16 %v572, %v571
  %v754 = vpack.c.b16 %v574, %v573
  %v755 = vpack.c.b16 %v576, %v575
  %v756 = vpack.c.b16 %v578, %v577
  %v757 = vpack.c.b16 %v580, %v579
  %v758 = vpack.c.b16 %v582, %v581
  %v759 = vpack.c.b16 %v584, %v583
  %v760 = vpack.c.b16 %v586, %v585
  %v761 = vpack.c.b16 %v588, %v587
  %v762 = vpack.c.b16 %v590, %v589
  %v763 = vpack.c.b16 %v592, %v591
  %v764 = vpack.c.b16 %v594, %v593
  %v765 = vpack.c.b16 %v596, %v595
  %v766 = vpack.c.b16 %v598, %v597
  %v767 = vpack.c.b16 %v600, %v599
  %v768 = vpack.c.b16 %v602, %v601
  %v769 = vpack.c.b16 %v604, %v603
  %v770 = vpack.c.b16 %v606, %v605
  %v771 = vpack.c.b16 %v608, %v607
  %v772 = vpack.c.b16 %v610, %v609
  %v773 = vpack.c.b16 %v612, %v611
  %v774 = vpack.c.b16 %v614, %v613
  %v775 = vpack.c.b16 %v616, %v615
  %v776 = vpack.c.b16 %v618, %v617
  %v777 = vpack.c.b16 %v620, %v619
  %v778 = vpack.c.b16 %v622, %v621
  %v779 = vpack.c.b16 %v624, %v623
  %v780 = vpack.c.b16 %v626, %v625
  %v781 = vpack.c.b16 %v628, %v627
  %v782 = vpack.c.b16 %v630, %v629
  %v783 = vpack.c.b16 %v632, %v631
  %v784 = vpack.c.b16 %v634, %v633
  %v785 = vpack.c.b16 %v636, %v635
  %v786 = vpack.c.b16 %v638, %v637
  %v787 = vpack.c.b16 %v640, %v639
  %v788 = vpack.c.b16 %v642, %v641
  %v789 = vpack.c.b16 %v644, %v643
  %v790 = vpack.c.b16 %v646, %v645
  %v791 = vpack.c.b16 %v648, %v647
  %v792 = vpack.c.b16 %v650, %v649
  %v793 = vpack.c.b16 %v652, %v651
  %v794 = vpack.c.b16 %v654, %v653
  %v795 = vpack.c.b16 %v656, %v655
  %v796 = vpack.c.b16 %v658, %v657
  %v797 = vpack.c.b16 %v660, %v659
  %v798 = vpack.c.b16 %v662, %v661
  %v799 = vpack.c.b16 %v664, %v663
  %v800 = vpack.c.b16 %v666, %v665
  %v801 = vpack.c.b16 %v668, %v667
  %v802 = vpack.c.b16 %v670, %v669
  %v803 = vpack.c.b16 %v672, %v671
  %v804 = vpack.c.b16 %v674, %v673
  %v805 = vpack.c.b16 %v676, %v675
  %v806 = vpack.c.b16 %v678, %v677
  %v807 = vpack.c.b16 %v680, %v679
  %v808 = vpack.c.b16 %v682, %v681
  %v809 = vpack.c.b16 %v684, %v683
  %v810 = vpack.c.b16 %v686, %v685
  %v811 = vpack.c.b16 %v688, %v687
  %v812 = vpack.c.b16 %v690, %v689
  %v813 = vpack.c.b16 %v692, %v691
  %v814 = vpack.c.b16 %v694, %v693
  %v815 = vpack.c.b16 %v696, %v695
  %v816 = vpack.c.b16 %v698, %v697
  %v817 = vpack.c.b16 %v700, %v699
  %v818 = vpack.c.b16 %v702, %v701
  %v819 = vpack.c.b16 %v704, %v703
  %v820 = vpack.c.b16 %v706, %v705
  %v821 = vpack.c.b16 %v708, %v707
  %v822 = vpack.c.b16 %v710, %v709
  %v823 = vpack.c.b16 %v712, %v711
  %v824 = vpack.c.b16 %v714, %v713
  %v825 = vpack.c.b16 %v716, %v715
  %v826 = vpack.c.b16 %v718, %v717
  %v827 = vpack.c.b16 %v720, %v719
  %v828 = vpack.c.b16 %v722, %v721
  %v829 = vpack.c.b16 %v724, %v723
  %v830 = vpack.c.b16 %v726, %v725
  %935 = vmatprep.subr.bf16.mxu0 0
  %936 = vmatpush1.bf16.msra.mxu0 %v727
  %937 = vmatprep.subr.bf16.mxu0 0
  %938 = vmatpush1.bf16.msra.mxu0 %v728
  %939 = vmatprep.subr.bf16.mxu0 0
  %940 = vmatpush1.bf16.msra.mxu0 %v729
  %941 = vmatprep.subr.bf16.mxu0 0
  %942 = vmatpush1.bf16.msra.mxu0 %v730
  %943 = vmatprep.subr.bf16.mxu0 0
  %944 = vmatpush1.bf16.msra.mxu0 %v731
  %945 = vmatprep.subr.bf16.mxu0 0
  %946 = vmatpush1.bf16.msra.mxu0 %v732
  %947 = vmatprep.subr.bf16.mxu0 0
  %948 = vmatpush1.bf16.msra.mxu0 %v733
  %949 = vmatprep.subr.bf16.mxu0 0
  %950 = vmatpush1.bf16.msra.mxu0 %v734
  %951 = vmatprep.subr.bf16.mxu0 0
  %952 = vmatpush1.bf16.msra.mxu0 %v735
  %953 = vmatprep.subr.bf16.mxu0 0
  %954 = vmatpush1.bf16.msra.mxu0 %v736
  %955 = vmatprep.subr.bf16.mxu0 0
  %956 = vmatpush1.bf16.msra.mxu0 %v737
  %957 = vmatprep.subr.bf16.mxu0 0
  %958 = vmatpush1.bf16.msra.mxu0 %v738
  %959 = vmatprep.subr.bf16.mxu0 0
  %960 = vmatpush1.bf16.msra.mxu0 %v739
  %961 = vmatprep.subr.bf16.mxu0 0
  %962 = vmatpush1.bf16.msra.mxu0 %v740
  %963 = vmatprep.subr.bf16.mxu0 0
  %964 = vmatpush1.bf16.msra.mxu0 %v741
  %965 = vmatprep.subr.bf16.mxu0 0
  %966 = vmatpush1.bf16.msra.mxu0 %v742
  %967 = vmatprep.mubr.bf16.mxu0 %v286
  %968 = vmatmul.mubr.bf16.gmra.mrb[0].mxu0 %v285
  %v969 = vpop.f32.mrb[0].mxu0
  %v970 = vadd.f32 0.0, %v969
  %v971 = vpop.f32.mrb[0].mxu0
  %v972 = vpop.f32.mrb[0].mxu0
  %v973 = vadd.f32 0.0, %v972
  %v974 = vpop.f32.mrb[0].mxu0
  %975 = vdwg.mxu0
  %976 = vmatprep.subr.bf16.mxu0 0
  %977 = vmatpush1.bf16.msra.mxu0 %v743
  %978 = vmatprep.subr.bf16.mxu0 0
  %979 = vmatpush1.bf16.msra.mxu0 %v744
  %980 = vmatprep.subr.bf16.mxu0 0
  %981 = vmatpush1.bf16.msra.mxu0 %v745
  %982 = vmatprep.subr.bf16.mxu0 0
  %983 = vmatpush1.bf16.msra.mxu0 %v746
  %984 = vmatprep.subr.bf16.mxu0 0
  %985 = vmatpush1.bf16.msra.mxu0 %v747
  %986 = vmatprep.subr.bf16.mxu0 0
  %987 = vmatpush1.bf16.msra.mxu0 %v748
  %988 = vmatprep.subr.bf16.mxu0 0
  %989 = vmatpush1.bf16.msra.mxu0 %v749
  %990 = vmatprep.subr.bf16.mxu0 0
  %991 = vmatpush1.bf16.msra.mxu0 %v750
  %992 = vmatprep.subr.bf16.mxu0 0
  %993 = vmatpush1.bf16.msra.mxu0 %v751
  %994 = vmatprep.subr.bf16.mxu0 0
  %995 = vmatpush1.bf16.msra.mxu0 %v752
  %996 = vmatprep.subr.bf16.mxu0 0
  %997 = vmatpush1.bf16.msra.mxu0 %v753
  %998 = vmatprep.subr.bf16.mxu0 0
  %999 = vmatpush1.bf16.msra.mxu0 %v754
  %1000 = vmatprep.subr.bf16.mxu0 0
  %1001 = vmatpush1.bf16.msra.mxu0 %v755
  %1002 = vmatprep.subr.bf16.mxu0 0
  %1003 = vmatpush1.bf16.msra.mxu0 %v756
  %1004 = vmatprep.subr.bf16.mxu0 0
  %1005 = vmatpush1.bf16.msra.mxu0 %v757
  %1006 = vmatprep.subr.bf16.mxu0 0
  %1007 = vmatpush1.bf16.msra.mxu0 %v758
  %1008 = vmatprep.mubr.bf16.mxu0 %v288
  %1009 = vmatmul.mubr.bf16.gmra.mrb[0].mxu0 %v287
  %v1010 = vpop.f32.mrb[0].mxu0
  %v1011 = vadd.f32 %v970, %v1010
  %v1012 = vpop.f32.mrb[0].mxu0
  %v1013 = vpop.f32.mrb[0].mxu0
  %v1014 = vadd.f32 %v973, %v1013
  %v1015 = vpop.f32.mrb[0].mxu0
  %1016 = vdwg.mxu0
  %1017 = vmatprep.subr.bf16.mxu0 0
  %1018 = vmatpush1.bf16.msra.mxu0 %v759
  %1019 = vmatprep.subr.bf16.mxu0 0
  %1020 = vmatpush1.bf16.msra.mxu0 %v760
  %1021 = vmatprep.subr.bf16.mxu0 0
  %1022 = vmatpush1.bf16.msra.mxu0 %v761
  %1023 = vmatprep.subr.bf16.mxu0 0
  %1024 = vmatpush1.bf16.msra.mxu0 %v762
  %1025 = vmatprep.subr.bf16.mxu0 0
  %1026 = vmatpush1.bf16.msra.mxu0 %v763
  %1027 = vmatprep.subr.bf16.mxu0 0
  %1028 = vmatpush1.bf16.msra.mxu0 %v764
  %1029 = vmatprep.subr.bf16.mxu0 0
  %1030 = vmatpush1.bf16.msra.mxu0 %v765
  %1031 = vmatprep.subr.bf16.mxu0 0
  %1032 = vmatpush1.bf16.msra.mxu0 %v766
  %1033 = vmatprep.subr.bf16.mxu0 0
  %1034 = vmatpush1.bf16.msra.mxu0 %v767
  %1035 = vmatprep.subr.bf16.mxu0 0
  %1036 = vmatpush1.bf16.msra.mxu0 %v768
  %1037 = vmatprep.subr.bf16.mxu0 0
  %1038 = vmatpush1.bf16.msra.mxu0 %v769
  %1039 = vmatprep.subr.bf16.mxu0 0
  %1040 = vmatpush1.bf16.msra.mxu0 %v770
  %1041 = vmatprep.subr.bf16.mxu0 0
  %1042 = vmatpush1.bf16.msra.mxu0 %v771
  %1043 = vmatprep.subr.bf16.mxu0 0
  %1044 = vmatpush1.bf16.msra.mxu0 %v772
  %1045 = vmatprep.subr.bf16.mxu0 0
  %1046 = vmatpush1.bf16.msra.mxu0 %v773
  %1047 = vmatprep.subr.bf16.mxu0 0
  %1048 = vmatpush1.bf16.msra.mxu0 %v774
  %1049 = vmatprep.mubr.bf16.mxu0 %v290
  %1050 = vmatmul.mubr.bf16.gmra.mrb[0].mxu0 %v289
  %v1051 = vpop.f32.mrb[0].mxu0
  %v1052 = vadd.f32 %v1011, %v1051
  %v1053 = vpop.f32.mrb[0].mxu0
  %v1054 = vpop.f32.mrb[0].mxu0
  %v1055 = vadd.f32 %v1014, %v1054
  %v1056 = vpop.f32.mrb[0].mxu0
  %1057 = vdwg.mxu0
  %1058 = vmatprep.subr.bf16.mxu0 0
  %1059 = vmatpush1.bf16.msra.mxu0 %v775
  %1060 = vmatprep.subr.bf16.mxu0 0
  %1061 = vmatpush1.bf16.msra.mxu0 %v776
  %1062 = vmatprep.subr.bf16.mxu0 0
  %1063 = vmatpush1.bf16.msra.mxu0 %v777
  %1064 = vmatprep.subr.bf16.mxu0 0
  %1065 = vmatpush1.bf16.msra.mxu0 %v778
  %1066 = vmatprep.subr.bf16.mxu0 0
  %1067 = vmatpush1.bf16.msra.mxu0 %v779
  %1068 = vmatprep.subr.bf16.mxu0 0
  %1069 = vmatpush1.bf16.msra.mxu0 %v780
  %1070 = vmatprep.subr.bf16.mxu0 0
  %1071 = vmatpush1.bf16.msra.mxu0 %v781
  %1072 = vmatprep.subr.bf16.mxu0 0
  %1073 = vmatpush1.bf16.msra.mxu0 %v782
  %1074 = vmatprep.subr.bf16.mxu0 0
  %1075 = vmatpush1.bf16.msra.mxu0 %v783
  %1076 = vmatprep.subr.bf16.mxu0 0
  %1077 = vmatpush1.bf16.msra.mxu0 %v784
  %1078 = vmatprep.subr.bf16.mxu0 0
  %1079 = vmatpush1.bf16.msra.mxu0 %v785
  %1080 = vmatprep.subr.bf16.mxu0 0
  %1081 = vmatpush1.bf16.msra.mxu0 %v786
  %1082 = vmatprep.subr.bf16.mxu0 0
  %1083 = vmatpush1.bf16.msra.mxu0 %v787
  %1084 = vmatprep.subr.bf16.mxu0 0
  %1085 = vmatpush1.bf16.msra.mxu0 %v788
  %1086 = vmatprep.subr.bf16.mxu0 0
  %1087 = vmatpush1.bf16.msra.mxu0 %v789
  %1088 = vmatprep.subr.bf16.mxu0 0
  %1089 = vmatpush1.bf16.msra.mxu0 %v790
  %1090 = vmatprep.mubr.bf16.mxu0 %v292
  %1091 = vmatmul.mubr.bf16.gmra.mrb[0].mxu0 %v291
  %v1092 = vpop.f32.mrb[0].mxu0
  %v1093 = vadd.f32 %v1052, %v1092
  %v1094 = vpop.f32.mrb[0].mxu0
  %v1095 = vpop.f32.mrb[0].mxu0
  %v1096 = vadd.f32 %v1055, %v1095
  %v1097 = vpop.f32.mrb[0].mxu0
  %1098 = vdwg.mxu0
  %1099 = vmatprep.subr.bf16.mxu0 0
  %1100 = vmatpush1.bf16.msra.mxu0 %v791
  %1101 = vmatprep.subr.bf16.mxu0 0
  %1102 = vmatpush1.bf16.msra.mxu0 %v792
  %1103 = vmatprep.subr.bf16.mxu0 0
  %1104 = vmatpush1.bf16.msra.mxu0 %v793
  %1105 = vmatprep.subr.bf16.mxu0 0
  %1106 = vmatpush1.bf16.msra.mxu0 %v794
  %1107 = vmatprep.subr.bf16.mxu0 0
  %1108 = vmatpush1.bf16.msra.mxu0 %v795
  %1109 = vmatprep.subr.bf16.mxu0 0
  %1110 = vmatpush1.bf16.msra.mxu0 %v796
  %1111 = vmatprep.subr.bf16.mxu0 0
  %1112 = vmatpush1.bf16.msra.mxu0 %v797
  %1113 = vmatprep.subr.bf16.mxu0 0
  %1114 = vmatpush1.bf16.msra.mxu0 %v798
  %1115 = vmatprep.subr.bf16.mxu0 0
  %1116 = vmatpush1.bf16.msra.mxu0 %v799
  %1117 = vmatprep.subr.bf16.mxu0 0
  %1118 = vmatpush1.bf16.msra.mxu0 %v800
  %1119 = vmatprep.subr.bf16.mxu0 0
  %1120 = vmatpush1.bf16.msra.mxu0 %v801
  %1121 = vmatprep.subr.bf16.mxu0 0
  %1122 = vmatpush1.bf16.msra.mxu0 %v802
  %1123 = vmatprep.subr.bf16.mxu0 0
  %1124 = vmatpush1.bf16.msra.mxu0 %v803
  %1125 = vmatprep.subr.bf16.mxu0 0
  %1126 = vmatpush1.bf16.msra.mxu0 %v804
  %1127 = vmatprep.subr.bf16.mxu0 0
  %1128 = vmatpush1.bf16.msra.mxu0 %v805
  %1129 = vmatprep.subr.bf16.mxu0 0
  %1130 = vmatpush1.bf16.msra.mxu0 %v806
  %1131 = vmatprep.mubr.bf16.mxu0 %v294
  %1132 = vmatmul.mubr.bf16.gmra.mrb[0].mxu0 %v293
  %v1133 = vpop.f32.mrb[0].mxu0
  %v1134 = vadd.f32 %v1093, %v1133
  %v1135 = vpop.f32.mrb[0].mxu0
  %v1136 = vpop.f32.mrb[0].mxu0
  %v1137 = vadd.f32 %v1096, %v1136
  %v1138 = vpop.f32.mrb[0].mxu0
  %1139 = vdwg.mxu0
  %1140 = vmatprep.subr.bf16.mxu0 0
  %1141 = vmatpush1.bf16.msra.mxu0 %v807
  %1142 = vmatprep.subr.bf16.mxu0 0
  %1143 = vmatpush1.bf16.msra.mxu0 %v808
  %1144 = vmatprep.subr.bf16.mxu0 0
  %1145 = vmatpush1.bf16.msra.mxu0 %v809
  %1146 = vmatprep.subr.bf16.mxu0 0
  %1147 = vmatpush1.bf16.msra.mxu0 %v810
  %1148 = vmatprep.subr.bf16.mxu0 0
  %1149 = vmatpush1.bf16.msra.mxu0 %v811
  %1150 = vmatprep.subr.bf16.mxu0 0
  %1151 = vmatpush1.bf16.msra.mxu0 %v812
  %1152 = vmatprep.subr.bf16.mxu0 0
  %1153 = vmatpush1.bf16.msra.mxu0 %v813
  %1154 = vmatprep.subr.bf16.mxu0 0
  %1155 = vmatpush1.bf16.msra.mxu0 %v814
  %1156 = vmatprep.subr.bf16.mxu0 0
  %1157 = vmatpush1.bf16.msra.mxu0 %v815
  %1158 = vmatprep.subr.bf16.mxu0 0
  %1159 = vmatpush1.bf16.msra.mxu0 %v816
  %1160 = vmatprep.subr.bf16.mxu0 0
  %1161 = vmatpush1.bf16.msra.mxu0 %v817
  %1162 = vmatprep.subr.bf16.mxu0 0
  %1163 = vmatpush1.bf16.msra.mxu0 %v818
  %1164 = vmatprep.subr.bf16.mxu0 0
  %1165 = vmatpush1.bf16.msra.mxu0 %v819
  %1166 = vmatprep.subr.bf16.mxu0 0
  %1167 = vmatpush1.bf16.msra.mxu0 %v820
  %1168 = vmatprep.subr.bf16.mxu0 0
  %1169 = vmatpush1.bf16.msra.mxu0 %v821
  %1170 = vmatprep.subr.bf16.mxu0 0
  %1171 = vmatpush1.bf16.msra.mxu0 %v822
  %1172 = vmatprep.mubr.bf16.mxu0 %v296
  %1173 = vmatmul.mubr.bf16.gmra.mrb[0].mxu0 %v295
  %v1174 = vpop.f32.mrb[0].mxu0
  %v1175 = vadd.f32 %v1134, %v1174
  %v1176 = vpop.f32.mrb[0].mxu0
  %v1177 = vpop.f32.mrb[0].mxu0
  %v1178 = vadd.f32 %v1137, %v1177
  %v1179 = vpop.f32.mrb[0].mxu0
  %1180 = vdwg.mxu0
  %1181 = vmatprep.subr.bf16.mxu0 0
  %1182 = vmatpush1.bf16.msra.mxu0 %v823
  %1183 = vmatprep.subr.bf16.mxu0 0
  %1184 = vmatpush1.bf16.msra.mxu0 %v824
  %1185 = vmatprep.subr.bf16.mxu0 0
  %1186 = vmatpush1.bf16.msra.mxu0 %v825
  %1187 = vmatprep.subr.bf16.mxu0 0
  %1188 = vmatpush1.bf16.msra.mxu0 %v826
  %1189 = vmatprep.subr.bf16.mxu0 0
  %1190 = vmatpush1.bf16.msra.mxu0 %v827
  %1191 = vmatprep.subr.bf16.mxu0 0
  %1192 = vmatpush1.bf16.msra.mxu0 %v828
  %1193 = vmatprep.subr.bf16.mxu0 0
  %1194 = vmatpush1.bf16.msra.mxu0 %v829
  %1195 = vmatprep.subr.bf16.mxu0 0
  %1196 = vmatpush1.bf16.msra.mxu0 %v830
  %1197 = vmatprep.subr.bf16.mxu0 0
  %1198 = vmatpush1.bf16.msra.mxu0 0
  %1199 = vmatprep.subr.bf16.mxu0 0
  %1200 = vmatpush1.bf16.msra.mxu0 0
  %1201 = vmatprep.subr.bf16.mxu0 0
  %1202 = vmatpush1.bf16.msra.mxu0 0
  %1203 = vmatprep.subr.bf16.mxu0 0
  %1204 = vmatpush1.bf16.msra.mxu0 0
  %1205 = vmatprep.subr.bf16.mxu0 0
  %1206 = vmatpush1.bf16.msra.mxu0 0
  %1207 = vmatprep.subr.bf16.mxu0 0
  %1208 = vmatpush1.bf16.msra.mxu0 0
  %1209 = vmatprep.subr.bf16.mxu0 0
  %1210 = vmatpush1.bf16.msra.mxu0 0
  %1211 = vmatprep.subr.bf16.mxu0 0
  %1212 = vmatpush1.bf16.msra.mxu0 0
  %1213 = vmatprep.mubr.bf16.mxu0 0
  %1214 = vmatmul.mubr.bf16.gmra.mrb[0].mxu0 %v297
  %v1215 = vpop.f32.mrb[0].mxu0
  %v1216 = vadd.f32 %v1175, %v1215
  %v1217 = vpop.f32.mrb[0].mxu0
  %v1218 = vpop.f32.mrb[0].mxu0
  %v1219 = vadd.f32 %v1178, %v1218
  %v1220 = vpop.f32.mrb[0].mxu0
  %1221 = vdwg.mxu0
  %v1222 = vadd.f32 %v21, %v1216
  %v1223 = vadd.f32 %v22, %v1219
  %1224 = vst [vmem:[#allocation2] sm:$0xff] %v1222
  %1225 = vst [vmem:[#allocation2 + $0x8] sm:$0xff] %v1223
  // Predicated region
  $region18: #{forward.10} parent=0 // pred_check
    %p1226 = pneg %p15
  $region19: #{forward.10} parent=0 // pred_check_branch
    %1228 = sbr.rel (%p1226) target = $region21
  $region20: #{forward.10} parent=0 // pred_region
    %v1229 = vld [vmem:[#allocation2] sm:$0xff]
    %v1230 = vld [vmem:[#allocation2 + $0x8] sm:$0xff]
    %v1231 = vld [vmem:[%s2] sm:$0x1]
    %v1233 = vlaneseq
    %v1234 = vshrl.u32 %v1233, 7
    %v1235 = vsub.s32 0, %v1234
    %v1236 = vrot.slane %v1231, %v1235
    %v1238 = vadd.f32 %v1229, %v1236
    %v1239 = vadd.f32 %v1230, %v1236
    %vm1240 = vcmp.gt.f32.partialorder %v1238, 0.0
    %vm1241 = vcmp.gt.f32.partialorder %v1239, 0.0
    %v1242 = vmul.f32 %v1238, 0.2
    %v1243 = vmul.f32 %v1239, 0.2
    %v1244 = vsel %vm1240, %v1238, %v1242
    %v1245 = vsel %vm1241, %v1239, %v1243
    %1246 = vst [vmem:[%s3] sm:$0xff] %v1244
    %1247 = vst [vmem:[%s3 + $0x8] sm:$0xff] %v1245
  $region21: #{forward.10} parent=0 // pred_fallthru
    _
  // Predicated region
  $region22: #{forward.10} parent=0 // pred_check
    _
  $region23: #{forward.10} parent=0 // pred_check_branch
    %1249 = sbr.rel (0) target = $region25
  $region24: #{forward.10} parent=0 // pred_region
    _
  $region25: #{forward.10} parent=0 // pred_fallthru
    _
  // Predicated region
  $region26: #{forward.10} parent=0 // pred_check
    _
  $region27: #{forward.10} parent=0 // pred_check_branch
    %1251 = sbr.rel (0) target = $region29
  $region28: #{forward.10} parent=0 // pred_region
    _
  $region29: #{forward.10} parent=0 // pred_fallthru
    _

</llo_original>
